<compile_context>
chip_gen: v5e
topology: v5e:2x2
jax: 0.10.0
libtpu: 0.0.40
codegen_flags: <defaults>
</compile_context>

<pallas_src>
import functools
import math

import jax
import jax.numpy as jnp
from jax.experimental import pallas as pl
from jax.experimental.pallas import tpu as pltpu


# ----------------------------------------------------------------------------
# Config
# ----------------------------------------------------------------------------
class ViTConfig:
    img = 64
    patch = 32
    in_chans = 3
    embed = 128
    depth = 2
    heads = 4
    mlp_ratio = 4
    vit_out = 1000      # timm head: Linear(embed, 1000)
    n_classes = 4       # self.classifier: Linear(1000, n_classes)
    ln_eps = 1e-6

    @property
    def n_patches(self):
        return (self.img // self.patch) ** 2

    @property
    def tokens(self):
        return self.n_patches + 1

    @property
    def tokens_pad(self):
        return ((self.tokens + 7) // 8) * 8   # sublane multiple

    @property
    def head_dim(self):
        return self.embed // self.heads


# ----------------------------------------------------------------------------
# Fused ViT forward kernel (one grid step == one image)
# ----------------------------------------------------------------------------
def _layernorm(x, g, b, eps):
    mean = jnp.mean(x, axis=-1, keepdims=True)
    var = jnp.mean(jnp.square(x - mean), axis=-1, keepdims=True)
    return (x - mean) * jax.lax.rsqrt(var + eps) * g + b


def _gelu_erf(x):
    # exact (erf) GELU, matching torch.nn.GELU() used by timm ViT blocks
    return 0.5 * x * (1.0 + jax.lax.erf(x * (1.0 / math.sqrt(2.0))))


def _vit_fused_kernel(
    patches_ref, patch_w_ref, tok_bias_ref,
    ln1_g_ref, ln1_b_ref, qkv_w_ref, qkv_b_ref, proj_w_ref, proj_b_ref,
    ln2_g_ref, ln2_b_ref, fc1_w_ref, fc1_b_ref, fc2_w_ref, fc2_b_ref,
    lnf_g_ref, lnf_b_ref, head_w_ref, head_b_ref,
    out_ref,
    *, depth, heads, head_dim, t_real, eps):
    f32 = jnp.float32
    bf16 = jnp.bfloat16
    Tp = patches_ref.shape[1]          # padded token count (8)
    D = patch_w_ref.shape[1]           # embed dim (128)
    scale = 1.0 / math.sqrt(head_dim)

    # ---- patch embedding + cls token + pos embedding (folded into tok_bias) ----
    # patches row 0 and pad rows are zero, so tok_bias carries cls/pos/bias terms.
    x = jnp.dot(patches_ref[0], patch_w_ref[...],
                preferred_element_type=f32) + tok_bias_ref[...]        # (Tp, D) f32

    # additive key-padding bias, hoisted out of the layer/head loops
    col = jax.lax.broadcasted_iota(jnp.int32, (Tp, Tp), 1)
    key_bias = jnp.where(col < t_real, 0.0, -1e30).astype(f32)          # (Tp, Tp)

    for l in range(depth):
        # ---------------- attention sub-block ----------------
        y = _layernorm(x, ln1_g_ref[l], ln1_b_ref[l], eps)
        qkv = jnp.dot(y.astype(bf16), qkv_w_ref[l],
                      preferred_element_type=f32) + qkv_b_ref[l]        # (Tp, 3D)
        proj_w = proj_w_ref[l]                                          # (D, D) bf16
        attn = jnp.zeros((Tp, D), f32)
        for h in range(heads):
            lo = h * head_dim
            hi = lo + head_dim
            q = (qkv[:, lo:hi] * scale).astype(bf16)                    # (Tp, dh)
            k = qkv[:, D + lo:D + hi].astype(bf16)
            v = qkv[:, 2 * D + lo:2 * D + hi].astype(bf16)
            # q @ k^T without an explicit transpose
            s = jax.lax.dot_general(q, k, (((1,), (1,)), ((), ())),
                                    preferred_element_type=f32)         # (Tp, Tp)
            s = s + key_bias
            s = s - jnp.max(s, axis=-1, keepdims=True)
            p = jnp.exp(s)
            p = p * pl.reciprocal(jnp.sum(p, axis=-1, keepdims=True), approx=True)
            o = jnp.dot(p.astype(bf16), v, preferred_element_type=f32)  # (Tp, dh)
            # fold head output straight into the matching proj-weight rows:
            # accumulates a lane-dense (Tp, D) result, no transposes / concat.
            attn = attn + jnp.dot(o.astype(bf16), proj_w[lo:hi, :],
                                  preferred_element_type=f32)
        x = x + attn + proj_b_ref[l]                                    # residual

        # ---------------- MLP sub-block ----------------
        y = _layernorm(x, ln2_g_ref[l], ln2_b_ref[l], eps)
        h1 = jnp.dot(y.astype(bf16), fc1_w_ref[l],
                     preferred_element_type=f32) + fc1_b_ref[l]         # (Tp, 4D)
        h1 = _gelu_erf(h1)
        h2 = jnp.dot(h1.astype(bf16), fc2_w_ref[l],
                     preferred_element_type=f32) + fc2_b_ref[l]         # (Tp, D)
        x = x + h2                                                      # residual

    # ---- final norm, cls-token pooling, fused (ViT head @ classifier) GEMM ----
    y = _layernorm(x, lnf_g_ref[...], lnf_b_ref[...], eps)
    cls_tok = y[0:1, :]                                                 # (1, D)
    logits = jnp.dot(cls_tok.astype(bf16), head_w_ref[...],
                     preferred_element_type=f32) + head_b_ref[...]      # (1, nc)
    out_ref[...] = logits[None].astype(out_ref.dtype)                   # (1, 1, nc)


# ----------------------------------------------------------------------------
# Parameter init (synthetic) and packing for the kernel
# ----------------------------------------------------------------------------
def init_params(cfg, key):
    def nrm(k, shape):
        return jax.random.normal(k, shape, jnp.float32) * 0.02

    keys = iter(jax.random.split(key, 64))
    p = {}
    patch_dim = cfg.in_chans * cfg.patch * cfg.patch
    p["patch_w"] = nrm(next(keys), (patch_dim, cfg.embed))
    p["patch_b"] = jnp.zeros((cfg.embed,), jnp.float32)
    p["cls"] = nrm(next(keys), (1, 1, cfg.embed))
    p["pos"] = nrm(next(keys), (1, cfg.tokens, cfg.embed))
    p["blocks"] = []
    for _ in range(cfg.depth):
        blk = {
            "ln1_g": jnp.ones((cfg.embed,), jnp.float32),
            "ln1_b": jnp.zeros((cfg.embed,), jnp.float32),
            "qkv_w": nrm(next(keys), (cfg.embed, 3 * cfg.embed)),
            "qkv_b": jnp.zeros((3 * cfg.embed,), jnp.float32),
            "proj_w": nrm(next(keys), (cfg.embed, cfg.embed)),
            "proj_b": jnp.zeros((cfg.embed,), jnp.float32),
            "ln2_g": jnp.ones((cfg.embed,), jnp.float32),
            "ln2_b": jnp.zeros((cfg.embed,), jnp.float32),
            "fc1_w": nrm(next(keys), (cfg.embed, cfg.mlp_ratio * cfg.embed)),
            "fc1_b": jnp.zeros((cfg.mlp_ratio * cfg.embed,), jnp.float32),
            "fc2_w": nrm(next(keys), (cfg.mlp_ratio * cfg.embed, cfg.embed)),
            "fc2_b": jnp.zeros((cfg.embed,), jnp.float32),
        }
        p["blocks"].append(blk)
    p["ln_f_g"] = jnp.ones((cfg.embed,), jnp.float32)
    p["ln_f_b"] = jnp.zeros((cfg.embed,), jnp.float32)
    p["head_w"] = nrm(next(keys), (cfg.embed, cfg.vit_out))
    p["head_b"] = jnp.zeros((cfg.vit_out,), jnp.float32)
    p["cls_w"] = nrm(next(keys), (cfg.vit_out, cfg.n_classes))
    p["cls_b"] = jnp.zeros((cfg.n_classes,), jnp.float32)
    return p


def pack_params(params, cfg):
    """One-time packing: stack per-layer weights, cast MXU operands to bf16,
    fold head+classifier into one GEMM, fold cls/pos/patch-bias into tok_bias."""
    bf = jnp.bfloat16
    L, D, Tp = cfg.depth, cfg.embed, cfg.tokens_pad
    nP = cfg.n_patches

    stack = lambda name: jnp.stack([blk[name] for blk in params["blocks"]])

    tok_bias = jnp.zeros((Tp, D), jnp.float32)
    tok_bias = tok_bias.at[0, :].set(params["cls"].reshape(D))
    tok_bias = tok_bias.at[1:1 + nP, :].add(params["patch_b"][None, :])
    tok_bias = tok_bias.at[:cfg.tokens, :].add(params["pos"].reshape(cfg.tokens, D))

    # fold ViT head (D -> 1000) and classifier (1000 -> n_classes): one (D, nc) GEMM
    head_w = (params["head_w"] @ params["cls_w"]).astype(bf)
    head_b = (params["head_b"] @ params["cls_w"] + params["cls_b"]).reshape(1, -1)

    return {
        "patch_w": params["patch_w"].astype(bf),
        "tok_bias": tok_bias,
        "ln1_g": stack("ln1_g").reshape(L, 1, D),
        "ln1_b": stack("ln1_b").reshape(L, 1, D),
        "qkv_w": stack("qkv_w").astype(bf),
        "qkv_b": stack("qkv_b").reshape(L, 1, 3 * D),
        "proj_w": stack("proj_w").astype(bf),
        "proj_b": stack("proj_b").reshape(L, 1, D),
        "ln2_g": stack("ln2_g").reshape(L, 1, D),
        "ln2_b": stack("ln2_b").reshape(L, 1, D),
        "fc1_w": stack("fc1_w").astype(bf),
        "fc1_b": stack("fc1_b").reshape(L, 1, cfg.mlp_ratio * D),
        "fc2_w": stack("fc2_w").astype(bf),
        "fc2_b": stack("fc2_b").reshape(L, 1, D),
        "lnf_g": params["ln_f_g"].reshape(1, D),
        "lnf_b": params["ln_f_b"].reshape(1, D),
        "head_w": head_w,
        "head_b": head_b,
    }


# ----------------------------------------------------------------------------
# Forward pass (im2col glue + single fused pallas_call)
# ----------------------------------------------------------------------------
def _resident_spec(shape):
    """Whole-array block that stays VMEM-resident across the batch grid."""
    zeros = (0,) * len(shape)
    return pl.BlockSpec(shape, lambda b: zeros)


def vit_base16_forward(x_nchw, packed, cfg):
    """x_nchw: (B, C, H, W) float32 -> logits (B, n_classes)."""
    B, C, H, W = x_nchw.shape
    ps = cfg.patch
    nP = cfg.n_patches
    Tp = cfg.tokens_pad
    P = C * ps * ps
    nc = cfg.n_classes

    # patchify (equivalent of the stride-32 conv) -> (B, nP, C*ps*ps)
    patches = x_nchw.reshape(B, C, H // ps, ps, W // ps, ps)
    patches = patches.transpose(0, 2, 4, 1, 3, 5).reshape(B, nP, P)
    # pad token axis: slot 0 reserved for cls (zeros), tail rows are pure padding
    patches_pad = jnp.zeros((B, Tp, P), jnp.float32)
    patches_pad = patches_pad.at[:, 1:1 + nP, :].set(patches)
    patches_pad = patches_pad.astype(jnp.bfloat16)

    kernel = functools.partial(
        _vit_fused_kernel,
        depth=cfg.depth, heads=cfg.heads, head_dim=cfg.head_dim,
        t_real=cfg.tokens, eps=cfg.ln_eps)

    names = ["patch_w", "tok_bias",
             "ln1_g", "ln1_b", "qkv_w", "qkv_b", "proj_w", "proj_b",
             "ln2_g", "ln2_b", "fc1_w", "fc1_b", "fc2_w", "fc2_b",
             "lnf_g", "lnf_b", "head_w", "head_b"]
    weight_args = [packed[n] for n in names]

    out = pl.pallas_call(
        kernel,
        out_shape=jax.ShapeDtypeStruct((B, 1, nc), jnp.float32),
        grid=(B,),
        in_specs=[pl.BlockSpec((1, Tp, P), lambda b: (b, 0, 0))] +
                 [_resident_spec(w.shape) for w in weight_args],
        out_specs=pl.BlockSpec((1, 1, nc), lambda b: (b, 0, 0)),
        compiler_params=pltpu.CompilerParams(
            dimension_semantics=("parallel",)),   # both TCs on v7x; no-op on v5e/v6e
    )(patches_pad, *weight_args)

    return out.reshape(B, nc)


# TODO(synk): loading the pretrained timm checkpoint (jx_vit_base_p32_384-830016f5.pth)
# from disk is not reproduced here; weights are synthetic deterministic-random.

if __name__ == "__main__":
    cfg = ViTConfig()
    key = jax.random.PRNGKey(0)
    k_param, k_x = jax.random.split(key)
    params = init_params(cfg, k_param)
    packed = pack_params(params, cfg)
    x = jax.random.normal(k_x, (2, cfg.in_chans, cfg.img, cfg.img), jnp.float32)

    forward = jax.jit(functools.partial(vit_base16_forward, cfg=cfg))
    out = forward(x, packed)
    out = jax.block_until_ready(out)
    assert out.shape == (2, cfg.n_classes), out.shape
    assert bool(jnp.all(jnp.isfinite(out)))
    print("KERNEL_OK")
</pallas_src>

<mosaic_0001>
module attributes {stable_mosaic.version = 11 : i64} {
  func.func @_vit_fused_kernel(%arg0: i32, %arg1: memref<1x8x3072xbf16, #tpu.memory_space<vmem>>, %arg2: memref<3072x128xbf16, #tpu.memory_space<vmem>>, %arg3: memref<8x128xf32, #tpu.memory_space<vmem>>, %arg4: memref<2x1x128xf32, #tpu.memory_space<vmem>>, %arg5: memref<2x1x128xf32, #tpu.memory_space<vmem>>, %arg6: memref<2x128x384xbf16, #tpu.memory_space<vmem>>, %arg7: memref<2x1x384xf32, #tpu.memory_space<vmem>>, %arg8: memref<2x128x128xbf16, #tpu.memory_space<vmem>>, %arg9: memref<2x1x128xf32, #tpu.memory_space<vmem>>, %arg10: memref<2x1x128xf32, #tpu.memory_space<vmem>>, %arg11: memref<2x1x128xf32, #tpu.memory_space<vmem>>, %arg12: memref<2x128x512xbf16, #tpu.memory_space<vmem>>, %arg13: memref<2x1x512xf32, #tpu.memory_space<vmem>>, %arg14: memref<2x512x128xbf16, #tpu.memory_space<vmem>>, %arg15: memref<2x1x128xf32, #tpu.memory_space<vmem>>, %arg16: memref<1x128xf32, #tpu.memory_space<vmem>>, %arg17: memref<1x128xf32, #tpu.memory_space<vmem>>, %arg18: memref<128x4xbf16, #tpu.memory_space<vmem>>, %arg19: memref<1x4xf32, #tpu.memory_space<vmem>>, %arg20: memref<1x1x4xf32, #tpu.memory_space<vmem>>) attributes {dimension_semantics = [#tpu.dimension_semantics<parallel>], iteration_bounds = array<i64: 2>, scalar_prefetch = 0 : i64, scratch_operands = 0 : i64, tpu.core_type = #tpu.core_type<tc>, window_params = [{transform_indices = @transform_0, window_bounds = array<i64: 1, 8, 3072>}, {pipeline_mode = #tpu.pipeline_mode<synchronous>, transform_indices = @transform_1, window_bounds = array<i64: 3072, 128>}, {pipeline_mode = #tpu.pipeline_mode<synchronous>, transform_indices = @transform_2, window_bounds = array<i64: 8, 128>}, {pipeline_mode = #tpu.pipeline_mode<synchronous>, transform_indices = @transform_3, window_bounds = array<i64: 2, 1, 128>}, {pipeline_mode = #tpu.pipeline_mode<synchronous>, transform_indices = @transform_4, window_bounds = array<i64: 2, 1, 128>}, {pipeline_mode = #tpu.pipeline_mode<synchronous>, transform_indices = @transform_5, window_bounds = array<i64: 2, 128, 384>}, {pipeline_mode = #tpu.pipeline_mode<synchronous>, transform_indices = @transform_6, window_bounds = array<i64: 2, 1, 384>}, {pipeline_mode = #tpu.pipeline_mode<synchronous>, transform_indices = @transform_7, window_bounds = array<i64: 2, 128, 128>}, {pipeline_mode = #tpu.pipeline_mode<synchronous>, transform_indices = @transform_8, window_bounds = array<i64: 2, 1, 128>}, {pipeline_mode = #tpu.pipeline_mode<synchronous>, transform_indices = @transform_9, window_bounds = array<i64: 2, 1, 128>}, {pipeline_mode = #tpu.pipeline_mode<synchronous>, transform_indices = @transform_10, window_bounds = array<i64: 2, 1, 128>}, {pipeline_mode = #tpu.pipeline_mode<synchronous>, transform_indices = @transform_11, window_bounds = array<i64: 2, 128, 512>}, {pipeline_mode = #tpu.pipeline_mode<synchronous>, transform_indices = @transform_12, window_bounds = array<i64: 2, 1, 512>}, {pipeline_mode = #tpu.pipeline_mode<synchronous>, transform_indices = @transform_13, window_bounds = array<i64: 2, 512, 128>}, {pipeline_mode = #tpu.pipeline_mode<synchronous>, transform_indices = @transform_14, window_bounds = array<i64: 2, 1, 128>}, {pipeline_mode = #tpu.pipeline_mode<synchronous>, transform_indices = @transform_15, window_bounds = array<i64: 1, 128>}, {pipeline_mode = #tpu.pipeline_mode<synchronous>, transform_indices = @transform_16, window_bounds = array<i64: 1, 128>}, {pipeline_mode = #tpu.pipeline_mode<synchronous>, transform_indices = @transform_17, window_bounds = array<i64: 128, 4>}, {pipeline_mode = #tpu.pipeline_mode<synchronous>, transform_indices = @transform_18, window_bounds = array<i64: 1, 4>}, {transform_indices = @transform_19, window_bounds = array<i64: 1, 1, 4>}]} {
    %c0 = arith.constant 0 : index
    %c0_0 = arith.constant 0 : index
    %c0_1 = arith.constant 0 : index
    %0 = vector.load %arg1[%c0, %c0_0, %c0_1] : memref<1x8x3072xbf16, #tpu.memory_space<vmem>>, vector<1x8x3072xbf16>
    %1 = vector.shape_cast %0 : vector<1x8x3072xbf16> to vector<8x3072xbf16>
    %c0_2 = arith.constant 0 : index
    %c0_3 = arith.constant 0 : index
    %2 = vector.load %arg2[%c0_2, %c0_3] : memref<3072x128xbf16, #tpu.memory_space<vmem>>, vector<3072x128xbf16>
    %cst = arith.constant dense<0.000000e+00> : vector<8x128xf32>
    %3 = tpu.matmul %1, %2, %cst {dimension_numbers = #tpu.dot_dimension_numbers<[1], [0], [0], [1], [0, 0, 1, 1], [], []>} : vector<8x3072xbf16>, vector<3072x128xbf16>, vector<8x128xf32> -> vector<8x128xf32>
    %c0_4 = arith.constant 0 : index
    %c0_5 = arith.constant 0 : index
    %4 = vector.load %arg3[%c0_4, %c0_5] : memref<8x128xf32, #tpu.memory_space<vmem>>, vector<8x128xf32>
    %5 = arith.addf %3, %4 : vector<8x128xf32>
    %6 = tpu.iota {dimensions = array<i32: 1>} : vector<8x8xi32>
    %c5_i32 = arith.constant 5 : i32
    %7 = vector.broadcast %c5_i32 : i32 to vector<8x8xi32>
    %8 = arith.cmpi slt, %6, %7 : vector<8x8xi32>
    %cst_6 = arith.constant 0.000000e+00 : f32
    %cst_7 = arith.constant -1.000000e+30 : f32
    %9 = vector.broadcast %cst_6 : f32 to vector<8x8xf32>
    %10 = vector.broadcast %cst_7 : f32 to vector<8x8xf32>
    %11 = arith.select %8, %9, %10 : vector<8x8xi1>, vector<8x8xf32>
    %c0_8 = arith.constant 0 : index
    %c0_9 = arith.constant 0 : index
    %c0_10 = arith.constant 0 : index
    %12 = vector.load %arg4[%c0_8, %c0_9, %c0_10] : memref<2x1x128xf32, #tpu.memory_space<vmem>>, vector<1x1x128xf32>
    %13 = vector.shape_cast %12 : vector<1x1x128xf32> to vector<1x128xf32>
    %c0_11 = arith.constant 0 : index
    %c0_12 = arith.constant 0 : index
    %c0_13 = arith.constant 0 : index
    %14 = vector.load %arg5[%c0_11, %c0_12, %c0_13] : memref<2x1x128xf32, #tpu.memory_space<vmem>>, vector<1x1x128xf32>
    %15 = vector.shape_cast %14 : vector<1x1x128xf32> to vector<1x128xf32>
    %cst_14 = arith.constant dense<0.000000e+00> : vector<8xf32>
    %16 = vector.multi_reduction <add>, %5, %cst_14 [1] : vector<8x128xf32> to vector<8xf32>
    %17 = vector.shape_cast %16 : vector<8xf32> to vector<8x1xf32>
    %cst_15 = arith.constant 1.280000e+02 : f32
    %18 = vector.broadcast %cst_15 : f32 to vector<8x1xf32>
    %19 = arith.divf %17, %18 : vector<8x1xf32>
    %20 = vector.broadcast %19 : vector<8x1xf32> to vector<8x128xf32>
    %21 = arith.subf %5, %20 : vector<8x128xf32>
    %22 = arith.mulf %21, %21 : vector<8x128xf32>
    %cst_16 = arith.constant dense<0.000000e+00> : vector<8xf32>
    %23 = vector.multi_reduction <add>, %22, %cst_16 [1] : vector<8x128xf32> to vector<8xf32>
    %24 = vector.shape_cast %23 : vector<8xf32> to vector<8x1xf32>
    %cst_17 = arith.constant 1.280000e+02 : f32
    %25 = vector.broadcast %cst_17 : f32 to vector<8x1xf32>
    %26 = arith.divf %24, %25 : vector<8x1xf32>
    %27 = vector.broadcast %19 : vector<8x1xf32> to vector<8x128xf32>
    %28 = arith.subf %5, %27 : vector<8x128xf32>
    %cst_18 = arith.constant 9.99999997E-7 : f32
    %29 = vector.broadcast %cst_18 : f32 to vector<8x1xf32>
    %30 = arith.addf %26, %29 : vector<8x1xf32>
    %31 = math.rsqrt %30 : vector<8x1xf32>
    %32 = vector.broadcast %31 : vector<8x1xf32> to vector<8x128xf32>
    %33 = arith.mulf %28, %32 : vector<8x128xf32>
    %34 = vector.broadcast %13 : vector<1x128xf32> to vector<8x128xf32>
    %35 = arith.mulf %33, %34 : vector<8x128xf32>
    %36 = vector.broadcast %15 : vector<1x128xf32> to vector<8x128xf32>
    %37 = arith.addf %35, %36 : vector<8x128xf32>
    %38 = arith.truncf %37 : vector<8x128xf32> to vector<8x128xbf16>
    %c0_19 = arith.constant 0 : index
    %c0_20 = arith.constant 0 : index
    %c0_21 = arith.constant 0 : index
    %39 = vector.load %arg6[%c0_19, %c0_20, %c0_21] : memref<2x128x384xbf16, #tpu.memory_space<vmem>>, vector<1x128x384xbf16>
    %40 = vector.shape_cast %39 : vector<1x128x384xbf16> to vector<128x384xbf16>
    %cst_22 = arith.constant dense<0.000000e+00> : vector<8x384xf32>
    %41 = tpu.matmul %38, %40, %cst_22 {dimension_numbers = #tpu.dot_dimension_numbers<[1], [0], [0], [1], [0, 0, 1, 1], [], []>} : vector<8x128xbf16>, vector<128x384xbf16>, vector<8x384xf32> -> vector<8x384xf32>
    %c0_23 = arith.constant 0 : index
    %c0_24 = arith.constant 0 : index
    %c0_25 = arith.constant 0 : index
    %42 = vector.load %arg7[%c0_23, %c0_24, %c0_25] : memref<2x1x384xf32, #tpu.memory_space<vmem>>, vector<1x1x384xf32>
    %43 = vector.shape_cast %42 : vector<1x1x384xf32> to vector<1x384xf32>
    %44 = vector.broadcast %43 : vector<1x384xf32> to vector<8x384xf32>
    %45 = arith.addf %41, %44 : vector<8x384xf32>
    %c0_26 = arith.constant 0 : index
    %c0_27 = arith.constant 0 : index
    %c0_28 = arith.constant 0 : index
    %46 = vector.load %arg8[%c0_26, %c0_27, %c0_28] : memref<2x128x128xbf16, #tpu.memory_space<vmem>>, vector<1x128x128xbf16>
    %47 = vector.shape_cast %46 : vector<1x128x128xbf16> to vector<128x128xbf16>
    %cst_29 = arith.constant 0.000000e+00 : f32
    %48 = vector.broadcast %cst_29 : f32 to vector<8x128xf32>
    %49 = vector.extract_strided_slice %45 {offsets = [0, 0], sizes = [8, 32], strides = [1, 1]} : vector<8x384xf32> to vector<8x32xf32>
    %cst_30 = arith.constant 0.176776692 : f32
    %50 = vector.broadcast %cst_30 : f32 to vector<8x32xf32>
    %51 = arith.mulf %49, %50 : vector<8x32xf32>
    %52 = arith.truncf %51 : vector<8x32xf32> to vector<8x32xbf16>
    %53 = vector.extract_strided_slice %45 {offsets = [0, 128], sizes = [8, 32], strides = [1, 1]} : vector<8x384xf32> to vector<8x32xf32>
    %54 = arith.truncf %53 : vector<8x32xf32> to vector<8x32xbf16>
    %55 = vector.extract_strided_slice %45 {offsets = [0, 256], sizes = [8, 32], strides = [1, 1]} : vector<8x384xf32> to vector<8x32xf32>
    %56 = arith.truncf %55 : vector<8x32xf32> to vector<8x32xbf16>
    %cst_31 = arith.constant dense<0.000000e+00> : vector<8x8xf32>
    %57 = tpu.matmul %52, %54, %cst_31 {dimension_numbers = #tpu.dot_dimension_numbers<[1], [1], [0], [0], [0, 0, 1, 0], [], []>} : vector<8x32xbf16>, vector<8x32xbf16>, vector<8x8xf32> -> vector<8x8xf32>
    %58 = arith.addf %57, %11 : vector<8x8xf32>
    %cst_32 = arith.constant dense<0xFF800000> : vector<8xf32>
    %59 = vector.multi_reduction <maximumf>, %58, %cst_32 [1] : vector<8x8xf32> to vector<8xf32>
    %60 = vector.shape_cast %59 : vector<8xf32> to vector<8x1xf32>
    %61 = vector.broadcast %60 : vector<8x1xf32> to vector<8x8xf32>
    %62 = arith.subf %58, %61 : vector<8x8xf32>
    %63 = math.exp %62 : vector<8x8xf32>
    %cst_33 = arith.constant dense<0.000000e+00> : vector<8xf32>
    %64 = vector.multi_reduction <add>, %63, %cst_33 [1] : vector<8x8xf32> to vector<8xf32>
    %65 = vector.shape_cast %64 : vector<8xf32> to vector<8x1xf32>
    %66 = tpu.reciprocal %65 {approx = true} : vector<8x1xf32> -> vector<8x1xf32>
    %67 = vector.broadcast %66 : vector<8x1xf32> to vector<8x8xf32>
    %68 = arith.mulf %63, %67 : vector<8x8xf32>
    %69 = arith.truncf %68 : vector<8x8xf32> to vector<8x8xbf16>
    %cst_34 = arith.constant dense<0.000000e+00> : vector<8x32xf32>
    %70 = tpu.matmul %69, %56, %cst_34 {dimension_numbers = #tpu.dot_dimension_numbers<[1], [0], [0], [1], [0, 0, 1, 1], [], []>} : vector<8x8xbf16>, vector<8x32xbf16>, vector<8x32xf32> -> vector<8x32xf32>
    %71 = arith.truncf %70 : vector<8x32xf32> to vector<8x32xbf16>
    %72 = vector.extract_strided_slice %47 {offsets = [0, 0], sizes = [32, 128], strides = [1, 1]} : vector<128x128xbf16> to vector<32x128xbf16>
    %cst_35 = arith.constant dense<0.000000e+00> : vector<8x128xf32>
    %73 = tpu.matmul %71, %72, %cst_35 {dimension_numbers = #tpu.dot_dimension_numbers<[1], [0], [0], [1], [0, 0, 1, 1], [], []>} : vector<8x32xbf16>, vector<32x128xbf16>, vector<8x128xf32> -> vector<8x128xf32>
    %74 = arith.addf %48, %73 : vector<8x128xf32>
    %75 = vector.extract_strided_slice %45 {offsets = [0, 32], sizes = [8, 32], strides = [1, 1]} : vector<8x384xf32> to vector<8x32xf32>
    %cst_36 = arith.constant 0.176776692 : f32
    %76 = vector.broadcast %cst_36 : f32 to vector<8x32xf32>
    %77 = arith.mulf %75, %76 : vector<8x32xf32>
    %78 = arith.truncf %77 : vector<8x32xf32> to vector<8x32xbf16>
    %79 = vector.extract_strided_slice %45 {offsets = [0, 160], sizes = [8, 32], strides = [1, 1]} : vector<8x384xf32> to vector<8x32xf32>
    %80 = arith.truncf %79 : vector<8x32xf32> to vector<8x32xbf16>
    %81 = vector.extract_strided_slice %45 {offsets = [0, 288], sizes = [8, 32], strides = [1, 1]} : vector<8x384xf32> to vector<8x32xf32>
    %82 = arith.truncf %81 : vector<8x32xf32> to vector<8x32xbf16>
    %cst_37 = arith.constant dense<0.000000e+00> : vector<8x8xf32>
    %83 = tpu.matmul %78, %80, %cst_37 {dimension_numbers = #tpu.dot_dimension_numbers<[1], [1], [0], [0], [0, 0, 1, 0], [], []>} : vector<8x32xbf16>, vector<8x32xbf16>, vector<8x8xf32> -> vector<8x8xf32>
    %84 = arith.addf %83, %11 : vector<8x8xf32>
    %cst_38 = arith.constant dense<0xFF800000> : vector<8xf32>
    %85 = vector.multi_reduction <maximumf>, %84, %cst_38 [1] : vector<8x8xf32> to vector<8xf32>
    %86 = vector.shape_cast %85 : vector<8xf32> to vector<8x1xf32>
    %87 = vector.broadcast %86 : vector<8x1xf32> to vector<8x8xf32>
    %88 = arith.subf %84, %87 : vector<8x8xf32>
    %89 = math.exp %88 : vector<8x8xf32>
    %cst_39 = arith.constant dense<0.000000e+00> : vector<8xf32>
    %90 = vector.multi_reduction <add>, %89, %cst_39 [1] : vector<8x8xf32> to vector<8xf32>
    %91 = vector.shape_cast %90 : vector<8xf32> to vector<8x1xf32>
    %92 = tpu.reciprocal %91 {approx = true} : vector<8x1xf32> -> vector<8x1xf32>
    %93 = vector.broadcast %92 : vector<8x1xf32> to vector<8x8xf32>
    %94 = arith.mulf %89, %93 : vector<8x8xf32>
    %95 = arith.truncf %94 : vector<8x8xf32> to vector<8x8xbf16>
    %cst_40 = arith.constant dense<0.000000e+00> : vector<8x32xf32>
    %96 = tpu.matmul %95, %82, %cst_40 {dimension_numbers = #tpu.dot_dimension_numbers<[1], [0], [0], [1], [0, 0, 1, 1], [], []>} : vector<8x8xbf16>, vector<8x32xbf16>, vector<8x32xf32> -> vector<8x32xf32>
    %97 = arith.truncf %96 : vector<8x32xf32> to vector<8x32xbf16>
    %98 = vector.extract_strided_slice %47 {offsets = [32, 0], sizes = [32, 128], strides = [1, 1]} : vector<128x128xbf16> to vector<32x128xbf16>
    %cst_41 = arith.constant dense<0.000000e+00> : vector<8x128xf32>
    %99 = tpu.matmul %97, %98, %cst_41 {dimension_numbers = #tpu.dot_dimension_numbers<[1], [0], [0], [1], [0, 0, 1, 1], [], []>} : vector<8x32xbf16>, vector<32x128xbf16>, vector<8x128xf32> -> vector<8x128xf32>
    %100 = arith.addf %74, %99 : vector<8x128xf32>
    %101 = vector.extract_strided_slice %45 {offsets = [0, 64], sizes = [8, 32], strides = [1, 1]} : vector<8x384xf32> to vector<8x32xf32>
    %cst_42 = arith.constant 0.176776692 : f32
    %102 = vector.broadcast %cst_42 : f32 to vector<8x32xf32>
    %103 = arith.mulf %101, %102 : vector<8x32xf32>
    %104 = arith.truncf %103 : vector<8x32xf32> to vector<8x32xbf16>
    %105 = vector.extract_strided_slice %45 {offsets = [0, 192], sizes = [8, 32], strides = [1, 1]} : vector<8x384xf32> to vector<8x32xf32>
    %106 = arith.truncf %105 : vector<8x32xf32> to vector<8x32xbf16>
    %107 = vector.extract_strided_slice %45 {offsets = [0, 320], sizes = [8, 32], strides = [1, 1]} : vector<8x384xf32> to vector<8x32xf32>
    %108 = arith.truncf %107 : vector<8x32xf32> to vector<8x32xbf16>
    %cst_43 = arith.constant dense<0.000000e+00> : vector<8x8xf32>
    %109 = tpu.matmul %104, %106, %cst_43 {dimension_numbers = #tpu.dot_dimension_numbers<[1], [1], [0], [0], [0, 0, 1, 0], [], []>} : vector<8x32xbf16>, vector<8x32xbf16>, vector<8x8xf32> -> vector<8x8xf32>
    %110 = arith.addf %109, %11 : vector<8x8xf32>
    %cst_44 = arith.constant dense<0xFF800000> : vector<8xf32>
    %111 = vector.multi_reduction <maximumf>, %110, %cst_44 [1] : vector<8x8xf32> to vector<8xf32>
    %112 = vector.shape_cast %111 : vector<8xf32> to vector<8x1xf32>
    %113 = vector.broadcast %112 : vector<8x1xf32> to vector<8x8xf32>
    %114 = arith.subf %110, %113 : vector<8x8xf32>
    %115 = math.exp %114 : vector<8x8xf32>
    %cst_45 = arith.constant dense<0.000000e+00> : vector<8xf32>
    %116 = vector.multi_reduction <add>, %115, %cst_45 [1] : vector<8x8xf32> to vector<8xf32>
    %117 = vector.shape_cast %116 : vector<8xf32> to vector<8x1xf32>
    %118 = tpu.reciprocal %117 {approx = true} : vector<8x1xf32> -> vector<8x1xf32>
    %119 = vector.broadcast %118 : vector<8x1xf32> to vector<8x8xf32>
    %120 = arith.mulf %115, %119 : vector<8x8xf32>
    %121 = arith.truncf %120 : vector<8x8xf32> to vector<8x8xbf16>
    %cst_46 = arith.constant dense<0.000000e+00> : vector<8x32xf32>
    %122 = tpu.matmul %121, %108, %cst_46 {dimension_numbers = #tpu.dot_dimension_numbers<[1], [0], [0], [1], [0, 0, 1, 1], [], []>} : vector<8x8xbf16>, vector<8x32xbf16>, vector<8x32xf32> -> vector<8x32xf32>
    %123 = arith.truncf %122 : vector<8x32xf32> to vector<8x32xbf16>
    %124 = vector.extract_strided_slice %47 {offsets = [64, 0], sizes = [32, 128], strides = [1, 1]} : vector<128x128xbf16> to vector<32x128xbf16>
    %cst_47 = arith.constant dense<0.000000e+00> : vector<8x128xf32>
    %125 = tpu.matmul %123, %124, %cst_47 {dimension_numbers = #tpu.dot_dimension_numbers<[1], [0], [0], [1], [0, 0, 1, 1], [], []>} : vector<8x32xbf16>, vector<32x128xbf16>, vector<8x128xf32> -> vector<8x128xf32>
    %126 = arith.addf %100, %125 : vector<8x128xf32>
    %127 = vector.extract_strided_slice %45 {offsets = [0, 96], sizes = [8, 32], strides = [1, 1]} : vector<8x384xf32> to vector<8x32xf32>
    %cst_48 = arith.constant 0.176776692 : f32
    %128 = vector.broadcast %cst_48 : f32 to vector<8x32xf32>
    %129 = arith.mulf %127, %128 : vector<8x32xf32>
    %130 = arith.truncf %129 : vector<8x32xf32> to vector<8x32xbf16>
    %131 = vector.extract_strided_slice %45 {offsets = [0, 224], sizes = [8, 32], strides = [1, 1]} : vector<8x384xf32> to vector<8x32xf32>
    %132 = arith.truncf %131 : vector<8x32xf32> to vector<8x32xbf16>
    %133 = vector.extract_strided_slice %45 {offsets = [0, 352], sizes = [8, 32], strides = [1, 1]} : vector<8x384xf32> to vector<8x32xf32>
    %134 = arith.truncf %133 : vector<8x32xf32> to vector<8x32xbf16>
    %cst_49 = arith.constant dense<0.000000e+00> : vector<8x8xf32>
    %135 = tpu.matmul %130, %132, %cst_49 {dimension_numbers = #tpu.dot_dimension_numbers<[1], [1], [0], [0], [0, 0, 1, 0], [], []>} : vector<8x32xbf16>, vector<8x32xbf16>, vector<8x8xf32> -> vector<8x8xf32>
    %136 = arith.addf %135, %11 : vector<8x8xf32>
    %cst_50 = arith.constant dense<0xFF800000> : vector<8xf32>
    %137 = vector.multi_reduction <maximumf>, %136, %cst_50 [1] : vector<8x8xf32> to vector<8xf32>
    %138 = vector.shape_cast %137 : vector<8xf32> to vector<8x1xf32>
    %139 = vector.broadcast %138 : vector<8x1xf32> to vector<8x8xf32>
    %140 = arith.subf %136, %139 : vector<8x8xf32>
    %141 = math.exp %140 : vector<8x8xf32>
    %cst_51 = arith.constant dense<0.000000e+00> : vector<8xf32>
    %142 = vector.multi_reduction <add>, %141, %cst_51 [1] : vector<8x8xf32> to vector<8xf32>
    %143 = vector.shape_cast %142 : vector<8xf32> to vector<8x1xf32>
    %144 = tpu.reciprocal %143 {approx = true} : vector<8x1xf32> -> vector<8x1xf32>
    %145 = vector.broadcast %144 : vector<8x1xf32> to vector<8x8xf32>
    %146 = arith.mulf %141, %145 : vector<8x8xf32>
    %147 = arith.truncf %146 : vector<8x8xf32> to vector<8x8xbf16>
    %cst_52 = arith.constant dense<0.000000e+00> : vector<8x32xf32>
    %148 = tpu.matmul %147, %134, %cst_52 {dimension_numbers = #tpu.dot_dimension_numbers<[1], [0], [0], [1], [0, 0, 1, 1], [], []>} : vector<8x8xbf16>, vector<8x32xbf16>, vector<8x32xf32> -> vector<8x32xf32>
    %149 = arith.truncf %148 : vector<8x32xf32> to vector<8x32xbf16>
    %150 = vector.extract_strided_slice %47 {offsets = [96, 0], sizes = [32, 128], strides = [1, 1]} : vector<128x128xbf16> to vector<32x128xbf16>
    %cst_53 = arith.constant dense<0.000000e+00> : vector<8x128xf32>
    %151 = tpu.matmul %149, %150, %cst_53 {dimension_numbers = #tpu.dot_dimension_numbers<[1], [0], [0], [1], [0, 0, 1, 1], [], []>} : vector<8x32xbf16>, vector<32x128xbf16>, vector<8x128xf32> -> vector<8x128xf32>
    %152 = arith.addf %126, %151 : vector<8x128xf32>
    %153 = arith.addf %5, %152 : vector<8x128xf32>
    %c0_54 = arith.constant 0 : index
    %c0_55 = arith.constant 0 : index
    %c0_56 = arith.constant 0 : index
    %154 = vector.load %arg9[%c0_54, %c0_55, %c0_56] : memref<2x1x128xf32, #tpu.memory_space<vmem>>, vector<1x1x128xf32>
    %155 = vector.shape_cast %154 : vector<1x1x128xf32> to vector<1x128xf32>
    %156 = vector.broadcast %155 : vector<1x128xf32> to vector<8x128xf32>
    %157 = arith.addf %153, %156 : vector<8x128xf32>
    %c0_57 = arith.constant 0 : index
    %c0_58 = arith.constant 0 : index
    %c0_59 = arith.constant 0 : index
    %158 = vector.load %arg10[%c0_57, %c0_58, %c0_59] : memref<2x1x128xf32, #tpu.memory_space<vmem>>, vector<1x1x128xf32>
    %159 = vector.shape_cast %158 : vector<1x1x128xf32> to vector<1x128xf32>
    %c0_60 = arith.constant 0 : index
    %c0_61 = arith.constant 0 : index
    %c0_62 = arith.constant 0 : index
    %160 = vector.load %arg11[%c0_60, %c0_61, %c0_62] : memref<2x1x128xf32, #tpu.memory_space<vmem>>, vector<1x1x128xf32>
    %161 = vector.shape_cast %160 : vector<1x1x128xf32> to vector<1x128xf32>
    %cst_63 = arith.constant dense<0.000000e+00> : vector<8xf32>
    %162 = vector.multi_reduction <add>, %157, %cst_63 [1] : vector<8x128xf32> to vector<8xf32>
    %163 = vector.shape_cast %162 : vector<8xf32> to vector<8x1xf32>
    %cst_64 = arith.constant 1.280000e+02 : f32
    %164 = vector.broadcast %cst_64 : f32 to vector<8x1xf32>
    %165 = arith.divf %163, %164 : vector<8x1xf32>
    %166 = vector.broadcast %165 : vector<8x1xf32> to vector<8x128xf32>
    %167 = arith.subf %157, %166 : vector<8x128xf32>
    %168 = arith.mulf %167, %167 : vector<8x128xf32>
    %cst_65 = arith.constant dense<0.000000e+00> : vector<8xf32>
    %169 = vector.multi_reduction <add>, %168, %cst_65 [1] : vector<8x128xf32> to vector<8xf32>
    %170 = vector.shape_cast %169 : vector<8xf32> to vector<8x1xf32>
    %cst_66 = arith.constant 1.280000e+02 : f32
    %171 = vector.broadcast %cst_66 : f32 to vector<8x1xf32>
    %172 = arith.divf %170, %171 : vector<8x1xf32>
    %173 = vector.broadcast %165 : vector<8x1xf32> to vector<8x128xf32>
    %174 = arith.subf %157, %173 : vector<8x128xf32>
    %cst_67 = arith.constant 9.99999997E-7 : f32
    %175 = vector.broadcast %cst_67 : f32 to vector<8x1xf32>
    %176 = arith.addf %172, %175 : vector<8x1xf32>
    %177 = math.rsqrt %176 : vector<8x1xf32>
    %178 = vector.broadcast %177 : vector<8x1xf32> to vector<8x128xf32>
    %179 = arith.mulf %174, %178 : vector<8x128xf32>
    %180 = vector.broadcast %159 : vector<1x128xf32> to vector<8x128xf32>
    %181 = arith.mulf %179, %180 : vector<8x128xf32>
    %182 = vector.broadcast %161 : vector<1x128xf32> to vector<8x128xf32>
    %183 = arith.addf %181, %182 : vector<8x128xf32>
    %184 = arith.truncf %183 : vector<8x128xf32> to vector<8x128xbf16>
    %c0_68 = arith.constant 0 : index
    %c0_69 = arith.constant 0 : index
    %c0_70 = arith.constant 0 : index
    %185 = vector.load %arg12[%c0_68, %c0_69, %c0_70] : memref<2x128x512xbf16, #tpu.memory_space<vmem>>, vector<1x128x512xbf16>
    %186 = vector.shape_cast %185 : vector<1x128x512xbf16> to vector<128x512xbf16>
    %cst_71 = arith.constant dense<0.000000e+00> : vector<8x512xf32>
    %187 = tpu.matmul %184, %186, %cst_71 {dimension_numbers = #tpu.dot_dimension_numbers<[1], [0], [0], [1], [0, 0, 1, 1], [], []>} : vector<8x128xbf16>, vector<128x512xbf16>, vector<8x512xf32> -> vector<8x512xf32>
    %c0_72 = arith.constant 0 : index
    %c0_73 = arith.constant 0 : index
    %c0_74 = arith.constant 0 : index
    %188 = vector.load %arg13[%c0_72, %c0_73, %c0_74] : memref<2x1x512xf32, #tpu.memory_space<vmem>>, vector<1x1x512xf32>
    %189 = vector.shape_cast %188 : vector<1x1x512xf32> to vector<1x512xf32>
    %190 = vector.broadcast %189 : vector<1x512xf32> to vector<8x512xf32>
    %191 = arith.addf %187, %190 : vector<8x512xf32>
    %cst_75 = arith.constant 5.000000e-01 : f32
    %192 = vector.broadcast %cst_75 : f32 to vector<8x512xf32>
    %193 = arith.mulf %192, %191 : vector<8x512xf32>
    %cst_76 = arith.constant 0.707106769 : f32
    %194 = vector.broadcast %cst_76 : f32 to vector<8x512xf32>
    %195 = arith.mulf %191, %194 : vector<8x512xf32>
    %196 = math.erf %195 : vector<8x512xf32>
    %cst_77 = arith.constant 1.000000e+00 : f32
    %197 = vector.broadcast %cst_77 : f32 to vector<8x512xf32>
    %198 = arith.addf %197, %196 : vector<8x512xf32>
    %199 = arith.mulf %193, %198 : vector<8x512xf32>
    %200 = arith.truncf %199 : vector<8x512xf32> to vector<8x512xbf16>
    %c0_78 = arith.constant 0 : index
    %c0_79 = arith.constant 0 : index
    %c0_80 = arith.constant 0 : index
    %201 = vector.load %arg14[%c0_78, %c0_79, %c0_80] : memref<2x512x128xbf16, #tpu.memory_space<vmem>>, vector<1x512x128xbf16>
    %202 = vector.shape_cast %201 : vector<1x512x128xbf16> to vector<512x128xbf16>
    %cst_81 = arith.constant dense<0.000000e+00> : vector<8x128xf32>
    %203 = tpu.matmul %200, %202, %cst_81 {dimension_numbers = #tpu.dot_dimension_numbers<[1], [0], [0], [1], [0, 0, 1, 1], [], []>} : vector<8x512xbf16>, vector<512x128xbf16>, vector<8x128xf32> -> vector<8x128xf32>
    %c0_82 = arith.constant 0 : index
    %c0_83 = arith.constant 0 : index
    %c0_84 = arith.constant 0 : index
    %204 = vector.load %arg15[%c0_82, %c0_83, %c0_84] : memref<2x1x128xf32, #tpu.memory_space<vmem>>, vector<1x1x128xf32>
    %205 = vector.shape_cast %204 : vector<1x1x128xf32> to vector<1x128xf32>
    %206 = vector.broadcast %205 : vector<1x128xf32> to vector<8x128xf32>
    %207 = arith.addf %203, %206 : vector<8x128xf32>
    %208 = arith.addf %157, %207 : vector<8x128xf32>
    %c1 = arith.constant 1 : index
    %c0_85 = arith.constant 0 : index
    %c0_86 = arith.constant 0 : index
    %209 = vector.load %arg4[%c1, %c0_85, %c0_86] : memref<2x1x128xf32, #tpu.memory_space<vmem>>, vector<1x1x128xf32>
    %210 = vector.shape_cast %209 : vector<1x1x128xf32> to vector<1x128xf32>
    %c1_87 = arith.constant 1 : index
    %c0_88 = arith.constant 0 : index
    %c0_89 = arith.constant 0 : index
    %211 = vector.load %arg5[%c1_87, %c0_88, %c0_89] : memref<2x1x128xf32, #tpu.memory_space<vmem>>, vector<1x1x128xf32>
    %212 = vector.shape_cast %211 : vector<1x1x128xf32> to vector<1x128xf32>
    %cst_90 = arith.constant dense<0.000000e+00> : vector<8xf32>
    %213 = vector.multi_reduction <add>, %208, %cst_90 [1] : vector<8x128xf32> to vector<8xf32>
    %214 = vector.shape_cast %213 : vector<8xf32> to vector<8x1xf32>
    %cst_91 = arith.constant 1.280000e+02 : f32
    %215 = vector.broadcast %cst_91 : f32 to vector<8x1xf32>
    %216 = arith.divf %214, %215 : vector<8x1xf32>
    %217 = vector.broadcast %216 : vector<8x1xf32> to vector<8x128xf32>
    %218 = arith.subf %208, %217 : vector<8x128xf32>
    %219 = arith.mulf %218, %218 : vector<8x128xf32>
    %cst_92 = arith.constant dense<0.000000e+00> : vector<8xf32>
    %220 = vector.multi_reduction <add>, %219, %cst_92 [1] : vector<8x128xf32> to vector<8xf32>
    %221 = vector.shape_cast %220 : vector<8xf32> to vector<8x1xf32>
    %cst_93 = arith.constant 1.280000e+02 : f32
    %222 = vector.broadcast %cst_93 : f32 to vector<8x1xf32>
    %223 = arith.divf %221, %222 : vector<8x1xf32>
    %224 = vector.broadcast %216 : vector<8x1xf32> to vector<8x128xf32>
    %225 = arith.subf %208, %224 : vector<8x128xf32>
    %cst_94 = arith.constant 9.99999997E-7 : f32
    %226 = vector.broadcast %cst_94 : f32 to vector<8x1xf32>
    %227 = arith.addf %223, %226 : vector<8x1xf32>
    %228 = math.rsqrt %227 : vector<8x1xf32>
    %229 = vector.broadcast %228 : vector<8x1xf32> to vector<8x128xf32>
    %230 = arith.mulf %225, %229 : vector<8x128xf32>
    %231 = vector.broadcast %210 : vector<1x128xf32> to vector<8x128xf32>
    %232 = arith.mulf %230, %231 : vector<8x128xf32>
    %233 = vector.broadcast %212 : vector<1x128xf32> to vector<8x128xf32>
    %234 = arith.addf %232, %233 : vector<8x128xf32>
    %235 = arith.truncf %234 : vector<8x128xf32> to vector<8x128xbf16>
    %c1_95 = arith.constant 1 : index
    %c0_96 = arith.constant 0 : index
    %c0_97 = arith.constant 0 : index
    %236 = vector.load %arg6[%c1_95, %c0_96, %c0_97] : memref<2x128x384xbf16, #tpu.memory_space<vmem>>, vector<1x128x384xbf16>
    %237 = vector.shape_cast %236 : vector<1x128x384xbf16> to vector<128x384xbf16>
    %cst_98 = arith.constant dense<0.000000e+00> : vector<8x384xf32>
    %238 = tpu.matmul %235, %237, %cst_98 {dimension_numbers = #tpu.dot_dimension_numbers<[1], [0], [0], [1], [0, 0, 1, 1], [], []>} : vector<8x128xbf16>, vector<128x384xbf16>, vector<8x384xf32> -> vector<8x384xf32>
    %c1_99 = arith.constant 1 : index
    %c0_100 = arith.constant 0 : index
    %c0_101 = arith.constant 0 : index
    %239 = vector.load %arg7[%c1_99, %c0_100, %c0_101] : memref<2x1x384xf32, #tpu.memory_space<vmem>>, vector<1x1x384xf32>
    %240 = vector.shape_cast %239 : vector<1x1x384xf32> to vector<1x384xf32>
    %241 = vector.broadcast %240 : vector<1x384xf32> to vector<8x384xf32>
    %242 = arith.addf %238, %241 : vector<8x384xf32>
    %c1_102 = arith.constant 1 : index
    %c0_103 = arith.constant 0 : index
    %c0_104 = arith.constant 0 : index
    %243 = vector.load %arg8[%c1_102, %c0_103, %c0_104] : memref<2x128x128xbf16, #tpu.memory_space<vmem>>, vector<1x128x128xbf16>
    %244 = vector.shape_cast %243 : vector<1x128x128xbf16> to vector<128x128xbf16>
    %cst_105 = arith.constant 0.000000e+00 : f32
    %245 = vector.broadcast %cst_105 : f32 to vector<8x128xf32>
    %246 = vector.extract_strided_slice %242 {offsets = [0, 0], sizes = [8, 32], strides = [1, 1]} : vector<8x384xf32> to vector<8x32xf32>
    %cst_106 = arith.constant 0.176776692 : f32
    %247 = vector.broadcast %cst_106 : f32 to vector<8x32xf32>
    %248 = arith.mulf %246, %247 : vector<8x32xf32>
    %249 = arith.truncf %248 : vector<8x32xf32> to vector<8x32xbf16>
    %250 = vector.extract_strided_slice %242 {offsets = [0, 128], sizes = [8, 32], strides = [1, 1]} : vector<8x384xf32> to vector<8x32xf32>
    %251 = arith.truncf %250 : vector<8x32xf32> to vector<8x32xbf16>
    %252 = vector.extract_strided_slice %242 {offsets = [0, 256], sizes = [8, 32], strides = [1, 1]} : vector<8x384xf32> to vector<8x32xf32>
    %253 = arith.truncf %252 : vector<8x32xf32> to vector<8x32xbf16>
    %cst_107 = arith.constant dense<0.000000e+00> : vector<8x8xf32>
    %254 = tpu.matmul %249, %251, %cst_107 {dimension_numbers = #tpu.dot_dimension_numbers<[1], [1], [0], [0], [0, 0, 1, 0], [], []>} : vector<8x32xbf16>, vector<8x32xbf16>, vector<8x8xf32> -> vector<8x8xf32>
    %255 = arith.addf %254, %11 : vector<8x8xf32>
    %cst_108 = arith.constant dense<0xFF800000> : vector<8xf32>
    %256 = vector.multi_reduction <maximumf>, %255, %cst_108 [1] : vector<8x8xf32> to vector<8xf32>
    %257 = vector.shape_cast %256 : vector<8xf32> to vector<8x1xf32>
    %258 = vector.broadcast %257 : vector<8x1xf32> to vector<8x8xf32>
    %259 = arith.subf %255, %258 : vector<8x8xf32>
    %260 = math.exp %259 : vector<8x8xf32>
    %cst_109 = arith.constant dense<0.000000e+00> : vector<8xf32>
    %261 = vector.multi_reduction <add>, %260, %cst_109 [1] : vector<8x8xf32> to vector<8xf32>
    %262 = vector.shape_cast %261 : vector<8xf32> to vector<8x1xf32>
    %263 = tpu.reciprocal %262 {approx = true} : vector<8x1xf32> -> vector<8x1xf32>
    %264 = vector.broadcast %263 : vector<8x1xf32> to vector<8x8xf32>
    %265 = arith.mulf %260, %264 : vector<8x8xf32>
    %266 = arith.truncf %265 : vector<8x8xf32> to vector<8x8xbf16>
    %cst_110 = arith.constant dense<0.000000e+00> : vector<8x32xf32>
    %267 = tpu.matmul %266, %253, %cst_110 {dimension_numbers = #tpu.dot_dimension_numbers<[1], [0], [0], [1], [0, 0, 1, 1], [], []>} : vector<8x8xbf16>, vector<8x32xbf16>, vector<8x32xf32> -> vector<8x32xf32>
    %268 = arith.truncf %267 : vector<8x32xf32> to vector<8x32xbf16>
    %269 = vector.extract_strided_slice %244 {offsets = [0, 0], sizes = [32, 128], strides = [1, 1]} : vector<128x128xbf16> to vector<32x128xbf16>
    %cst_111 = arith.constant dense<0.000000e+00> : vector<8x128xf32>
    %270 = tpu.matmul %268, %269, %cst_111 {dimension_numbers = #tpu.dot_dimension_numbers<[1], [0], [0], [1], [0, 0, 1, 1], [], []>} : vector<8x32xbf16>, vector<32x128xbf16>, vector<8x128xf32> -> vector<8x128xf32>
    %271 = arith.addf %245, %270 : vector<8x128xf32>
    %272 = vector.extract_strided_slice %242 {offsets = [0, 32], sizes = [8, 32], strides = [1, 1]} : vector<8x384xf32> to vector<8x32xf32>
    %cst_112 = arith.constant 0.176776692 : f32
    %273 = vector.broadcast %cst_112 : f32 to vector<8x32xf32>
    %274 = arith.mulf %272, %273 : vector<8x32xf32>
    %275 = arith.truncf %274 : vector<8x32xf32> to vector<8x32xbf16>
    %276 = vector.extract_strided_slice %242 {offsets = [0, 160], sizes = [8, 32], strides = [1, 1]} : vector<8x384xf32> to vector<8x32xf32>
    %277 = arith.truncf %276 : vector<8x32xf32> to vector<8x32xbf16>
    %278 = vector.extract_strided_slice %242 {offsets = [0, 288], sizes = [8, 32], strides = [1, 1]} : vector<8x384xf32> to vector<8x32xf32>
    %279 = arith.truncf %278 : vector<8x32xf32> to vector<8x32xbf16>
    %cst_113 = arith.constant dense<0.000000e+00> : vector<8x8xf32>
    %280 = tpu.matmul %275, %277, %cst_113 {dimension_numbers = #tpu.dot_dimension_numbers<[1], [1], [0], [0], [0, 0, 1, 0], [], []>} : vector<8x32xbf16>, vector<8x32xbf16>, vector<8x8xf32> -> vector<8x8xf32>
    %281 = arith.addf %280, %11 : vector<8x8xf32>
    %cst_114 = arith.constant dense<0xFF800000> : vector<8xf32>
    %282 = vector.multi_reduction <maximumf>, %281, %cst_114 [1] : vector<8x8xf32> to vector<8xf32>
    %283 = vector.shape_cast %282 : vector<8xf32> to vector<8x1xf32>
    %284 = vector.broadcast %283 : vector<8x1xf32> to vector<8x8xf32>
    %285 = arith.subf %281, %284 : vector<8x8xf32>
    %286 = math.exp %285 : vector<8x8xf32>
    %cst_115 = arith.constant dense<0.000000e+00> : vector<8xf32>
    %287 = vector.multi_reduction <add>, %286, %cst_115 [1] : vector<8x8xf32> to vector<8xf32>
    %288 = vector.shape_cast %287 : vector<8xf32> to vector<8x1xf32>
    %289 = tpu.reciprocal %288 {approx = true} : vector<8x1xf32> -> vector<8x1xf32>
    %290 = vector.broadcast %289 : vector<8x1xf32> to vector<8x8xf32>
    %291 = arith.mulf %286, %290 : vector<8x8xf32>
    %292 = arith.truncf %291 : vector<8x8xf32> to vector<8x8xbf16>
    %cst_116 = arith.constant dense<0.000000e+00> : vector<8x32xf32>
    %293 = tpu.matmul %292, %279, %cst_116 {dimension_numbers = #tpu.dot_dimension_numbers<[1], [0], [0], [1], [0, 0, 1, 1], [], []>} : vector<8x8xbf16>, vector<8x32xbf16>, vector<8x32xf32> -> vector<8x32xf32>
    %294 = arith.truncf %293 : vector<8x32xf32> to vector<8x32xbf16>
    %295 = vector.extract_strided_slice %244 {offsets = [32, 0], sizes = [32, 128], strides = [1, 1]} : vector<128x128xbf16> to vector<32x128xbf16>
    %cst_117 = arith.constant dense<0.000000e+00> : vector<8x128xf32>
    %296 = tpu.matmul %294, %295, %cst_117 {dimension_numbers = #tpu.dot_dimension_numbers<[1], [0], [0], [1], [0, 0, 1, 1], [], []>} : vector<8x32xbf16>, vector<32x128xbf16>, vector<8x128xf32> -> vector<8x128xf32>
    %297 = arith.addf %271, %296 : vector<8x128xf32>
    %298 = vector.extract_strided_slice %242 {offsets = [0, 64], sizes = [8, 32], strides = [1, 1]} : vector<8x384xf32> to vector<8x32xf32>
    %cst_118 = arith.constant 0.176776692 : f32
    %299 = vector.broadcast %cst_118 : f32 to vector<8x32xf32>
    %300 = arith.mulf %298, %299 : vector<8x32xf32>
    %301 = arith.truncf %300 : vector<8x32xf32> to vector<8x32xbf16>
    %302 = vector.extract_strided_slice %242 {offsets = [0, 192], sizes = [8, 32], strides = [1, 1]} : vector<8x384xf32> to vector<8x32xf32>
    %303 = arith.truncf %302 : vector<8x32xf32> to vector<8x32xbf16>
    %304 = vector.extract_strided_slice %242 {offsets = [0, 320], sizes = [8, 32], strides = [1, 1]} : vector<8x384xf32> to vector<8x32xf32>
    %305 = arith.truncf %304 : vector<8x32xf32> to vector<8x32xbf16>
    %cst_119 = arith.constant dense<0.000000e+00> : vector<8x8xf32>
    %306 = tpu.matmul %301, %303, %cst_119 {dimension_numbers = #tpu.dot_dimension_numbers<[1], [1], [0], [0], [0, 0, 1, 0], [], []>} : vector<8x32xbf16>, vector<8x32xbf16>, vector<8x8xf32> -> vector<8x8xf32>
    %307 = arith.addf %306, %11 : vector<8x8xf32>
    %cst_120 = arith.constant dense<0xFF800000> : vector<8xf32>
    %308 = vector.multi_reduction <maximumf>, %307, %cst_120 [1] : vector<8x8xf32> to vector<8xf32>
    %309 = vector.shape_cast %308 : vector<8xf32> to vector<8x1xf32>
    %310 = vector.broadcast %309 : vector<8x1xf32> to vector<8x8xf32>
    %311 = arith.subf %307, %310 : vector<8x8xf32>
    %312 = math.exp %311 : vector<8x8xf32>
    %cst_121 = arith.constant dense<0.000000e+00> : vector<8xf32>
    %313 = vector.multi_reduction <add>, %312, %cst_121 [1] : vector<8x8xf32> to vector<8xf32>
    %314 = vector.shape_cast %313 : vector<8xf32> to vector<8x1xf32>
    %315 = tpu.reciprocal %314 {approx = true} : vector<8x1xf32> -> vector<8x1xf32>
    %316 = vector.broadcast %315 : vector<8x1xf32> to vector<8x8xf32>
    %317 = arith.mulf %312, %316 : vector<8x8xf32>
    %318 = arith.truncf %317 : vector<8x8xf32> to vector<8x8xbf16>
    %cst_122 = arith.constant dense<0.000000e+00> : vector<8x32xf32>
    %319 = tpu.matmul %318, %305, %cst_122 {dimension_numbers = #tpu.dot_dimension_numbers<[1], [0], [0], [1], [0, 0, 1, 1], [], []>} : vector<8x8xbf16>, vector<8x32xbf16>, vector<8x32xf32> -> vector<8x32xf32>
    %320 = arith.truncf %319 : vector<8x32xf32> to vector<8x32xbf16>
    %321 = vector.extract_strided_slice %244 {offsets = [64, 0], sizes = [32, 128], strides = [1, 1]} : vector<128x128xbf16> to vector<32x128xbf16>
    %cst_123 = arith.constant dense<0.000000e+00> : vector<8x128xf32>
    %322 = tpu.matmul %320, %321, %cst_123 {dimension_numbers = #tpu.dot_dimension_numbers<[1], [0], [0], [1], [0, 0, 1, 1], [], []>} : vector<8x32xbf16>, vector<32x128xbf16>, vector<8x128xf32> -> vector<8x128xf32>
    %323 = arith.addf %297, %322 : vector<8x128xf32>
    %324 = vector.extract_strided_slice %242 {offsets = [0, 96], sizes = [8, 32], strides = [1, 1]} : vector<8x384xf32> to vector<8x32xf32>
    %cst_124 = arith.constant 0.176776692 : f32
    %325 = vector.broadcast %cst_124 : f32 to vector<8x32xf32>
    %326 = arith.mulf %324, %325 : vector<8x32xf32>
    %327 = arith.truncf %326 : vector<8x32xf32> to vector<8x32xbf16>
    %328 = vector.extract_strided_slice %242 {offsets = [0, 224], sizes = [8, 32], strides = [1, 1]} : vector<8x384xf32> to vector<8x32xf32>
    %329 = arith.truncf %328 : vector<8x32xf32> to vector<8x32xbf16>
    %330 = vector.extract_strided_slice %242 {offsets = [0, 352], sizes = [8, 32], strides = [1, 1]} : vector<8x384xf32> to vector<8x32xf32>
    %331 = arith.truncf %330 : vector<8x32xf32> to vector<8x32xbf16>
    %cst_125 = arith.constant dense<0.000000e+00> : vector<8x8xf32>
    %332 = tpu.matmul %327, %329, %cst_125 {dimension_numbers = #tpu.dot_dimension_numbers<[1], [1], [0], [0], [0, 0, 1, 0], [], []>} : vector<8x32xbf16>, vector<8x32xbf16>, vector<8x8xf32> -> vector<8x8xf32>
    %333 = arith.addf %332, %11 : vector<8x8xf32>
    %cst_126 = arith.constant dense<0xFF800000> : vector<8xf32>
    %334 = vector.multi_reduction <maximumf>, %333, %cst_126 [1] : vector<8x8xf32> to vector<8xf32>
    %335 = vector.shape_cast %334 : vector<8xf32> to vector<8x1xf32>
    %336 = vector.broadcast %335 : vector<8x1xf32> to vector<8x8xf32>
    %337 = arith.subf %333, %336 : vector<8x8xf32>
    %338 = math.exp %337 : vector<8x8xf32>
    %cst_127 = arith.constant dense<0.000000e+00> : vector<8xf32>
    %339 = vector.multi_reduction <add>, %338, %cst_127 [1] : vector<8x8xf32> to vector<8xf32>
    %340 = vector.shape_cast %339 : vector<8xf32> to vector<8x1xf32>
    %341 = tpu.reciprocal %340 {approx = true} : vector<8x1xf32> -> vector<8x1xf32>
    %342 = vector.broadcast %341 : vector<8x1xf32> to vector<8x8xf32>
    %343 = arith.mulf %338, %342 : vector<8x8xf32>
    %344 = arith.truncf %343 : vector<8x8xf32> to vector<8x8xbf16>
    %cst_128 = arith.constant dense<0.000000e+00> : vector<8x32xf32>
    %345 = tpu.matmul %344, %331, %cst_128 {dimension_numbers = #tpu.dot_dimension_numbers<[1], [0], [0], [1], [0, 0, 1, 1], [], []>} : vector<8x8xbf16>, vector<8x32xbf16>, vector<8x32xf32> -> vector<8x32xf32>
    %346 = arith.truncf %345 : vector<8x32xf32> to vector<8x32xbf16>
    %347 = vector.extract_strided_slice %244 {offsets = [96, 0], sizes = [32, 128], strides = [1, 1]} : vector<128x128xbf16> to vector<32x128xbf16>
    %cst_129 = arith.constant dense<0.000000e+00> : vector<8x128xf32>
    %348 = tpu.matmul %346, %347, %cst_129 {dimension_numbers = #tpu.dot_dimension_numbers<[1], [0], [0], [1], [0, 0, 1, 1], [], []>} : vector<8x32xbf16>, vector<32x128xbf16>, vector<8x128xf32> -> vector<8x128xf32>
    %349 = arith.addf %323, %348 : vector<8x128xf32>
    %350 = arith.addf %208, %349 : vector<8x128xf32>
    %c1_130 = arith.constant 1 : index
    %c0_131 = arith.constant 0 : index
    %c0_132 = arith.constant 0 : index
    %351 = vector.load %arg9[%c1_130, %c0_131, %c0_132] : memref<2x1x128xf32, #tpu.memory_space<vmem>>, vector<1x1x128xf32>
    %352 = vector.shape_cast %351 : vector<1x1x128xf32> to vector<1x128xf32>
    %353 = vector.broadcast %352 : vector<1x128xf32> to vector<8x128xf32>
    %354 = arith.addf %350, %353 : vector<8x128xf32>
    %c1_133 = arith.constant 1 : index
    %c0_134 = arith.constant 0 : index
    %c0_135 = arith.constant 0 : index
    %355 = vector.load %arg10[%c1_133, %c0_134, %c0_135] : memref<2x1x128xf32, #tpu.memory_space<vmem>>, vector<1x1x128xf32>
    %356 = vector.shape_cast %355 : vector<1x1x128xf32> to vector<1x128xf32>
    %c1_136 = arith.constant 1 : index
    %c0_137 = arith.constant 0 : index
    %c0_138 = arith.constant 0 : index
    %357 = vector.load %arg11[%c1_136, %c0_137, %c0_138] : memref<2x1x128xf32, #tpu.memory_space<vmem>>, vector<1x1x128xf32>
    %358 = vector.shape_cast %357 : vector<1x1x128xf32> to vector<1x128xf32>
    %cst_139 = arith.constant dense<0.000000e+00> : vector<8xf32>
    %359 = vector.multi_reduction <add>, %354, %cst_139 [1] : vector<8x128xf32> to vector<8xf32>
    %360 = vector.shape_cast %359 : vector<8xf32> to vector<8x1xf32>
    %cst_140 = arith.constant 1.280000e+02 : f32
    %361 = vector.broadcast %cst_140 : f32 to vector<8x1xf32>
    %362 = arith.divf %360, %361 : vector<8x1xf32>
    %363 = vector.broadcast %362 : vector<8x1xf32> to vector<8x128xf32>
    %364 = arith.subf %354, %363 : vector<8x128xf32>
    %365 = arith.mulf %364, %364 : vector<8x128xf32>
    %cst_141 = arith.constant dense<0.000000e+00> : vector<8xf32>
    %366 = vector.multi_reduction <add>, %365, %cst_141 [1] : vector<8x128xf32> to vector<8xf32>
    %367 = vector.shape_cast %366 : vector<8xf32> to vector<8x1xf32>
    %cst_142 = arith.constant 1.280000e+02 : f32
    %368 = vector.broadcast %cst_142 : f32 to vector<8x1xf32>
    %369 = arith.divf %367, %368 : vector<8x1xf32>
    %370 = vector.broadcast %362 : vector<8x1xf32> to vector<8x128xf32>
    %371 = arith.subf %354, %370 : vector<8x128xf32>
    %cst_143 = arith.constant 9.99999997E-7 : f32
    %372 = vector.broadcast %cst_143 : f32 to vector<8x1xf32>
    %373 = arith.addf %369, %372 : vector<8x1xf32>
    %374 = math.rsqrt %373 : vector<8x1xf32>
    %375 = vector.broadcast %374 : vector<8x1xf32> to vector<8x128xf32>
    %376 = arith.mulf %371, %375 : vector<8x128xf32>
    %377 = vector.broadcast %356 : vector<1x128xf32> to vector<8x128xf32>
    %378 = arith.mulf %376, %377 : vector<8x128xf32>
    %379 = vector.broadcast %358 : vector<1x128xf32> to vector<8x128xf32>
    %380 = arith.addf %378, %379 : vector<8x128xf32>
    %381 = arith.truncf %380 : vector<8x128xf32> to vector<8x128xbf16>
    %c1_144 = arith.constant 1 : index
    %c0_145 = arith.constant 0 : index
    %c0_146 = arith.constant 0 : index
    %382 = vector.load %arg12[%c1_144, %c0_145, %c0_146] : memref<2x128x512xbf16, #tpu.memory_space<vmem>>, vector<1x128x512xbf16>
    %383 = vector.shape_cast %382 : vector<1x128x512xbf16> to vector<128x512xbf16>
    %cst_147 = arith.constant dense<0.000000e+00> : vector<8x512xf32>
    %384 = tpu.matmul %381, %383, %cst_147 {dimension_numbers = #tpu.dot_dimension_numbers<[1], [0], [0], [1], [0, 0, 1, 1], [], []>} : vector<8x128xbf16>, vector<128x512xbf16>, vector<8x512xf32> -> vector<8x512xf32>
    %c1_148 = arith.constant 1 : index
    %c0_149 = arith.constant 0 : index
    %c0_150 = arith.constant 0 : index
    %385 = vector.load %arg13[%c1_148, %c0_149, %c0_150] : memref<2x1x512xf32, #tpu.memory_space<vmem>>, vector<1x1x512xf32>
    %386 = vector.shape_cast %385 : vector<1x1x512xf32> to vector<1x512xf32>
    %387 = vector.broadcast %386 : vector<1x512xf32> to vector<8x512xf32>
    %388 = arith.addf %384, %387 : vector<8x512xf32>
    %cst_151 = arith.constant 5.000000e-01 : f32
    %389 = vector.broadcast %cst_151 : f32 to vector<8x512xf32>
    %390 = arith.mulf %389, %388 : vector<8x512xf32>
    %cst_152 = arith.constant 0.707106769 : f32
    %391 = vector.broadcast %cst_152 : f32 to vector<8x512xf32>
    %392 = arith.mulf %388, %391 : vector<8x512xf32>
    %393 = math.erf %392 : vector<8x512xf32>
    %cst_153 = arith.constant 1.000000e+00 : f32
    %394 = vector.broadcast %cst_153 : f32 to vector<8x512xf32>
    %395 = arith.addf %394, %393 : vector<8x512xf32>
    %396 = arith.mulf %390, %395 : vector<8x512xf32>
    %397 = arith.truncf %396 : vector<8x512xf32> to vector<8x512xbf16>
    %c1_154 = arith.constant 1 : index
    %c0_155 = arith.constant 0 : index
    %c0_156 = arith.constant 0 : index
    %398 = vector.load %arg14[%c1_154, %c0_155, %c0_156] : memref<2x512x128xbf16, #tpu.memory_space<vmem>>, vector<1x512x128xbf16>
    %399 = vector.shape_cast %398 : vector<1x512x128xbf16> to vector<512x128xbf16>
    %cst_157 = arith.constant dense<0.000000e+00> : vector<8x128xf32>
    %400 = tpu.matmul %397, %399, %cst_157 {dimension_numbers = #tpu.dot_dimension_numbers<[1], [0], [0], [1], [0, 0, 1, 1], [], []>} : vector<8x512xbf16>, vector<512x128xbf16>, vector<8x128xf32> -> vector<8x128xf32>
    %c1_158 = arith.constant 1 : index
    %c0_159 = arith.constant 0 : index
    %c0_160 = arith.constant 0 : index
    %401 = vector.load %arg15[%c1_158, %c0_159, %c0_160] : memref<2x1x128xf32, #tpu.memory_space<vmem>>, vector<1x1x128xf32>
    %402 = vector.shape_cast %401 : vector<1x1x128xf32> to vector<1x128xf32>
    %403 = vector.broadcast %402 : vector<1x128xf32> to vector<8x128xf32>
    %404 = arith.addf %400, %403 : vector<8x128xf32>
    %405 = arith.addf %354, %404 : vector<8x128xf32>
    %c0_161 = arith.constant 0 : index
    %c0_162 = arith.constant 0 : index
    %406 = vector.load %arg16[%c0_161, %c0_162] : memref<1x128xf32, #tpu.memory_space<vmem>>, vector<1x128xf32>
    %c0_163 = arith.constant 0 : index
    %c0_164 = arith.constant 0 : index
    %407 = vector.load %arg17[%c0_163, %c0_164] : memref<1x128xf32, #tpu.memory_space<vmem>>, vector<1x128xf32>
    %cst_165 = arith.constant dense<0.000000e+00> : vector<8xf32>
    %408 = vector.multi_reduction <add>, %405, %cst_165 [1] : vector<8x128xf32> to vector<8xf32>
    %409 = vector.shape_cast %408 : vector<8xf32> to vector<8x1xf32>
    %cst_166 = arith.constant 1.280000e+02 : f32
    %410 = vector.broadcast %cst_166 : f32 to vector<8x1xf32>
    %411 = arith.divf %409, %410 : vector<8x1xf32>
    %412 = vector.broadcast %411 : vector<8x1xf32> to vector<8x128xf32>
    %413 = arith.subf %405, %412 : vector<8x128xf32>
    %414 = arith.mulf %413, %413 : vector<8x128xf32>
    %cst_167 = arith.constant dense<0.000000e+00> : vector<8xf32>
    %415 = vector.multi_reduction <add>, %414, %cst_167 [1] : vector<8x128xf32> to vector<8xf32>
    %416 = vector.shape_cast %415 : vector<8xf32> to vector<8x1xf32>
    %cst_168 = arith.constant 1.280000e+02 : f32
    %417 = vector.broadcast %cst_168 : f32 to vector<8x1xf32>
    %418 = arith.divf %416, %417 : vector<8x1xf32>
    %419 = vector.broadcast %411 : vector<8x1xf32> to vector<8x128xf32>
    %420 = arith.subf %405, %419 : vector<8x128xf32>
    %cst_169 = arith.constant 9.99999997E-7 : f32
    %421 = vector.broadcast %cst_169 : f32 to vector<8x1xf32>
    %422 = arith.addf %418, %421 : vector<8x1xf32>
    %423 = math.rsqrt %422 : vector<8x1xf32>
    %424 = vector.broadcast %423 : vector<8x1xf32> to vector<8x128xf32>
    %425 = arith.mulf %420, %424 : vector<8x128xf32>
    %426 = vector.broadcast %406 : vector<1x128xf32> to vector<8x128xf32>
    %427 = arith.mulf %425, %426 : vector<8x128xf32>
    %428 = vector.broadcast %407 : vector<1x128xf32> to vector<8x128xf32>
    %429 = arith.addf %427, %428 : vector<8x128xf32>
    %430 = vector.extract_strided_slice %429 {offsets = [0, 0], sizes = [1, 128], strides = [1, 1]} : vector<8x128xf32> to vector<1x128xf32>
    %431 = arith.truncf %430 : vector<1x128xf32> to vector<1x128xbf16>
    %c0_170 = arith.constant 0 : index
    %c0_171 = arith.constant 0 : index
    %432 = vector.load %arg18[%c0_170, %c0_171] : memref<128x4xbf16, #tpu.memory_space<vmem>>, vector<128x4xbf16>
    %cst_172 = arith.constant dense<0.000000e+00> : vector<1x4xf32>
    %433 = tpu.matmul %431, %432, %cst_172 {dimension_numbers = #tpu.dot_dimension_numbers<[1], [0], [0], [1], [0, 0, 1, 1], [], []>} : vector<1x128xbf16>, vector<128x4xbf16>, vector<1x4xf32> -> vector<1x4xf32>
    %c0_173 = arith.constant 0 : index
    %c0_174 = arith.constant 0 : index
    %434 = vector.load %arg19[%c0_173, %c0_174] : memref<1x4xf32, #tpu.memory_space<vmem>>, vector<1x4xf32>
    %435 = arith.addf %433, %434 : vector<1x4xf32>
    %436 = vector.shape_cast %435 : vector<1x4xf32> to vector<1x1x4xf32>
    %c0_175 = arith.constant 0 : index
    %c0_176 = arith.constant 0 : index
    %c0_177 = arith.constant 0 : index
    %437 = vector.load %arg20[%c0_175, %c0_176, %c0_177] : memref<1x1x4xf32, #tpu.memory_space<vmem>>, vector<1x1x4xf32>
    tpu.vector_store %arg20[%c0_175, %c0_176, %c0_177], %436 {strides = array<i32>} : memref<1x1x4xf32, #tpu.memory_space<vmem>>, vector<1x1x4xf32>,
    return
  }
  func.func @transform_0(%arg0: i32) -> (i32, i32, i32) {
    %c0_i32 = arith.constant 0 : i32
    %c0_i32_0 = arith.constant 0 : i32
    %c0_i32_1 = arith.constant 0 : i32
    return %arg0, %c0_i32, %c0_i32_0 : i32, i32, i32
  }
  func.func @transform_1(%arg0: i32) -> (i32, i32) {
    %c0_i32 = arith.constant 0 : i32
    %c0_i32_0 = arith.constant 0 : i32
    %c0_i32_1 = arith.constant 0 : i32
    return %c0_i32, %c0_i32_0 : i32, i32
  }
  func.func @transform_2(%arg0: i32) -> (i32, i32) {
    %c0_i32 = arith.constant 0 : i32
    %c0_i32_0 = arith.constant 0 : i32
    %c0_i32_1 = arith.constant 0 : i32
    return %c0_i32, %c0_i32_0 : i32, i32
  }
  func.func @transform_3(%arg0: i32) -> (i32, i32, i32) {
    %c0_i32 = arith.constant 0 : i32
    %c0_i32_0 = arith.constant 0 : i32
    %c0_i32_1 = arith.constant 0 : i32
    %c0_i32_2 = arith.constant 0 : i32
    return %c0_i32, %c0_i32_0, %c0_i32_1 : i32, i32, i32
  }
  func.func @transform_4(%arg0: i32) -> (i32, i32, i32) {
    %c0_i32 = arith.constant 0 : i32
    %c0_i32_0 = arith.constant 0 : i32
    %c0_i32_1 = arith.constant 0 : i32
    %c0_i32_2 = arith.constant 0 : i32
    return %c0_i32, %c0_i32_0, %c0_i32_1 : i32, i32, i32
  }
  func.func @transform_5(%arg0: i32) -> (i32, i32, i32) {
    %c0_i32 = arith.constant 0 : i32
    %c0_i32_0 = arith.constant 0 : i32
    %c0_i32_1 = arith.constant 0 : i32
    %c0_i32_2 = arith.constant 0 : i32
    return %c0_i32, %c0_i32_0, %c0_i32_1 : i32, i32, i32
  }
  func.func @transform_6(%arg0: i32) -> (i32, i32, i32) {
    %c0_i32 = arith.constant 0 : i32
    %c0_i32_0 = arith.constant 0 : i32
    %c0_i32_1 = arith.constant 0 : i32
    %c0_i32_2 = arith.constant 0 : i32
    return %c0_i32, %c0_i32_0, %c0_i32_1 : i32, i32, i32
  }
  func.func @transform_7(%arg0: i32) -> (i32, i32, i32) {
    %c0_i32 = arith.constant 0 : i32
    %c0_i32_0 = arith.constant 0 : i32
    %c0_i32_1 = arith.constant 0 : i32
    %c0_i32_2 = arith.constant 0 : i32
    return %c0_i32, %c0_i32_0, %c0_i32_1 : i32, i32, i32
  }
  func.func @transform_8(%arg0: i32) -> (i32, i32, i32) {
    %c0_i32 = arith.constant 0 : i32
    %c0_i32_0 = arith.constant 0 : i32
    %c0_i32_1 = arith.constant 0 : i32
    %c0_i32_2 = arith.constant 0 : i32
    return %c0_i32, %c0_i32_0, %c0_i32_1 : i32, i32, i32
  }
  func.func @transform_9(%arg0: i32) -> (i32, i32, i32) {
    %c0_i32 = arith.constant 0 : i32
    %c0_i32_0 = arith.constant 0 : i32
    %c0_i32_1 = arith.constant 0 : i32
    %c0_i32_2 = arith.constant 0 : i32
    return %c0_i32, %c0_i32_0, %c0_i32_1 : i32, i32, i32
  }
  func.func @transform_10(%arg0: i32) -> (i32, i32, i32) {
    %c0_i32 = arith.constant 0 : i32
    %c0_i32_0 = arith.constant 0 : i32
    %c0_i32_1 = arith.constant 0 : i32
    %c0_i32_2 = arith.constant 0 : i32
    return %c0_i32, %c0_i32_0, %c0_i32_1 : i32, i32, i32
  }
  func.func @transform_11(%arg0: i32) -> (i32, i32, i32) {
    %c0_i32 = arith.constant 0 : i32
    %c0_i32_0 = arith.constant 0 : i32
    %c0_i32_1 = arith.constant 0 : i32
    %c0_i32_2 = arith.constant 0 : i32
    return %c0_i32, %c0_i32_0, %c0_i32_1 : i32, i32, i32
  }
  func.func @transform_12(%arg0: i32) -> (i32, i32, i32) {
    %c0_i32 = arith.constant 0 : i32
    %c0_i32_0 = arith.constant 0 : i32
    %c0_i32_1 = arith.constant 0 : i32
    %c0_i32_2 = arith.constant 0 : i32
    return %c0_i32, %c0_i32_0, %c0_i32_1 : i32, i32, i32
  }
  func.func @transform_13(%arg0: i32) -> (i32, i32, i32) {
    %c0_i32 = arith.constant 0 : i32
    %c0_i32_0 = arith.constant 0 : i32
    %c0_i32_1 = arith.constant 0 : i32
    %c0_i32_2 = arith.constant 0 : i32
    return %c0_i32, %c0_i32_0, %c0_i32_1 : i32, i32, i32
  }
  func.func @transform_14(%arg0: i32) -> (i32, i32, i32) {
    %c0_i32 = arith.constant 0 : i32
    %c0_i32_0 = arith.constant 0 : i32
    %c0_i32_1 = arith.constant 0 : i32
    %c0_i32_2 = arith.constant 0 : i32
    return %c0_i32, %c0_i32_0, %c0_i32_1 : i32, i32, i32
  }
  func.func @transform_15(%arg0: i32) -> (i32, i32) {
    %c0_i32 = arith.constant 0 : i32
    %c0_i32_0 = arith.constant 0 : i32
    %c0_i32_1 = arith.constant 0 : i32
    return %c0_i32, %c0_i32_0 : i32, i32
  }
  func.func @transform_16(%arg0: i32) -> (i32, i32) {
    %c0_i32 = arith.constant 0 : i32
    %c0_i32_0 = arith.constant 0 : i32
    %c0_i32_1 = arith.constant 0 : i32
    return %c0_i32, %c0_i32_0 : i32, i32
  }
  func.func @transform_17(%arg0: i32) -> (i32, i32) {
    %c0_i32 = arith.constant 0 : i32
    %c0_i32_0 = arith.constant 0 : i32
    %c0_i32_1 = arith.constant 0 : i32
    return %c0_i32, %c0_i32_0 : i32, i32
  }
  func.func @transform_18(%arg0: i32) -> (i32, i32) {
    %c0_i32 = arith.constant 0 : i32
    %c0_i32_0 = arith.constant 0 : i32
    %c0_i32_1 = arith.constant 0 : i32
    return %c0_i32, %c0_i32_0 : i32, i32
  }
  func.func @transform_19(%arg0: i32) -> (i32, i32, i32) {
    %c0_i32 = arith.constant 0 : i32
    %c0_i32_0 = arith.constant 0 : i32
    %c0_i32_1 = arith.constant 0 : i32
    return %arg0, %c0_i32, %c0_i32_0 : i32, i32, i32
  }
}

</mosaic_0001>

<llo_original>
// kernel: vit_base16_forward.1
$region0: #{vit_base16_forward.1}
  #allocation0 [shape = 'u32[]', space=smem, size = 0x4, offset = 0x4, fixed_abs, tag = 'smem constant byte address 0x4 - core index']
  #allocation1 [shape = 'u32[72,128]{1,0:T(1,128)}', space=vmem, size = 0x9000, scoped, tag = 'internal scratch']
  %s0 = inlined_call_operand.vmem [shape: bf16[2,8,3072], index: 0, kind: input, shape index: {}]
  %s1 = inlined_call_operand.vmem [shape: bf16[3072,128], index: 1, kind: input, shape index: {}]
  %s2 = inlined_call_operand.vmem [shape: f32[8,128], index: 2, kind: input, shape index: {}]
  %s3 = inlined_call_operand.vmem [shape: f32[2,1,128], index: 3, kind: input, shape index: {}]
  %s4 = inlined_call_operand.vmem [shape: f32[2,1,128], index: 4, kind: input, shape index: {}]
  %s5 = inlined_call_operand.hbm [shape: bf16[2,128,384], index: 5, kind: input, shape index: {}]
  %s6 = inlined_call_operand.vmem [shape: f32[2,1,384], index: 6, kind: input, shape index: {}]
  %s7 = inlined_call_operand.vmem [shape: bf16[2,128,128], index: 7, kind: input, shape index: {}]
  %s8 = inlined_call_operand.vmem [shape: f32[2,1,128], index: 8, kind: input, shape index: {}]
  %s9 = inlined_call_operand.vmem [shape: f32[2,1,128], index: 9, kind: input, shape index: {}]
  %s10 = inlined_call_operand.vmem [shape: f32[2,1,128], index: 10, kind: input, shape index: {}]
  %s11 = inlined_call_operand.vmem [shape: bf16[2,128,512], index: 11, kind: input, shape index: {}]
  %s12 = inlined_call_operand.vmem [shape: f32[2,1,512], index: 12, kind: input, shape index: {}]
  %s13 = inlined_call_operand.vmem [shape: bf16[2,512,128], index: 13, kind: input, shape index: {}]
  %s14 = inlined_call_operand.vmem [shape: f32[2,1,128], index: 14, kind: input, shape index: {}]
  %s15 = inlined_call_operand.vmem [shape: f32[1,128], index: 15, kind: input, shape index: {}]
  %s16 = inlined_call_operand.vmem [shape: f32[1,128], index: 16, kind: input, shape index: {}]
  %s17 = inlined_call_operand.vmem [shape: bf16[128,4], index: 17, kind: input, shape index: {}]
  %s18 = inlined_call_operand.vmem [shape: f32[1,4], index: 18, kind: input, shape index: {}]
  %s19 = inlined_call_operand.hbm [shape: f32[2,1,4], index: 19, kind: output, shape index: {}]
  %s20 = sld [smem:[#allocation0]]
  $region113: #{vit_base16_forward.1} parent=0
    _
  %s22 = ssub.s32 1, %s20
  %s23 = scalar_select 0, %s22, %s20
  $region1: #{vit_base16_forward.1} parent=0
    #allocation2 [shape = 'u8[196608]{0}', space=vmem, size = 0x30000, scoped, tag = 'input window, operand 5, single buffered']
    #allocation3 [shape = 's32[2]{0}', space=sflag, size = 0x8, scoped, tag = 'scoped memory for vit_base16_forward.1']
    #allocation4 [shape = 's32[2]{0}', space=sflag, size = 0x8, scoped, tag = 'scoped memory for vit_base16_forward.1']
    #allocation5 [shape = 'u8[1024]{0}', space=vmem, size = 0x400, scoped, tag = 'output window, operand 0']
    %24 = vsyncpa [#allocation3], 0
    %25 = vsyncpa [#allocation4], 0
    %s26 = scalar_lea.sflag [#allocation4], 1
    %27 = vsyncpa %s26, 0
    loop: start=0, step=1, limit=4
    $region2: #{vit_base16_forward.1} parent=1 // loop_pre_header
      _
    $region3: #{vit_base16_forward.1} parent=1 // loop_header
      %s29 = sphi 0, %s33
      %p30 = scmp.ge.s32.totalorder %s29, 4
      %s39 = sphi 0, %s41
      %s42 = sphi 0, %s39
      %s43 = sphi 0, %s42
      %s59 = sphi 0, %s43
      %s63 = sphi 0, %s63
      %s65 = sphi 0, %s63
      %s66 = sphi 0, %s65
      %s80 = sphi 0, %s66
      %s84 = sphi 0, %s84
      %s86 = sphi 0, %s84
      %s87 = sphi 0, %s86
      %s101 = sphi 0, %s87
      %s105 = sphi 0, %s105
      %s107 = sphi 0, %s105
      %s108 = sphi 0, %s107
      %s122 = sphi 0, %s108
      %s126 = sphi 0, %s126
      %s128 = sphi 0, %s126
      %s129 = sphi 0, %s128
      %s143 = sphi 0, %s129
      %s147 = sphi 0, %s147
      %s149 = sphi 0, %s147
      %s150 = sphi 0, %s149
      %s164 = sphi 0, %s150
      %s168 = sphi 0, %s168
      %s170 = sphi 0, %s168
      %s171 = sphi 0, %s170
      %s185 = sphi 0, %s171
      %s189 = sphi 0, %s189
      %s191 = sphi 0, %s189
      %s192 = sphi 0, %s191
      %s206 = sphi 0, %s192
      %s210 = sphi 0, %s210
      %s212 = sphi 0, %s210
      %s213 = sphi 0, %s212
      %s227 = sphi 0, %s213
      %s231 = sphi 0, %s231
      %s233 = sphi 0, %s231
      %s234 = sphi 0, %s233
      %s248 = sphi 0, %s234
      %s252 = sphi 0, %s252
      %s254 = sphi 0, %s252
      %s255 = sphi 0, %s254
      %s269 = sphi 0, %s255
      %s273 = sphi 0, %s273
      %s275 = sphi 0, %s273
      %s276 = sphi 0, %s275
      %s290 = sphi 0, %s276
      %s294 = sphi 0, %s294
      %s296 = sphi 0, %s294
      %s297 = sphi 0, %s296
      %s311 = sphi 0, %s297
      %s315 = sphi 0, %s315
      %s317 = sphi 0, %s315
      %s318 = sphi 0, %s317
      %s332 = sphi 0, %s318
      %s336 = sphi 0, %s336
      %s338 = sphi 0, %s336
      %s339 = sphi 0, %s338
      %s353 = sphi 0, %s339
      %s357 = sphi 0, %s357
      %s359 = sphi 0, %s357
      %s360 = sphi 0, %s359
      %s374 = sphi 0, %s360
      %s378 = sphi 0, %s378
      %s380 = sphi 0, %s378
      %s381 = sphi 0, %s380
      %s395 = sphi 0, %s381
      %s399 = sphi 0, %s399
      %s401 = sphi 0, %s399
      %s402 = sphi 0, %s401
      %s416 = sphi 0, %s402
      %s420 = sphi 0, %s420
      %s422 = sphi 0, %s420
      %s423 = sphi 0, %s422
      %s437 = sphi 0, %s423
      %s443 = sphi 0, %s445
      %s446 = sphi 0, %s443
      %s447 = sphi 0, %s446
      %s463 = sphi 0, %s447
    $region4: #{vit_base16_forward.1} parent=1 // loop_header_branch
      %32 = sbr.rel (%p30) target = $region8
    $region5: #{vit_base16_forward.1} parent=1 // loop_body
      %s34 = ssub.s32 %s29, 1
      %s35 = ssub.s32 %s29, 2
      %s36 = sadd.s32 %s29, 1
      %s37 = ssub.s32 %s29, %s36
      %p38 = scmp.eq.s32.totalorder %s37, 0
      %s40 = sadd.s32 %s39, 1
      %s41 = scalar_select %p38, %s39, %s40
      %p44 = pneg %p38
      %p45 = scmp.eq.s32.totalorder %s29, 1
      %p46 = por %p44, %p45
      %p47 = scmp.ne.s32.totalorder %s39, %s42
      %p48 = scmp.eq.s32.totalorder %s29, 0
      %p49 = por %p47, %p48
      %p50 = scmp.ne.s32.totalorder %s39, %s42
      %p51 = scmp.eq.s32.totalorder %s34, 1
      %p52 = por %p50, %p51
      %p53 = scmp.ne.s32.totalorder %s42, %s43
      %p54 = scmp.eq.s32.totalorder %s34, 0
      %p55 = por %p53, %p54
      %p56 = scmp.ne.s32.totalorder %s42, %s43
      %p57 = scmp.eq.s32.totalorder %s35, 1
      %p58 = por %p56, %p57
      %p60 = scmp.ne.s32.totalorder %s43, %s59
      %p61 = scmp.eq.s32.totalorder %s35, 0
      %p62 = por %p60, %p61
      %s64 = sadd.s32 %s63, 1
      %p67 = scmp.eq.s32.totalorder %s29, 1
      %p68 = scmp.ne.s32.totalorder %s63, %s65
      %p69 = scmp.eq.s32.totalorder %s29, 0
      %p70 = por %p68, %p69
      %p71 = scmp.ne.s32.totalorder %s63, %s65
      %p72 = scmp.eq.s32.totalorder %s34, 1
      %p73 = por %p71, %p72
      %p74 = scmp.ne.s32.totalorder %s65, %s66
      %p75 = scmp.eq.s32.totalorder %s34, 0
      %p76 = por %p74, %p75
      %p77 = scmp.ne.s32.totalorder %s65, %s66
      %p78 = scmp.eq.s32.totalorder %s35, 1
      %p79 = por %p77, %p78
      %p81 = scmp.ne.s32.totalorder %s66, %s80
      %p82 = scmp.eq.s32.totalorder %s35, 0
      %p83 = por %p81, %p82
      %s85 = sadd.s32 %s84, 1
      %p88 = scmp.eq.s32.totalorder %s29, 1
      %p89 = scmp.ne.s32.totalorder %s84, %s86
      %p90 = scmp.eq.s32.totalorder %s29, 0
      %p91 = por %p89, %p90
      %p92 = scmp.ne.s32.totalorder %s84, %s86
      %p93 = scmp.eq.s32.totalorder %s34, 1
      %p94 = por %p92, %p93
      %p95 = scmp.ne.s32.totalorder %s86, %s87
      %p96 = scmp.eq.s32.totalorder %s34, 0
      %p97 = por %p95, %p96
      %p98 = scmp.ne.s32.totalorder %s86, %s87
      %p99 = scmp.eq.s32.totalorder %s35, 1
      %p100 = por %p98, %p99
      %p102 = scmp.ne.s32.totalorder %s87, %s101
      %p103 = scmp.eq.s32.totalorder %s35, 0
      %p104 = por %p102, %p103
      %s106 = sadd.s32 %s105, 1
      %p109 = scmp.eq.s32.totalorder %s29, 1
      %p110 = scmp.ne.s32.totalorder %s105, %s107
      %p111 = scmp.eq.s32.totalorder %s29, 0
      %p112 = por %p110, %p111
      %p113 = scmp.ne.s32.totalorder %s105, %s107
      %p114 = scmp.eq.s32.totalorder %s34, 1
      %p115 = por %p113, %p114
      %p116 = scmp.ne.s32.totalorder %s107, %s108
      %p117 = scmp.eq.s32.totalorder %s34, 0
      %p118 = por %p116, %p117
      %p119 = scmp.ne.s32.totalorder %s107, %s108
      %p120 = scmp.eq.s32.totalorder %s35, 1
      %p121 = por %p119, %p120
      %p123 = scmp.ne.s32.totalorder %s108, %s122
      %p124 = scmp.eq.s32.totalorder %s35, 0
      %p125 = por %p123, %p124
      %s127 = sadd.s32 %s126, 1
      %p130 = scmp.eq.s32.totalorder %s29, 1
      %p131 = scmp.ne.s32.totalorder %s126, %s128
      %p132 = scmp.eq.s32.totalorder %s29, 0
      %p133 = por %p131, %p132
      %p134 = scmp.ne.s32.totalorder %s126, %s128
      %p135 = scmp.eq.s32.totalorder %s34, 1
      %p136 = por %p134, %p135
      %p137 = scmp.ne.s32.totalorder %s128, %s129
      %p138 = scmp.eq.s32.totalorder %s34, 0
      %p139 = por %p137, %p138
      %p140 = scmp.ne.s32.totalorder %s128, %s129
      %p141 = scmp.eq.s32.totalorder %s35, 1
      %p142 = por %p140, %p141
      %p144 = scmp.ne.s32.totalorder %s129, %s143
      %p145 = scmp.eq.s32.totalorder %s35, 0
      %p146 = por %p144, %p145
      %s148 = sadd.s32 %s147, 1
      %p151 = scmp.eq.s32.totalorder %s29, 1
      %p152 = scmp.ne.s32.totalorder %s147, %s149
      %p153 = scmp.eq.s32.totalorder %s29, 0
      %p154 = por %p152, %p153
      %p155 = scmp.ne.s32.totalorder %s147, %s149
      %p156 = scmp.eq.s32.totalorder %s34, 1
      %p157 = por %p155, %p156
      %p158 = scmp.ne.s32.totalorder %s149, %s150
      %p159 = scmp.eq.s32.totalorder %s34, 0
      %p160 = por %p158, %p159
      %p161 = scmp.ne.s32.totalorder %s149, %s150
      %p162 = scmp.eq.s32.totalorder %s35, 1
      %p163 = por %p161, %p162
      %p165 = scmp.ne.s32.totalorder %s150, %s164
      %p166 = scmp.eq.s32.totalorder %s35, 0
      %p167 = por %p165, %p166
      %s169 = sadd.s32 %s168, 1
      %p172 = scmp.eq.s32.totalorder %s29, 1
      %p173 = scmp.ne.s32.totalorder %s168, %s170
      %p174 = scmp.eq.s32.totalorder %s29, 0
      %p175 = por %p173, %p174
      %p176 = scmp.ne.s32.totalorder %s168, %s170
      %p177 = scmp.eq.s32.totalorder %s34, 1
      %p178 = por %p176, %p177
      %p179 = scmp.ne.s32.totalorder %s170, %s171
      %p180 = scmp.eq.s32.totalorder %s34, 0
      %p181 = por %p179, %p180
      %p182 = scmp.ne.s32.totalorder %s170, %s171
      %p183 = scmp.eq.s32.totalorder %s35, 1
      %p184 = por %p182, %p183
      %p186 = scmp.ne.s32.totalorder %s171, %s185
      %p187 = scmp.eq.s32.totalorder %s35, 0
      %p188 = por %p186, %p187
      %s190 = sadd.s32 %s189, 1
      %p193 = scmp.eq.s32.totalorder %s29, 1
      %p194 = scmp.ne.s32.totalorder %s189, %s191
      %p195 = scmp.eq.s32.totalorder %s29, 0
      %p196 = por %p194, %p195
      %p197 = scmp.ne.s32.totalorder %s189, %s191
      %p198 = scmp.eq.s32.totalorder %s34, 1
      %p199 = por %p197, %p198
      %p200 = scmp.ne.s32.totalorder %s191, %s192
      %p201 = scmp.eq.s32.totalorder %s34, 0
      %p202 = por %p200, %p201
      %p203 = scmp.ne.s32.totalorder %s191, %s192
      %p204 = scmp.eq.s32.totalorder %s35, 1
      %p205 = por %p203, %p204
      %p207 = scmp.ne.s32.totalorder %s192, %s206
      %p208 = scmp.eq.s32.totalorder %s35, 0
      %p209 = por %p207, %p208
      %s211 = sadd.s32 %s210, 1
      %p214 = scmp.eq.s32.totalorder %s29, 1
      %p215 = scmp.ne.s32.totalorder %s210, %s212
      %p216 = scmp.eq.s32.totalorder %s29, 0
      %p217 = por %p215, %p216
      %p218 = scmp.ne.s32.totalorder %s210, %s212
      %p219 = scmp.eq.s32.totalorder %s34, 1
      %p220 = por %p218, %p219
      %p221 = scmp.ne.s32.totalorder %s212, %s213
      %p222 = scmp.eq.s32.totalorder %s34, 0
      %p223 = por %p221, %p222
      %p224 = scmp.ne.s32.totalorder %s212, %s213
      %p225 = scmp.eq.s32.totalorder %s35, 1
      %p226 = por %p224, %p225
      %p228 = scmp.ne.s32.totalorder %s213, %s227
      %p229 = scmp.eq.s32.totalorder %s35, 0
      %p230 = por %p228, %p229
      %s232 = sadd.s32 %s231, 1
      %p235 = scmp.eq.s32.totalorder %s29, 1
      %p236 = scmp.ne.s32.totalorder %s231, %s233
      %p237 = scmp.eq.s32.totalorder %s29, 0
      %p238 = por %p236, %p237
      %p239 = scmp.ne.s32.totalorder %s231, %s233
      %p240 = scmp.eq.s32.totalorder %s34, 1
      %p241 = por %p239, %p240
      %p242 = scmp.ne.s32.totalorder %s233, %s234
      %p243 = scmp.eq.s32.totalorder %s34, 0
      %p244 = por %p242, %p243
      %p245 = scmp.ne.s32.totalorder %s233, %s234
      %p246 = scmp.eq.s32.totalorder %s35, 1
      %p247 = por %p245, %p246
      %p249 = scmp.ne.s32.totalorder %s234, %s248
      %p250 = scmp.eq.s32.totalorder %s35, 0
      %p251 = por %p249, %p250
      %s253 = sadd.s32 %s252, 1
      %p256 = scmp.eq.s32.totalorder %s29, 1
      %p257 = scmp.ne.s32.totalorder %s252, %s254
      %p258 = scmp.eq.s32.totalorder %s29, 0
      %p259 = por %p257, %p258
      %p260 = scmp.ne.s32.totalorder %s252, %s254
      %p261 = scmp.eq.s32.totalorder %s34, 1
      %p262 = por %p260, %p261
      %p263 = scmp.ne.s32.totalorder %s254, %s255
      %p264 = scmp.eq.s32.totalorder %s34, 0
      %p265 = por %p263, %p264
      %p266 = scmp.ne.s32.totalorder %s254, %s255
      %p267 = scmp.eq.s32.totalorder %s35, 1
      %p268 = por %p266, %p267
      %p270 = scmp.ne.s32.totalorder %s255, %s269
      %p271 = scmp.eq.s32.totalorder %s35, 0
      %p272 = por %p270, %p271
      %s274 = sadd.s32 %s273, 1
      %p277 = scmp.eq.s32.totalorder %s29, 1
      %p278 = scmp.ne.s32.totalorder %s273, %s275
      %p279 = scmp.eq.s32.totalorder %s29, 0
      %p280 = por %p278, %p279
      %p281 = scmp.ne.s32.totalorder %s273, %s275
      %p282 = scmp.eq.s32.totalorder %s34, 1
      %p283 = por %p281, %p282
      %p284 = scmp.ne.s32.totalorder %s275, %s276
      %p285 = scmp.eq.s32.totalorder %s34, 0
      %p286 = por %p284, %p285
      %p287 = scmp.ne.s32.totalorder %s275, %s276
      %p288 = scmp.eq.s32.totalorder %s35, 1
      %p289 = por %p287, %p288
      %p291 = scmp.ne.s32.totalorder %s276, %s290
      %p292 = scmp.eq.s32.totalorder %s35, 0
      %p293 = por %p291, %p292
      %s295 = sadd.s32 %s294, 1
      %p298 = scmp.eq.s32.totalorder %s29, 1
      %p299 = scmp.ne.s32.totalorder %s294, %s296
      %p300 = scmp.eq.s32.totalorder %s29, 0
      %p301 = por %p299, %p300
      %p302 = scmp.ne.s32.totalorder %s294, %s296
      %p303 = scmp.eq.s32.totalorder %s34, 1
      %p304 = por %p302, %p303
      %p305 = scmp.ne.s32.totalorder %s296, %s297
      %p306 = scmp.eq.s32.totalorder %s34, 0
      %p307 = por %p305, %p306
      %p308 = scmp.ne.s32.totalorder %s296, %s297
      %p309 = scmp.eq.s32.totalorder %s35, 1
      %p310 = por %p308, %p309
      %p312 = scmp.ne.s32.totalorder %s297, %s311
      %p313 = scmp.eq.s32.totalorder %s35, 0
      %p314 = por %p312, %p313
      %s316 = sadd.s32 %s315, 1
      %p319 = scmp.eq.s32.totalorder %s29, 1
      %p320 = scmp.ne.s32.totalorder %s315, %s317
      %p321 = scmp.eq.s32.totalorder %s29, 0
      %p322 = por %p320, %p321
      %p323 = scmp.ne.s32.totalorder %s315, %s317
      %p324 = scmp.eq.s32.totalorder %s34, 1
      %p325 = por %p323, %p324
      %p326 = scmp.ne.s32.totalorder %s317, %s318
      %p327 = scmp.eq.s32.totalorder %s34, 0
      %p328 = por %p326, %p327
      %p329 = scmp.ne.s32.totalorder %s317, %s318
      %p330 = scmp.eq.s32.totalorder %s35, 1
      %p331 = por %p329, %p330
      %p333 = scmp.ne.s32.totalorder %s318, %s332
      %p334 = scmp.eq.s32.totalorder %s35, 0
      %p335 = por %p333, %p334
      %s337 = sadd.s32 %s336, 1
      %p340 = scmp.eq.s32.totalorder %s29, 1
      %p341 = scmp.ne.s32.totalorder %s336, %s338
      %p342 = scmp.eq.s32.totalorder %s29, 0
      %p343 = por %p341, %p342
      %p344 = scmp.ne.s32.totalorder %s336, %s338
      %p345 = scmp.eq.s32.totalorder %s34, 1
      %p346 = por %p344, %p345
      %p347 = scmp.ne.s32.totalorder %s338, %s339
      %p348 = scmp.eq.s32.totalorder %s34, 0
      %p349 = por %p347, %p348
      %p350 = scmp.ne.s32.totalorder %s338, %s339
      %p351 = scmp.eq.s32.totalorder %s35, 1
      %p352 = por %p350, %p351
      %p354 = scmp.ne.s32.totalorder %s339, %s353
      %p355 = scmp.eq.s32.totalorder %s35, 0
      %p356 = por %p354, %p355
      %s358 = sadd.s32 %s357, 1
      %p361 = scmp.eq.s32.totalorder %s29, 1
      %p362 = scmp.ne.s32.totalorder %s357, %s359
      %p363 = scmp.eq.s32.totalorder %s29, 0
      %p364 = por %p362, %p363
      %p365 = scmp.ne.s32.totalorder %s357, %s359
      %p366 = scmp.eq.s32.totalorder %s34, 1
      %p367 = por %p365, %p366
      %p368 = scmp.ne.s32.totalorder %s359, %s360
      %p369 = scmp.eq.s32.totalorder %s34, 0
      %p370 = por %p368, %p369
      %p371 = scmp.ne.s32.totalorder %s359, %s360
      %p372 = scmp.eq.s32.totalorder %s35, 1
      %p373 = por %p371, %p372
      %p375 = scmp.ne.s32.totalorder %s360, %s374
      %p376 = scmp.eq.s32.totalorder %s35, 0
      %p377 = por %p375, %p376
      %s379 = sadd.s32 %s378, 1
      %p382 = scmp.eq.s32.totalorder %s29, 1
      %p383 = scmp.ne.s32.totalorder %s378, %s380
      %p384 = scmp.eq.s32.totalorder %s29, 0
      %p385 = por %p383, %p384
      %p386 = scmp.ne.s32.totalorder %s378, %s380
      %p387 = scmp.eq.s32.totalorder %s34, 1
      %p388 = por %p386, %p387
      %p389 = scmp.ne.s32.totalorder %s380, %s381
      %p390 = scmp.eq.s32.totalorder %s34, 0
      %p391 = por %p389, %p390
      %p392 = scmp.ne.s32.totalorder %s380, %s381
      %p393 = scmp.eq.s32.totalorder %s35, 1
      %p394 = por %p392, %p393
      %p396 = scmp.ne.s32.totalorder %s381, %s395
      %p397 = scmp.eq.s32.totalorder %s35, 0
      %p398 = por %p396, %p397
      %s400 = sadd.s32 %s399, 1
      %p403 = scmp.eq.s32.totalorder %s29, 1
      %p404 = scmp.ne.s32.totalorder %s399, %s401
      %p405 = scmp.eq.s32.totalorder %s29, 0
      %p406 = por %p404, %p405
      %p407 = scmp.ne.s32.totalorder %s399, %s401
      %p408 = scmp.eq.s32.totalorder %s34, 1
      %p409 = por %p407, %p408
      %p410 = scmp.ne.s32.totalorder %s401, %s402
      %p411 = scmp.eq.s32.totalorder %s34, 0
      %p412 = por %p410, %p411
      %p413 = scmp.ne.s32.totalorder %s401, %s402
      %p414 = scmp.eq.s32.totalorder %s35, 1
      %p415 = por %p413, %p414
      %p417 = scmp.ne.s32.totalorder %s402, %s416
      %p418 = scmp.eq.s32.totalorder %s35, 0
      %p419 = por %p417, %p418
      %s421 = sadd.s32 %s420, 1
      %p424 = scmp.eq.s32.totalorder %s29, 1
      %p425 = scmp.ne.s32.totalorder %s420, %s422
      %p426 = scmp.eq.s32.totalorder %s29, 0
      %p427 = por %p425, %p426
      %p428 = scmp.ne.s32.totalorder %s420, %s422
      %p429 = scmp.eq.s32.totalorder %s34, 1
      %p430 = por %p428, %p429
      %p431 = scmp.ne.s32.totalorder %s422, %s423
      %p432 = scmp.eq.s32.totalorder %s34, 0
      %p433 = por %p431, %p432
      %p434 = scmp.ne.s32.totalorder %s422, %s423
      %p435 = scmp.eq.s32.totalorder %s35, 1
      %p436 = por %p434, %p435
      %p438 = scmp.ne.s32.totalorder %s423, %s437
      %p439 = scmp.eq.s32.totalorder %s35, 0
      %p440 = por %p438, %p439
      %s441 = ssub.s32 %s29, %s36
      %p442 = scmp.eq.s32.totalorder %s441, 0
      %s444 = sadd.s32 %s443, 1
      %s445 = scalar_select %p442, %s443, %s444
      %p448 = pneg %p442
      %p449 = scmp.eq.s32.totalorder %s29, 1
      %p450 = por %p448, %p449
      %p451 = scmp.ne.s32.totalorder %s443, %s446
      %p452 = scmp.eq.s32.totalorder %s29, 0
      %p453 = por %p451, %p452
      %p454 = scmp.ne.s32.totalorder %s443, %s446
      %p455 = scmp.eq.s32.totalorder %s34, 1
      %p456 = por %p454, %p455
      %p457 = scmp.ne.s32.totalorder %s446, %s447
      %p458 = scmp.eq.s32.totalorder %s34, 0
      %p459 = por %p457, %p458
      %p460 = scmp.ne.s32.totalorder %s446, %s447
      %p461 = scmp.eq.s32.totalorder %s35, 1
      %p462 = por %p460, %p461
      %p464 = scmp.ne.s32.totalorder %s447, %s463
      %p465 = scmp.eq.s32.totalorder %s35, 0
      %p466 = por %p464, %p465
      %p467 = scmp.le.s32.totalorder 1, %s29
      %p468 = scmp.lt.s32.totalorder %s29, 3
      %p469 = pnand %p467, %p468
      %p470 = pneg %p469
      // Predicated region
      $region9: #{vit_base16_forward.1} parent=5 // pred_check
        _
      $region10: #{vit_base16_forward.1} parent=5 // pred_check_branch
        %472 = sbr.rel (%p469) target = $region12
      $region11: #{vit_base16_forward.1} parent=5 // pred_region
        %s473 = ssub.s32 %s29, 1
        // Predicated region
        $region13: #{vit_base16_forward.1} parent=11 // pred_check
          %p474 = pneg %p76
        $region14: #{vit_base16_forward.1} parent=11 // pred_check_branch
          %476 = sbr.rel (%p474) target = $region16
        $region15: #{vit_base16_forward.1} parent=11 // pred_region
          _
        $region16: #{vit_base16_forward.1} parent=11 // pred_fallthru
          _
        // Predicated region
        $region17: #{vit_base16_forward.1} parent=11 // pred_check
          %p477 = pneg %p97
        $region18: #{vit_base16_forward.1} parent=11 // pred_check_branch
          %479 = sbr.rel (%p477) target = $region20
        $region19: #{vit_base16_forward.1} parent=11 // pred_region
          _
        $region20: #{vit_base16_forward.1} parent=11 // pred_fallthru
          _
        // Predicated region
        $region21: #{vit_base16_forward.1} parent=11 // pred_check
          %p480 = pneg %p118
        $region22: #{vit_base16_forward.1} parent=11 // pred_check_branch
          %482 = sbr.rel (%p480) target = $region24
        $region23: #{vit_base16_forward.1} parent=11 // pred_region
          _
        $region24: #{vit_base16_forward.1} parent=11 // pred_fallthru
          _
        // Predicated region
        $region25: #{vit_base16_forward.1} parent=11 // pred_check
          %p483 = pneg %p139
        $region26: #{vit_base16_forward.1} parent=11 // pred_check_branch
          %485 = sbr.rel (%p483) target = $region28
        $region27: #{vit_base16_forward.1} parent=11 // pred_region
          _
        $region28: #{vit_base16_forward.1} parent=11 // pred_fallthru
          _
        // Predicated region
        $region29: #{vit_base16_forward.1} parent=11 // pred_check
          %p486 = pneg %p160
        $region30: #{vit_base16_forward.1} parent=11 // pred_check_branch
          %488 = sbr.rel (%p486) target = $region32
        $region31: #{vit_base16_forward.1} parent=11 // pred_region
          %490 = vsyncadd [#allocation3], 0
          %s491 = sshll.u32 %s5, 4
          %s492 = int_to_ptr.hbm [resolvable:$true] %s491
          %s493 = sshll.u32 [#allocation2], 4
          %s494 = int_to_ptr.vmem [resolvable:$true] %s493
          %499 = dma.hbm_to_vmem [thread:$0]  %s492, 6144, %s494, [#allocation3], 192, 192, 12
        $region32: #{vit_base16_forward.1} parent=11 // pred_fallthru
          _
        // Predicated region
        $region33: #{vit_base16_forward.1} parent=11 // pred_check
          %p500 = pneg %p181
        $region34: #{vit_base16_forward.1} parent=11 // pred_check_branch
          %502 = sbr.rel (%p500) target = $region36
        $region35: #{vit_base16_forward.1} parent=11 // pred_region
          _
        $region36: #{vit_base16_forward.1} parent=11 // pred_fallthru
          _
        // Predicated region
        $region37: #{vit_base16_forward.1} parent=11 // pred_check
          %p503 = pneg %p202
        $region38: #{vit_base16_forward.1} parent=11 // pred_check_branch
          %505 = sbr.rel (%p503) target = $region40
        $region39: #{vit_base16_forward.1} parent=11 // pred_region
          _
        $region40: #{vit_base16_forward.1} parent=11 // pred_fallthru
          _
        // Predicated region
        $region41: #{vit_base16_forward.1} parent=11 // pred_check
          %p506 = pneg %p223
        $region42: #{vit_base16_forward.1} parent=11 // pred_check_branch
          %508 = sbr.rel (%p506) target = $region44
        $region43: #{vit_base16_forward.1} parent=11 // pred_region
          _
        $region44: #{vit_base16_forward.1} parent=11 // pred_fallthru
          _
        // Predicated region
        $region45: #{vit_base16_forward.1} parent=11 // pred_check
          %p509 = pneg %p244
        $region46: #{vit_base16_forward.1} parent=11 // pred_check_branch
          %511 = sbr.rel (%p509) target = $region48
        $region47: #{vit_base16_forward.1} parent=11 // pred_region
          _
        $region48: #{vit_base16_forward.1} parent=11 // pred_fallthru
          _
        // Predicated region
        $region49: #{vit_base16_forward.1} parent=11 // pred_check
          %p512 = pneg %p265
        $region50: #{vit_base16_forward.1} parent=11 // pred_check_branch
          %514 = sbr.rel (%p512) target = $region52
        $region51: #{vit_base16_forward.1} parent=11 // pred_region
          _
        $region52: #{vit_base16_forward.1} parent=11 // pred_fallthru
          _
        // Predicated region
        $region53: #{vit_base16_forward.1} parent=11 // pred_check
          %p515 = pneg %p286
        $region54: #{vit_base16_forward.1} parent=11 // pred_check_branch
          %517 = sbr.rel (%p515) target = $region56
        $region55: #{vit_base16_forward.1} parent=11 // pred_region
          _
        $region56: #{vit_base16_forward.1} parent=11 // pred_fallthru
          _
        // Predicated region
        $region57: #{vit_base16_forward.1} parent=11 // pred_check
          %p518 = pneg %p307
        $region58: #{vit_base16_forward.1} parent=11 // pred_check_branch
          %520 = sbr.rel (%p518) target = $region60
        $region59: #{vit_base16_forward.1} parent=11 // pred_region
          _
        $region60: #{vit_base16_forward.1} parent=11 // pred_fallthru
          _
        // Predicated region
        $region61: #{vit_base16_forward.1} parent=11 // pred_check
          %p521 = pneg %p328
        $region62: #{vit_base16_forward.1} parent=11 // pred_check_branch
          %523 = sbr.rel (%p521) target = $region64
        $region63: #{vit_base16_forward.1} parent=11 // pred_region
          _
        $region64: #{vit_base16_forward.1} parent=11 // pred_fallthru
          _
        // Predicated region
        $region65: #{vit_base16_forward.1} parent=11 // pred_check
          %p524 = pneg %p349
        $region66: #{vit_base16_forward.1} parent=11 // pred_check_branch
          %526 = sbr.rel (%p524) target = $region68
        $region67: #{vit_base16_forward.1} parent=11 // pred_region
          _
        $region68: #{vit_base16_forward.1} parent=11 // pred_fallthru
          _
        // Predicated region
        $region69: #{vit_base16_forward.1} parent=11 // pred_check
          %p527 = pneg %p370
        $region70: #{vit_base16_forward.1} parent=11 // pred_check_branch
          %529 = sbr.rel (%p527) target = $region72
        $region71: #{vit_base16_forward.1} parent=11 // pred_region
          _
        $region72: #{vit_base16_forward.1} parent=11 // pred_fallthru
          _
        // Predicated region
        $region73: #{vit_base16_forward.1} parent=11 // pred_check
          %p530 = pneg %p391
        $region74: #{vit_base16_forward.1} parent=11 // pred_check_branch
          %532 = sbr.rel (%p530) target = $region76
        $region75: #{vit_base16_forward.1} parent=11 // pred_region
          _
        $region76: #{vit_base16_forward.1} parent=11 // pred_fallthru
          _
        // Predicated region
        $region77: #{vit_base16_forward.1} parent=11 // pred_check
          %p533 = pneg %p412
        $region78: #{vit_base16_forward.1} parent=11 // pred_check_branch
          %535 = sbr.rel (%p533) target = $region80
        $region79: #{vit_base16_forward.1} parent=11 // pred_region
          _
        $region80: #{vit_base16_forward.1} parent=11 // pred_fallthru
          _
        // Predicated region
        $region81: #{vit_base16_forward.1} parent=11 // pred_check
          %p536 = pneg %p433
        $region82: #{vit_base16_forward.1} parent=11 // pred_check_branch
          %538 = sbr.rel (%p536) target = $region84
        $region83: #{vit_base16_forward.1} parent=11 // pred_region
          _
        $region84: #{vit_base16_forward.1} parent=11 // pred_fallthru
          _
      $region12: #{vit_base16_forward.1} parent=5 // pred_fallthru
        _
      %p539 = scmp.lt.s32.totalorder %s29, 2
      // Predicated region
      $region85: #{vit_base16_forward.1} parent=5 // pred_check
        %p540 = pneg %p539
      $region86: #{vit_base16_forward.1} parent=5 // pred_check_branch
        %542 = sbr.rel (%p540) target = $region88
      $region87: #{vit_base16_forward.1} parent=5 // pred_region
        // Predicated region
        $region89: #{vit_base16_forward.1} parent=87 // pred_check
          %p543 = pneg %p49
        $region90: #{vit_base16_forward.1} parent=87 // pred_check_branch
          %545 = sbr.rel (%p543) target = $region92
        $region91: #{vit_base16_forward.1} parent=87 // pred_region
          %p546 = scmp.lt.s32.totalorder %s29, 1
          %s547 = scalar_select %p546, %s29, 1
          %s548 = smul.addr %s547, 24
          %s549 = smul.addr %s548, 4
          %s550 = scalar_lea.vmem %s0, %s549
        $region92: #{vit_base16_forward.1} parent=87 // pred_fallthru
          _
      $region88: #{vit_base16_forward.1} parent=5 // pred_fallthru
        _
      %p551 = scmp.le.s32.totalorder 1, %s29
      %p552 = scmp.lt.s32.totalorder %s29, 3
      %p553 = pnand %p551, %p552
      %p554 = pneg %p553
      // Predicated region
      $region93: #{vit_base16_forward.1} parent=5 // pred_check
        _
      $region94: #{vit_base16_forward.1} parent=5 // pred_check_branch
        %556 = sbr.rel (%p553) target = $region96
      $region95: #{vit_base16_forward.1} parent=5 // pred_region
        %s557 = ssub.s32 %s29, 1
        // Predicated region
        $region97: #{vit_base16_forward.1} parent=95 // pred_check
          %p558 = pneg %p160
        $region98: #{vit_base16_forward.1} parent=95 // pred_check_branch
          %560 = sbr.rel (%p558) target = $region100
        $region99: #{vit_base16_forward.1} parent=95 // pred_region
          %562 = dma.done [#allocation3], 6144
        $region100: #{vit_base16_forward.1} parent=95 // pred_fallthru
          _
        %p563 = scmp.lt.s32.totalorder %s34, 1
        %s564 = scalar_select %p563, %s34, 1
        %s565 = smul.addr %s564, 24
        %s566 = smul.addr %s565, 4
        %s567 = scalar_lea.vmem %s0, %s566
        %p568 = pneg %p55
        %p569 = pneg %p52
        %p570 = pneg %p76
        %p571 = pneg %p73
        %p572 = pneg %p97
        %p573 = pneg %p94
        %p574 = pneg %p118
        %p575 = pneg %p115
        %p576 = pneg %p139
        %p577 = pneg %p136
        %p578 = pneg %p160
        %p579 = pneg %p157
        %p580 = pneg %p181
        %p581 = pneg %p178
        %p582 = pneg %p202
        %p583 = pneg %p199
        %p584 = pneg %p223
        %p585 = pneg %p220
        %p586 = pneg %p244
        %p587 = pneg %p241
        %p588 = pneg %p265
        %p589 = pneg %p262
        %p590 = pneg %p286
        %p591 = pneg %p283
        %p592 = pneg %p307
        %p593 = pneg %p304
        %p594 = pneg %p328
        %p595 = pneg %p325
        %p596 = pneg %p349
        %p597 = pneg %p346
        %p598 = pneg %p370
        %p599 = pneg %p367
        %p600 = pneg %p391
        %p601 = pneg %p388
        %p602 = pneg %p412
        %p603 = pneg %p409
        %p604 = pneg %p433
        %p605 = pneg %p430
        %p606 = pneg %p459
        %p607 = pneg %p456
        %s608 = sand.u32 %s446, 1
        %s609 = scalar_lea.sflag [#allocation4], %s608
        %s610 = sand.u32 %s446, 1
        %s611 = scalar_lea.vmem [#allocation5], %s610
        %p612 = scmp.lt.s32.totalorder %s34, 1
        %s613 = scalar_select %p612, %s34, 1
        %s614 = smul.addr %s613, 24
        %s615 = smul.addr %s614, 4
        %s616 = scalar_lea.vmem %s0, %s615
        %v618 = vld [vmem:[%s616] sm:$0xff]
        %v619 = vld [vmem:[%s616 + $0x8] sm:$0xff]
        %v620 = vld [vmem:[%s616 + $0x10] sm:$0xff]
        %v621 = vld [vmem:[%s616 + $0x18] sm:$0xff]
        %v622 = vld [vmem:[%s616 + $0x20] sm:$0xff]
        %v623 = vld [vmem:[%s616 + $0x28] sm:$0xff]
        %v624 = vld [vmem:[%s616 + $0x30] sm:$0xff]
        %v625 = vld [vmem:[%s616 + $0x38] sm:$0xff]
        %v626 = vld [vmem:[%s616 + $0x40] sm:$0xff]
        %v627 = vld [vmem:[%s616 + $0x48] sm:$0xff]
        %v628 = vld [vmem:[%s616 + $0x50] sm:$0xff]
        %v629 = vld [vmem:[%s616 + $0x58] sm:$0xff]
        %v630 = vld [vmem:[%s1] sm:$0xf]
        %v631 = vld [vmem:[%s1 + $0x4] sm:$0xf]
        %v632 = vld [vmem:[%s1 + $0x8] sm:$0xf]
        %v633 = vld [vmem:[%s1 + $0xc] sm:$0xf]
        %v634 = vld [vmem:[%s1 + $0x10] sm:$0xf]
        %v635 = vld [vmem:[%s1 + $0x14] sm:$0xf]
        %v636 = vld [vmem:[%s1 + $0x18] sm:$0xf]
        %v637 = vld [vmem:[%s1 + $0x1c] sm:$0xf]
        %v638 = vld [vmem:[%s1 + $0x20] sm:$0xf]
        %v639 = vld [vmem:[%s1 + $0x24] sm:$0xf]
        %v640 = vld [vmem:[%s1 + $0x28] sm:$0xf]
        %v641 = vld [vmem:[%s1 + $0x2c] sm:$0xf]
        %v642 = vld [vmem:[%s1 + $0x30] sm:$0xf]
        %v643 = vld [vmem:[%s1 + $0x34] sm:$0xf]
        %v644 = vld [vmem:[%s1 + $0x38] sm:$0xf]
        %v645 = vld [vmem:[%s1 + $0x3c] sm:$0xf]
        %v646 = vld [vmem:[%s1 + $0x40] sm:$0xf]
        %v647 = vld [vmem:[%s1 + $0x44] sm:$0xf]
        %v648 = vld [vmem:[%s1 + $0x48] sm:$0xf]
        %v649 = vld [vmem:[%s1 + $0x4c] sm:$0xf]
        %v650 = vld [vmem:[%s1 + $0x50] sm:$0xf]
        %v651 = vld [vmem:[%s1 + $0x54] sm:$0xf]
        %v652 = vld [vmem:[%s1 + $0x58] sm:$0xf]
        %v653 = vld [vmem:[%s1 + $0x5c] sm:$0xf]
        %v654 = vld [vmem:[%s1 + $0x60] sm:$0xf]
        %v655 = vld [vmem:[%s1 + $0x64] sm:$0xf]
        %v656 = vld [vmem:[%s1 + $0x68] sm:$0xf]
        %v657 = vld [vmem:[%s1 + $0x6c] sm:$0xf]
        %v658 = vld [vmem:[%s1 + $0x70] sm:$0xf]
        %v659 = vld [vmem:[%s1 + $0x74] sm:$0xf]
        %v660 = vld [vmem:[%s1 + $0x78] sm:$0xf]
        %v661 = vld [vmem:[%s1 + $0x7c] sm:$0xf]
        %v662 = vld [vmem:[%s1 + $0x80] sm:$0xf]
        %v663 = vld [vmem:[%s1 + $0x84] sm:$0xf]
        %v664 = vld [vmem:[%s1 + $0x88] sm:$0xf]
        %v665 = vld [vmem:[%s1 + $0x8c] sm:$0xf]
        %v666 = vld [vmem:[%s1 + $0x90] sm:$0xf]
        %v667 = vld [vmem:[%s1 + $0x94] sm:$0xf]
        %v668 = vld [vmem:[%s1 + $0x98] sm:$0xf]
        %v669 = vld [vmem:[%s1 + $0x9c] sm:$0xf]
        %v670 = vld [vmem:[%s1 + $0xa0] sm:$0xf]
        %v671 = vld [vmem:[%s1 + $0xa4] sm:$0xf]
        %v672 = vld [vmem:[%s1 + $0xa8] sm:$0xf]
        %v673 = vld [vmem:[%s1 + $0xac] sm:$0xf]
        %v674 = vld [vmem:[%s1 + $0xb0] sm:$0xf]
        %v675 = vld [vmem:[%s1 + $0xb4] sm:$0xf]
        %v676 = vld [vmem:[%s1 + $0xb8] sm:$0xf]
        %v677 = vld [vmem:[%s1 + $0xbc] sm:$0xf]
        %v678 = vld [vmem:[%s1 + $0xc0] sm:$0xf]
        %v679 = vld [vmem:[%s1 + $0xc4] sm:$0xf]
        %v680 = vld [vmem:[%s1 + $0xc8] sm:$0xf]
        %v681 = vld [vmem:[%s1 + $0xcc] sm:$0xf]
        %v682 = vld [vmem:[%s1 + $0xd0] sm:$0xf]
        %v683 = vld [vmem:[%s1 + $0xd4] sm:$0xf]
        %v684 = vld [vmem:[%s1 + $0xd8] sm:$0xf]
        %v685 = vld [vmem:[%s1 + $0xdc] sm:$0xf]
        %v686 = vld [vmem:[%s1 + $0xe0] sm:$0xf]
        %v687 = vld [vmem:[%s1 + $0xe4] sm:$0xf]
        %v688 = vld [vmem:[%s1 + $0xe8] sm:$0xf]
        %v689 = vld [vmem:[%s1 + $0xec] sm:$0xf]
        %v690 = vld [vmem:[%s1 + $0xf0] sm:$0xf]
        %v691 = vld [vmem:[%s1 + $0xf4] sm:$0xf]
        %v692 = vld [vmem:[%s1 + $0xf8] sm:$0xf]
        %v693 = vld [vmem:[%s1 + $0xfc] sm:$0xf]
        %v694 = vld [vmem:[%s1 + $0x100] sm:$0xf]
        %v695 = vld [vmem:[%s1 + $0x104] sm:$0xf]
        %v696 = vld [vmem:[%s1 + $0x108] sm:$0xf]
        %v697 = vld [vmem:[%s1 + $0x10c] sm:$0xf]
        %v698 = vld [vmem:[%s1 + $0x110] sm:$0xf]
        %v699 = vld [vmem:[%s1 + $0x114] sm:$0xf]
        %v700 = vld [vmem:[%s1 + $0x118] sm:$0xf]
        %v701 = vld [vmem:[%s1 + $0x11c] sm:$0xf]
        %v702 = vld [vmem:[%s1 + $0x120] sm:$0xf]
        %v703 = vld [vmem:[%s1 + $0x124] sm:$0xf]
        %v704 = vld [vmem:[%s1 + $0x128] sm:$0xf]
        %v705 = vld [vmem:[%s1 + $0x12c] sm:$0xf]
        %v706 = vld [vmem:[%s1 + $0x130] sm:$0xf]
        %v707 = vld [vmem:[%s1 + $0x134] sm:$0xf]
        %v708 = vld [vmem:[%s1 + $0x138] sm:$0xf]
        %v709 = vld [vmem:[%s1 + $0x13c] sm:$0xf]
        %v710 = vld [vmem:[%s1 + $0x140] sm:$0xf]
        %v711 = vld [vmem:[%s1 + $0x144] sm:$0xf]
        %v712 = vld [vmem:[%s1 + $0x148] sm:$0xf]
        %v713 = vld [vmem:[%s1 + $0x14c] sm:$0xf]
        %v714 = vld [vmem:[%s1 + $0x150] sm:$0xf]
        %v715 = vld [vmem:[%s1 + $0x154] sm:$0xf]
        %v716 = vld [vmem:[%s1 + $0x158] sm:$0xf]
        %v717 = vld [vmem:[%s1 + $0x15c] sm:$0xf]
        %v718 = vld [vmem:[%s1 + $0x160] sm:$0xf]
        %v719 = vld [vmem:[%s1 + $0x164] sm:$0xf]
        %v720 = vld [vmem:[%s1 + $0x168] sm:$0xf]
        %v721 = vld [vmem:[%s1 + $0x16c] sm:$0xf]
        %v722 = vld [vmem:[%s1 + $0x170] sm:$0xf]
        %v723 = vld [vmem:[%s1 + $0x174] sm:$0xf]
        %v724 = vld [vmem:[%s1 + $0x178] sm:$0xf]
        %v725 = vld [vmem:[%s1 + $0x17c] sm:$0xf]
        %v726 = vld [vmem:[%s1 + $0x180] sm:$0xf]
        %v727 = vld [vmem:[%s1 + $0x184] sm:$0xf]
        %v728 = vld [vmem:[%s1 + $0x188] sm:$0xf]
        %v729 = vld [vmem:[%s1 + $0x18c] sm:$0xf]
        %v730 = vld [vmem:[%s1 + $0x190] sm:$0xf]
        %v731 = vld [vmem:[%s1 + $0x194] sm:$0xf]
        %v732 = vld [vmem:[%s1 + $0x198] sm:$0xf]
        %v733 = vld [vmem:[%s1 + $0x19c] sm:$0xf]
        %v734 = vld [vmem:[%s1 + $0x1a0] sm:$0xf]
        %v735 = vld [vmem:[%s1 + $0x1a4] sm:$0xf]
        %v736 = vld [vmem:[%s1 + $0x1a8] sm:$0xf]
        %v737 = vld [vmem:[%s1 + $0x1ac] sm:$0xf]
        %v738 = vld [vmem:[%s1 + $0x1b0] sm:$0xf]
        %v739 = vld [vmem:[%s1 + $0x1b4] sm:$0xf]
        %v740 = vld [vmem:[%s1 + $0x1b8] sm:$0xf]
        %v741 = vld [vmem:[%s1 + $0x1bc] sm:$0xf]
        %v742 = vld [vmem:[%s1 + $0x1c0] sm:$0xf]
        %v743 = vld [vmem:[%s1 + $0x1c4] sm:$0xf]
        %v744 = vld [vmem:[%s1 + $0x1c8] sm:$0xf]
        %v745 = vld [vmem:[%s1 + $0x1cc] sm:$0xf]
        %v746 = vld [vmem:[%s1 + $0x1d0] sm:$0xf]
        %v747 = vld [vmem:[%s1 + $0x1d4] sm:$0xf]
        %v748 = vld [vmem:[%s1 + $0x1d8] sm:$0xf]
        %v749 = vld [vmem:[%s1 + $0x1dc] sm:$0xf]
        %v750 = vld [vmem:[%s1 + $0x1e0] sm:$0xf]
        %v751 = vld [vmem:[%s1 + $0x1e4] sm:$0xf]
        %v752 = vld [vmem:[%s1 + $0x1e8] sm:$0xf]
        %v753 = vld [vmem:[%s1 + $0x1ec] sm:$0xf]
        %v754 = vld [vmem:[%s1 + $0x1f0] sm:$0xf]
        %v755 = vld [vmem:[%s1 + $0x1f4] sm:$0xf]
        %v756 = vld [vmem:[%s1 + $0x1f8] sm:$0xf]
        %v757 = vld [vmem:[%s1 + $0x1fc] sm:$0xf]
        %v758 = vld [vmem:[%s1 + $0x200] sm:$0xf]
        %v759 = vld [vmem:[%s1 + $0x204] sm:$0xf]
        %v760 = vld [vmem:[%s1 + $0x208] sm:$0xf]
        %v761 = vld [vmem:[%s1 + $0x20c] sm:$0xf]
        %v762 = vld [vmem:[%s1 + $0x210] sm:$0xf]
        %v763 = vld [vmem:[%s1 + $0x214] sm:$0xf]
        %v764 = vld [vmem:[%s1 + $0x218] sm:$0xf]
        %v765 = vld [vmem:[%s1 + $0x21c] sm:$0xf]
        %v766 = vld [vmem:[%s1 + $0x220] sm:$0xf]
        %v767 = vld [vmem:[%s1 + $0x224] sm:$0xf]
        %v768 = vld [vmem:[%s1 + $0x228] sm:$0xf]
        %v769 = vld [vmem:[%s1 + $0x22c] sm:$0xf]
        %v770 = vld [vmem:[%s1 + $0x230] sm:$0xf]
        %v771 = vld [vmem:[%s1 + $0x234] sm:$0xf]
        %v772 = vld [vmem:[%s1 + $0x238] sm:$0xf]
        %v773 = vld [vmem:[%s1 + $0x23c] sm:$0xf]
        %v774 = vld [vmem:[%s1 + $0x240] sm:$0xf]
        %v775 = vld [vmem:[%s1 + $0x244] sm:$0xf]
        %v776 = vld [vmem:[%s1 + $0x248] sm:$0xf]
        %v777 = vld [vmem:[%s1 + $0x24c] sm:$0xf]
        %v778 = vld [vmem:[%s1 + $0x250] sm:$0xf]
        %v779 = vld [vmem:[%s1 + $0x254] sm:$0xf]
        %v780 = vld [vmem:[%s1 + $0x258] sm:$0xf]
        %v781 = vld [vmem:[%s1 + $0x25c] sm:$0xf]
        %v782 = vld [vmem:[%s1 + $0x260] sm:$0xf]
        %v783 = vld [vmem:[%s1 + $0x264] sm:$0xf]
        %v784 = vld [vmem:[%s1 + $0x268] sm:$0xf]
        %v785 = vld [vmem:[%s1 + $0x26c] sm:$0xf]
        %v786 = vld [vmem:[%s1 + $0x270] sm:$0xf]
        %v787 = vld [vmem:[%s1 + $0x274] sm:$0xf]
        %v788 = vld [vmem:[%s1 + $0x278] sm:$0xf]
        %v789 = vld [vmem:[%s1 + $0x27c] sm:$0xf]
        %v790 = vld [vmem:[%s1 + $0x280] sm:$0xf]
        %v791 = vld [vmem:[%s1 + $0x284] sm:$0xf]
        %v792 = vld [vmem:[%s1 + $0x288] sm:$0xf]
        %v793 = vld [vmem:[%s1 + $0x28c] sm:$0xf]
        %v794 = vld [vmem:[%s1 + $0x290] sm:$0xf]
        %v795 = vld [vmem:[%s1 + $0x294] sm:$0xf]
        %v796 = vld [vmem:[%s1 + $0x298] sm:$0xf]
        %v797 = vld [vmem:[%s1 + $0x29c] sm:$0xf]
        %v798 = vld [vmem:[%s1 + $0x2a0] sm:$0xf]
        %v799 = vld [vmem:[%s1 + $0x2a4] sm:$0xf]
        %v800 = vld [vmem:[%s1 + $0x2a8] sm:$0xf]
        %v801 = vld [vmem:[%s1 + $0x2ac] sm:$0xf]
        %v802 = vld [vmem:[%s1 + $0x2b0] sm:$0xf]
        %v803 = vld [vmem:[%s1 + $0x2b4] sm:$0xf]
        %v804 = vld [vmem:[%s1 + $0x2b8] sm:$0xf]
        %v805 = vld [vmem:[%s1 + $0x2bc] sm:$0xf]
        %v806 = vld [vmem:[%s1 + $0x2c0] sm:$0xf]
        %v807 = vld [vmem:[%s1 + $0x2c4] sm:$0xf]
        %v808 = vld [vmem:[%s1 + $0x2c8] sm:$0xf]
        %v809 = vld [vmem:[%s1 + $0x2cc] sm:$0xf]
        %v810 = vld [vmem:[%s1 + $0x2d0] sm:$0xf]
        %v811 = vld [vmem:[%s1 + $0x2d4] sm:$0xf]
        %v812 = vld [vmem:[%s1 + $0x2d8] sm:$0xf]
        %v813 = vld [vmem:[%s1 + $0x2dc] sm:$0xf]
        %v814 = vld [vmem:[%s1 + $0x2e0] sm:$0xf]
        %v815 = vld [vmem:[%s1 + $0x2e4] sm:$0xf]
        %v816 = vld [vmem:[%s1 + $0x2e8] sm:$0xf]
        %v817 = vld [vmem:[%s1 + $0x2ec] sm:$0xf]
        %v818 = vld [vmem:[%s1 + $0x2f0] sm:$0xf]
        %v819 = vld [vmem:[%s1 + $0x2f4] sm:$0xf]
        %v820 = vld [vmem:[%s1 + $0x2f8] sm:$0xf]
        %v821 = vld [vmem:[%s1 + $0x2fc] sm:$0xf]
        %v822 = vld [vmem:[%s1 + $0x300] sm:$0xf]
        %v823 = vld [vmem:[%s1 + $0x304] sm:$0xf]
        %v824 = vld [vmem:[%s1 + $0x308] sm:$0xf]
        %v825 = vld [vmem:[%s1 + $0x30c] sm:$0xf]
        %v826 = vld [vmem:[%s1 + $0x310] sm:$0xf]
        %v827 = vld [vmem:[%s1 + $0x314] sm:$0xf]
        %v828 = vld [vmem:[%s1 + $0x318] sm:$0xf]
        %v829 = vld [vmem:[%s1 + $0x31c] sm:$0xf]
        %v830 = vld [vmem:[%s1 + $0x320] sm:$0xf]
        %v831 = vld [vmem:[%s1 + $0x324] sm:$0xf]
        %v832 = vld [vmem:[%s1 + $0x328] sm:$0xf]
        %v833 = vld [vmem:[%s1 + $0x32c] sm:$0xf]
        %v834 = vld [vmem:[%s1 + $0x330] sm:$0xf]
        %v835 = vld [vmem:[%s1 + $0x334] sm:$0xf]
        %v836 = vld [vmem:[%s1 + $0x338] sm:$0xf]
        %v837 = vld [vmem:[%s1 + $0x33c] sm:$0xf]
        %v838 = vld [vmem:[%s1 + $0x340] sm:$0xf]
        %v839 = vld [vmem:[%s1 + $0x344] sm:$0xf]
        %v840 = vld [vmem:[%s1 + $0x348] sm:$0xf]
        %v841 = vld [vmem:[%s1 + $0x34c] sm:$0xf]
        %v842 = vld [vmem:[%s1 + $0x350] sm:$0xf]
        %v843 = vld [vmem:[%s1 + $0x354] sm:$0xf]
        %v844 = vld [vmem:[%s1 + $0x358] sm:$0xf]
        %v845 = vld [vmem:[%s1 + $0x35c] sm:$0xf]
        %v846 = vld [vmem:[%s1 + $0x360] sm:$0xf]
        %v847 = vld [vmem:[%s1 + $0x364] sm:$0xf]
        %v848 = vld [vmem:[%s1 + $0x368] sm:$0xf]
        %v849 = vld [vmem:[%s1 + $0x36c] sm:$0xf]
        %v850 = vld [vmem:[%s1 + $0x370] sm:$0xf]
        %v851 = vld [vmem:[%s1 + $0x374] sm:$0xf]
        %v852 = vld [vmem:[%s1 + $0x378] sm:$0xf]
        %v853 = vld [vmem:[%s1 + $0x37c] sm:$0xf]
        %v854 = vld [vmem:[%s1 + $0x380] sm:$0xf]
        %v855 = vld [vmem:[%s1 + $0x384] sm:$0xf]
        %v856 = vld [vmem:[%s1 + $0x388] sm:$0xf]
        %v857 = vld [vmem:[%s1 + $0x38c] sm:$0xf]
        %v858 = vld [vmem:[%s1 + $0x390] sm:$0xf]
        %v859 = vld [vmem:[%s1 + $0x394] sm:$0xf]
        %v860 = vld [vmem:[%s1 + $0x398] sm:$0xf]
        %v861 = vld [vmem:[%s1 + $0x39c] sm:$0xf]
        %v862 = vld [vmem:[%s1 + $0x3a0] sm:$0xf]
        %v863 = vld [vmem:[%s1 + $0x3a4] sm:$0xf]
        %v864 = vld [vmem:[%s1 + $0x3a8] sm:$0xf]
        %v865 = vld [vmem:[%s1 + $0x3ac] sm:$0xf]
        %v866 = vld [vmem:[%s1 + $0x3b0] sm:$0xf]
        %v867 = vld [vmem:[%s1 + $0x3b4] sm:$0xf]
        %v868 = vld [vmem:[%s1 + $0x3b8] sm:$0xf]
        %v869 = vld [vmem:[%s1 + $0x3bc] sm:$0xf]
        %v870 = vld [vmem:[%s1 + $0x3c0] sm:$0xf]
        %v871 = vld [vmem:[%s1 + $0x3c4] sm:$0xf]
        %v872 = vld [vmem:[%s1 + $0x3c8] sm:$0xf]
        %v873 = vld [vmem:[%s1 + $0x3cc] sm:$0xf]
        %v874 = vld [vmem:[%s1 + $0x3d0] sm:$0xf]
        %v875 = vld [vmem:[%s1 + $0x3d4] sm:$0xf]
        %v876 = vld [vmem:[%s1 + $0x3d8] sm:$0xf]
        %v877 = vld [vmem:[%s1 + $0x3dc] sm:$0xf]
        %v878 = vld [vmem:[%s1 + $0x3e0] sm:$0xf]
        %v879 = vld [vmem:[%s1 + $0x3e4] sm:$0xf]
        %v880 = vld [vmem:[%s1 + $0x3e8] sm:$0xf]
        %v881 = vld [vmem:[%s1 + $0x3ec] sm:$0xf]
        %v882 = vld [vmem:[%s1 + $0x3f0] sm:$0xf]
        %v883 = vld [vmem:[%s1 + $0x3f4] sm:$0xf]
        %v884 = vld [vmem:[%s1 + $0x3f8] sm:$0xf]
        %v885 = vld [vmem:[%s1 + $0x3fc] sm:$0xf]
        %v886 = vld [vmem:[%s1 + $0x400] sm:$0xf]
        %v887 = vld [vmem:[%s1 + $0x404] sm:$0xf]
        %v888 = vld [vmem:[%s1 + $0x408] sm:$0xf]
        %v889 = vld [vmem:[%s1 + $0x40c] sm:$0xf]
        %v890 = vld [vmem:[%s1 + $0x410] sm:$0xf]
        %v891 = vld [vmem:[%s1 + $0x414] sm:$0xf]
        %v892 = vld [vmem:[%s1 + $0x418] sm:$0xf]
        %v893 = vld [vmem:[%s1 + $0x41c] sm:$0xf]
        %v894 = vld [vmem:[%s1 + $0x420] sm:$0xf]
        %v895 = vld [vmem:[%s1 + $0x424] sm:$0xf]
        %v896 = vld [vmem:[%s1 + $0x428] sm:$0xf]
        %v897 = vld [vmem:[%s1 + $0x42c] sm:$0xf]
        %v898 = vld [vmem:[%s1 + $0x430] sm:$0xf]
        %v899 = vld [vmem:[%s1 + $0x434] sm:$0xf]
        %v900 = vld [vmem:[%s1 + $0x438] sm:$0xf]
        %v901 = vld [vmem:[%s1 + $0x43c] sm:$0xf]
        %v902 = vld [vmem:[%s1 + $0x440] sm:$0xf]
        %v903 = vld [vmem:[%s1 + $0x444] sm:$0xf]
        %v904 = vld [vmem:[%s1 + $0x448] sm:$0xf]
        %v905 = vld [vmem:[%s1 + $0x44c] sm:$0xf]
        %v906 = vld [vmem:[%s1 + $0x450] sm:$0xf]
        %v907 = vld [vmem:[%s1 + $0x454] sm:$0xf]
        %v908 = vld [vmem:[%s1 + $0x458] sm:$0xf]
        %v909 = vld [vmem:[%s1 + $0x45c] sm:$0xf]
        %v910 = vld [vmem:[%s1 + $0x460] sm:$0xf]
        %v911 = vld [vmem:[%s1 + $0x464] sm:$0xf]
        %v912 = vld [vmem:[%s1 + $0x468] sm:$0xf]
        %v913 = vld [vmem:[%s1 + $0x46c] sm:$0xf]
        %v914 = vld [vmem:[%s1 + $0x470] sm:$0xf]
        %v915 = vld [vmem:[%s1 + $0x474] sm:$0xf]
        %v916 = vld [vmem:[%s1 + $0x478] sm:$0xf]
        %v917 = vld [vmem:[%s1 + $0x47c] sm:$0xf]
        %v918 = vld [vmem:[%s1 + $0x480] sm:$0xf]
        %v919 = vld [vmem:[%s1 + $0x484] sm:$0xf]
        %v920 = vld [vmem:[%s1 + $0x488] sm:$0xf]
        %v921 = vld [vmem:[%s1 + $0x48c] sm:$0xf]
        %v922 = vld [vmem:[%s1 + $0x490] sm:$0xf]
        %v923 = vld [vmem:[%s1 + $0x494] sm:$0xf]
        %v924 = vld [vmem:[%s1 + $0x498] sm:$0xf]
        %v925 = vld [vmem:[%s1 + $0x49c] sm:$0xf]
        %v926 = vld [vmem:[%s1 + $0x4a0] sm:$0xf]
        %v927 = vld [vmem:[%s1 + $0x4a4] sm:$0xf]
        %v928 = vld [vmem:[%s1 + $0x4a8] sm:$0xf]
        %v929 = vld [vmem:[%s1 + $0x4ac] sm:$0xf]
        %v930 = vld [vmem:[%s1 + $0x4b0] sm:$0xf]
        %v931 = vld [vmem:[%s1 + $0x4b4] sm:$0xf]
        %v932 = vld [vmem:[%s1 + $0x4b8] sm:$0xf]
        %v933 = vld [vmem:[%s1 + $0x4bc] sm:$0xf]
        %v934 = vld [vmem:[%s1 + $0x4c0] sm:$0xf]
        %v935 = vld [vmem:[%s1 + $0x4c4] sm:$0xf]
        %v936 = vld [vmem:[%s1 + $0x4c8] sm:$0xf]
        %v937 = vld [vmem:[%s1 + $0x4cc] sm:$0xf]
        %v938 = vld [vmem:[%s1 + $0x4d0] sm:$0xf]
        %v939 = vld [vmem:[%s1 + $0x4d4] sm:$0xf]
        %v940 = vld [vmem:[%s1 + $0x4d8] sm:$0xf]
        %v941 = vld [vmem:[%s1 + $0x4dc] sm:$0xf]
        %v942 = vld [vmem:[%s1 + $0x4e0] sm:$0xf]
        %v943 = vld [vmem:[%s1 + $0x4e4] sm:$0xf]
        %v944 = vld [vmem:[%s1 + $0x4e8] sm:$0xf]
        %v945 = vld [vmem:[%s1 + $0x4ec] sm:$0xf]
        %v946 = vld [vmem:[%s1 + $0x4f0] sm:$0xf]
        %v947 = vld [vmem:[%s1 + $0x4f4] sm:$0xf]
        %v948 = vld [vmem:[%s1 + $0x4f8] sm:$0xf]
        %v949 = vld [vmem:[%s1 + $0x4fc] sm:$0xf]
        %v950 = vld [vmem:[%s1 + $0x500] sm:$0xf]
        %v951 = vld [vmem:[%s1 + $0x504] sm:$0xf]
        %v952 = vld [vmem:[%s1 + $0x508] sm:$0xf]
        %v953 = vld [vmem:[%s1 + $0x50c] sm:$0xf]
        %v954 = vld [vmem:[%s1 + $0x510] sm:$0xf]
        %v955 = vld [vmem:[%s1 + $0x514] sm:$0xf]
        %v956 = vld [vmem:[%s1 + $0x518] sm:$0xf]
        %v957 = vld [vmem:[%s1 + $0x51c] sm:$0xf]
        %v958 = vld [vmem:[%s1 + $0x520] sm:$0xf]
        %v959 = vld [vmem:[%s1 + $0x524] sm:$0xf]
        %v960 = vld [vmem:[%s1 + $0x528] sm:$0xf]
        %v961 = vld [vmem:[%s1 + $0x52c] sm:$0xf]
        %v962 = vld [vmem:[%s1 + $0x530] sm:$0xf]
        %v963 = vld [vmem:[%s1 + $0x534] sm:$0xf]
        %v964 = vld [vmem:[%s1 + $0x538] sm:$0xf]
        %v965 = vld [vmem:[%s1 + $0x53c] sm:$0xf]
        %v966 = vld [vmem:[%s1 + $0x540] sm:$0xf]
        %v967 = vld [vmem:[%s1 + $0x544] sm:$0xf]
        %v968 = vld [vmem:[%s1 + $0x548] sm:$0xf]
        %v969 = vld [vmem:[%s1 + $0x54c] sm:$0xf]
        %v970 = vld [vmem:[%s1 + $0x550] sm:$0xf]
        %v971 = vld [vmem:[%s1 + $0x554] sm:$0xf]
        %v972 = vld [vmem:[%s1 + $0x558] sm:$0xf]
        %v973 = vld [vmem:[%s1 + $0x55c] sm:$0xf]
        %v974 = vld [vmem:[%s1 + $0x560] sm:$0xf]
        %v975 = vld [vmem:[%s1 + $0x564] sm:$0xf]
        %v976 = vld [vmem:[%s1 + $0x568] sm:$0xf]
        %v977 = vld [vmem:[%s1 + $0x56c] sm:$0xf]
        %v978 = vld [vmem:[%s1 + $0x570] sm:$0xf]
        %v979 = vld [vmem:[%s1 + $0x574] sm:$0xf]
        %v980 = vld [vmem:[%s1 + $0x578] sm:$0xf]
        %v981 = vld [vmem:[%s1 + $0x57c] sm:$0xf]
        %v982 = vld [vmem:[%s1 + $0x580] sm:$0xf]
        %v983 = vld [vmem:[%s1 + $0x584] sm:$0xf]
        %v984 = vld [vmem:[%s1 + $0x588] sm:$0xf]
        %v985 = vld [vmem:[%s1 + $0x58c] sm:$0xf]
        %v986 = vld [vmem:[%s1 + $0x590] sm:$0xf]
        %v987 = vld [vmem:[%s1 + $0x594] sm:$0xf]
        %v988 = vld [vmem:[%s1 + $0x598] sm:$0xf]
        %v989 = vld [vmem:[%s1 + $0x59c] sm:$0xf]
        %v990 = vld [vmem:[%s1 + $0x5a0] sm:$0xf]
        %v991 = vld [vmem:[%s1 + $0x5a4] sm:$0xf]
        %v992 = vld [vmem:[%s1 + $0x5a8] sm:$0xf]
        %v993 = vld [vmem:[%s1 + $0x5ac] sm:$0xf]
        %v994 = vld [vmem:[%s1 + $0x5b0] sm:$0xf]
        %v995 = vld [vmem:[%s1 + $0x5b4] sm:$0xf]
        %v996 = vld [vmem:[%s1 + $0x5b8] sm:$0xf]
        %v997 = vld [vmem:[%s1 + $0x5bc] sm:$0xf]
        %v998 = vld [vmem:[%s1 + $0x5c0] sm:$0xf]
        %v999 = vld [vmem:[%s1 + $0x5c4] sm:$0xf]
        %v1000 = vld [vmem:[%s1 + $0x5c8] sm:$0xf]
        %v1001 = vld [vmem:[%s1 + $0x5cc] sm:$0xf]
        %v1002 = vld [vmem:[%s1 + $0x5d0] sm:$0xf]
        %v1003 = vld [vmem:[%s1 + $0x5d4] sm:$0xf]
        %v1004 = vld [vmem:[%s1 + $0x5d8] sm:$0xf]
        %v1005 = vld [vmem:[%s1 + $0x5dc] sm:$0xf]
        %v1006 = vld [vmem:[%s1 + $0x5e0] sm:$0xf]
        %v1007 = vld [vmem:[%s1 + $0x5e4] sm:$0xf]
        %v1008 = vld [vmem:[%s1 + $0x5e8] sm:$0xf]
        %v1009 = vld [vmem:[%s1 + $0x5ec] sm:$0xf]
        %v1010 = vld [vmem:[%s1 + $0x5f0] sm:$0xf]
        %v1011 = vld [vmem:[%s1 + $0x5f4] sm:$0xf]
        %v1012 = vld [vmem:[%s1 + $0x5f8] sm:$0xf]
        %v1013 = vld [vmem:[%s1 + $0x5fc] sm:$0xf]
        %v1014 = vld [vmem:[%s2] sm:$0xff]
        %v1027 = vunpack.c.l.b16 %v618
        %v1028 = vunpack.c.h.b16 %v618
        %v1029 = vunpack.c.l.b16 %v619
        %v1030 = vunpack.c.h.b16 %v619
        %v1031 = vunpack.c.l.b16 %v620
        %v1032 = vunpack.c.h.b16 %v620
        %v1033 = vunpack.c.l.b16 %v621
        %v1034 = vunpack.c.h.b16 %v621
        %v1035 = vunpack.c.l.b16 %v622
        %v1036 = vunpack.c.h.b16 %v622
        %v1037 = vunpack.c.l.b16 %v623
        %v1038 = vunpack.c.h.b16 %v623
        %v1039 = vunpack.c.l.b16 %v624
        %v1040 = vunpack.c.h.b16 %v624
        %v1041 = vunpack.c.l.b16 %v625
        %v1042 = vunpack.c.h.b16 %v625
        %v1043 = vunpack.c.l.b16 %v626
        %v1044 = vunpack.c.h.b16 %v626
        %v1045 = vunpack.c.l.b16 %v627
        %v1046 = vunpack.c.h.b16 %v627
        %v1047 = vunpack.c.l.b16 %v628
        %v1048 = vunpack.c.h.b16 %v628
        %v1049 = vunpack.c.l.b16 %v629
        %v1050 = vunpack.c.h.b16 %v629
        %v1051 = vpack.c.b16 %v1027, %v1027
        %v1052 = vpack.c.b16 %v1028, %v1028
        %v1053 = vpack.c.b16 %v1029, %v1029
        %v1054 = vpack.c.b16 %v1030, %v1030
        %v1055 = vpack.c.b16 %v1031, %v1031
        %v1056 = vpack.c.b16 %v1032, %v1032
        %v1057 = vpack.c.b16 %v1033, %v1033
        %v1058 = vpack.c.b16 %v1034, %v1034
        %v1059 = vpack.c.b16 %v1035, %v1035
        %v1060 = vpack.c.b16 %v1036, %v1036
        %v1061 = vpack.c.b16 %v1037, %v1037
        %v1062 = vpack.c.b16 %v1038, %v1038
        %v1063 = vpack.c.b16 %v1039, %v1039
        %v1064 = vpack.c.b16 %v1040, %v1040
        %v1065 = vpack.c.b16 %v1041, %v1041
        %v1066 = vpack.c.b16 %v1042, %v1042
        %v1067 = vpack.c.b16 %v1043, %v1043
        %v1068 = vpack.c.b16 %v1044, %v1044
        %v1069 = vpack.c.b16 %v1045, %v1045
        %v1070 = vpack.c.b16 %v1046, %v1046
        %v1071 = vpack.c.b16 %v1047, %v1047
        %v1072 = vpack.c.b16 %v1048, %v1048
        %v1073 = vpack.c.b16 %v1049, %v1049
        %v1074 = vpack.c.b16 %v1050, %v1050
        %v1483 = vunpack.c.l.b16 %v630
        %v1484 = vunpack.c.l.b16 %v631
        %v1485 = vunpack.c.l.b16 %v632
        %v1486 = vunpack.c.l.b16 %v633
        %v1487 = vunpack.c.l.b16 %v634
        %v1488 = vunpack.c.l.b16 %v635
        %v1489 = vunpack.c.l.b16 %v636
        %v1490 = vunpack.c.l.b16 %v637
        %v1491 = vunpack.c.l.b16 %v638
        %v1492 = vunpack.c.l.b16 %v639
        %v1493 = vunpack.c.l.b16 %v640
        %v1494 = vunpack.c.l.b16 %v641
        %v1495 = vunpack.c.l.b16 %v642
        %v1496 = vunpack.c.l.b16 %v643
        %v1497 = vunpack.c.l.b16 %v644
        %v1498 = vunpack.c.l.b16 %v645
        %v1499 = vunpack.c.l.b16 %v646
        %v1500 = vunpack.c.l.b16 %v647
        %v1501 = vunpack.c.l.b16 %v648
        %v1502 = vunpack.c.l.b16 %v649
        %v1503 = vunpack.c.l.b16 %v650
        %v1504 = vunpack.c.l.b16 %v651
        %v1505 = vunpack.c.l.b16 %v652
        %v1506 = vunpack.c.l.b16 %v653
        %v1507 = vunpack.c.l.b16 %v654
        %v1508 = vunpack.c.l.b16 %v655
        %v1509 = vunpack.c.l.b16 %v656
        %v1510 = vunpack.c.l.b16 %v657
        %v1511 = vunpack.c.l.b16 %v658
        %v1512 = vunpack.c.l.b16 %v659
        %v1513 = vunpack.c.l.b16 %v660
        %v1514 = vunpack.c.l.b16 %v661
        %v1515 = vunpack.c.l.b16 %v662
        %v1516 = vunpack.c.l.b16 %v663
        %v1517 = vunpack.c.l.b16 %v664
        %v1518 = vunpack.c.l.b16 %v665
        %v1519 = vunpack.c.l.b16 %v666
        %v1520 = vunpack.c.l.b16 %v667
        %v1521 = vunpack.c.l.b16 %v668
        %v1522 = vunpack.c.l.b16 %v669
        %v1523 = vunpack.c.l.b16 %v670
        %v1524 = vunpack.c.l.b16 %v671
        %v1525 = vunpack.c.l.b16 %v672
        %v1526 = vunpack.c.l.b16 %v673
        %v1527 = vunpack.c.l.b16 %v674
        %v1528 = vunpack.c.l.b16 %v675
        %v1529 = vunpack.c.l.b16 %v676
        %v1530 = vunpack.c.l.b16 %v677
        %v1531 = vunpack.c.l.b16 %v678
        %v1532 = vunpack.c.l.b16 %v679
        %v1533 = vunpack.c.l.b16 %v680
        %v1534 = vunpack.c.l.b16 %v681
        %v1535 = vunpack.c.l.b16 %v682
        %v1536 = vunpack.c.l.b16 %v683
        %v1537 = vunpack.c.l.b16 %v684
        %v1538 = vunpack.c.l.b16 %v685
        %v1539 = vunpack.c.l.b16 %v686
        %v1540 = vunpack.c.l.b16 %v687
        %v1541 = vunpack.c.l.b16 %v688
        %v1542 = vunpack.c.l.b16 %v689
        %v1543 = vunpack.c.l.b16 %v690
        %v1544 = vunpack.c.l.b16 %v691
        %v1545 = vunpack.c.l.b16 %v692
        %v1546 = vunpack.c.l.b16 %v693
        %v1547 = vunpack.c.l.b16 %v694
        %v1548 = vunpack.c.l.b16 %v695
        %v1549 = vunpack.c.l.b16 %v696
        %v1550 = vunpack.c.l.b16 %v697
        %v1551 = vunpack.c.l.b16 %v698
        %v1552 = vunpack.c.l.b16 %v699
        %v1553 = vunpack.c.l.b16 %v700
        %v1554 = vunpack.c.l.b16 %v701
        %v1555 = vunpack.c.l.b16 %v702
        %v1556 = vunpack.c.l.b16 %v703
        %v1557 = vunpack.c.l.b16 %v704
        %v1558 = vunpack.c.l.b16 %v705
        %v1559 = vunpack.c.l.b16 %v706
        %v1560 = vunpack.c.l.b16 %v707
        %v1561 = vunpack.c.l.b16 %v708
        %v1562 = vunpack.c.l.b16 %v709
        %v1563 = vunpack.c.l.b16 %v710
        %v1564 = vunpack.c.l.b16 %v711
        %v1565 = vunpack.c.l.b16 %v712
        %v1566 = vunpack.c.l.b16 %v713
        %v1567 = vunpack.c.l.b16 %v714
        %v1568 = vunpack.c.l.b16 %v715
        %v1569 = vunpack.c.l.b16 %v716
        %v1570 = vunpack.c.l.b16 %v717
        %v1571 = vunpack.c.l.b16 %v718
        %v1572 = vunpack.c.l.b16 %v719
        %v1573 = vunpack.c.l.b16 %v720
        %v1574 = vunpack.c.l.b16 %v721
        %v1575 = vunpack.c.l.b16 %v722
        %v1576 = vunpack.c.l.b16 %v723
        %v1577 = vunpack.c.l.b16 %v724
        %v1578 = vunpack.c.l.b16 %v725
        %v1579 = vunpack.c.l.b16 %v726
        %v1580 = vunpack.c.l.b16 %v727
        %v1581 = vunpack.c.l.b16 %v728
        %v1582 = vunpack.c.l.b16 %v729
        %v1583 = vunpack.c.l.b16 %v730
        %v1584 = vunpack.c.l.b16 %v731
        %v1585 = vunpack.c.l.b16 %v732
        %v1586 = vunpack.c.l.b16 %v733
        %v1587 = vunpack.c.l.b16 %v734
        %v1588 = vunpack.c.l.b16 %v735
        %v1589 = vunpack.c.l.b16 %v736
        %v1590 = vunpack.c.l.b16 %v737
        %v1591 = vunpack.c.l.b16 %v738
        %v1592 = vunpack.c.l.b16 %v739
        %v1593 = vunpack.c.l.b16 %v740
        %v1594 = vunpack.c.l.b16 %v741
        %v1595 = vunpack.c.l.b16 %v742
        %v1596 = vunpack.c.l.b16 %v743
        %v1597 = vunpack.c.l.b16 %v744
        %v1598 = vunpack.c.l.b16 %v745
        %v1599 = vunpack.c.l.b16 %v746
        %v1600 = vunpack.c.l.b16 %v747
        %v1601 = vunpack.c.l.b16 %v748
        %v1602 = vunpack.c.l.b16 %v749
        %v1603 = vunpack.c.l.b16 %v750
        %v1604 = vunpack.c.l.b16 %v751
        %v1605 = vunpack.c.l.b16 %v752
        %v1606 = vunpack.c.l.b16 %v753
        %v1607 = vunpack.c.l.b16 %v754
        %v1608 = vunpack.c.l.b16 %v755
        %v1609 = vunpack.c.l.b16 %v756
        %v1610 = vunpack.c.l.b16 %v757
        %v1611 = vunpack.c.l.b16 %v758
        %v1612 = vunpack.c.l.b16 %v759
        %v1613 = vunpack.c.l.b16 %v760
        %v1614 = vunpack.c.l.b16 %v761
        %v1615 = vunpack.c.l.b16 %v762
        %v1616 = vunpack.c.l.b16 %v763
        %v1617 = vunpack.c.l.b16 %v764
        %v1618 = vunpack.c.l.b16 %v765
        %v1619 = vunpack.c.l.b16 %v766
        %v1620 = vunpack.c.l.b16 %v767
        %v1621 = vunpack.c.l.b16 %v768
        %v1622 = vunpack.c.l.b16 %v769
        %v1623 = vunpack.c.l.b16 %v770
        %v1624 = vunpack.c.l.b16 %v771
        %v1625 = vunpack.c.l.b16 %v772
        %v1626 = vunpack.c.l.b16 %v773
        %v1627 = vunpack.c.l.b16 %v774
        %v1628 = vunpack.c.l.b16 %v775
        %v1629 = vunpack.c.l.b16 %v776
        %v1630 = vunpack.c.l.b16 %v777
        %v1631 = vunpack.c.l.b16 %v778
        %v1632 = vunpack.c.l.b16 %v779
        %v1633 = vunpack.c.l.b16 %v780
        %v1634 = vunpack.c.l.b16 %v781
        %v1635 = vunpack.c.l.b16 %v782
        %v1636 = vunpack.c.l.b16 %v783
        %v1637 = vunpack.c.l.b16 %v784
        %v1638 = vunpack.c.l.b16 %v785
        %v1639 = vunpack.c.l.b16 %v786
        %v1640 = vunpack.c.l.b16 %v787
        %v1641 = vunpack.c.l.b16 %v788
        %v1642 = vunpack.c.l.b16 %v789
        %v1643 = vunpack.c.l.b16 %v790
        %v1644 = vunpack.c.l.b16 %v791
        %v1645 = vunpack.c.l.b16 %v792
        %v1646 = vunpack.c.l.b16 %v793
        %v1647 = vunpack.c.l.b16 %v794
        %v1648 = vunpack.c.l.b16 %v795
        %v1649 = vunpack.c.l.b16 %v796
        %v1650 = vunpack.c.l.b16 %v797
        %v1651 = vunpack.c.l.b16 %v798
        %v1652 = vunpack.c.l.b16 %v799
        %v1653 = vunpack.c.l.b16 %v800
        %v1654 = vunpack.c.l.b16 %v801
        %v1655 = vunpack.c.l.b16 %v802
        %v1656 = vunpack.c.l.b16 %v803
        %v1657 = vunpack.c.l.b16 %v804
        %v1658 = vunpack.c.l.b16 %v805
        %v1659 = vunpack.c.l.b16 %v806
        %v1660 = vunpack.c.l.b16 %v807
        %v1661 = vunpack.c.l.b16 %v808
        %v1662 = vunpack.c.l.b16 %v809
        %v1663 = vunpack.c.l.b16 %v810
        %v1664 = vunpack.c.l.b16 %v811
        %v1665 = vunpack.c.l.b16 %v812
        %v1666 = vunpack.c.l.b16 %v813
        %v1667 = vunpack.c.l.b16 %v814
        %v1668 = vunpack.c.l.b16 %v815
        %v1669 = vunpack.c.l.b16 %v816
        %v1670 = vunpack.c.l.b16 %v817
        %v1671 = vunpack.c.l.b16 %v818
        %v1672 = vunpack.c.l.b16 %v819
        %v1673 = vunpack.c.l.b16 %v820
        %v1674 = vunpack.c.l.b16 %v821
        %v1675 = vunpack.c.l.b16 %v822
        %v1676 = vunpack.c.l.b16 %v823
        %v1677 = vunpack.c.l.b16 %v824
        %v1678 = vunpack.c.l.b16 %v825
        %v1679 = vunpack.c.l.b16 %v826
        %v1680 = vunpack.c.l.b16 %v827
        %v1681 = vunpack.c.l.b16 %v828
        %v1682 = vunpack.c.l.b16 %v829
        %v1683 = vunpack.c.l.b16 %v830
        %v1684 = vunpack.c.l.b16 %v831
        %v1685 = vunpack.c.l.b16 %v832
        %v1686 = vunpack.c.l.b16 %v833
        %v1687 = vunpack.c.l.b16 %v834
        %v1688 = vunpack.c.l.b16 %v835
        %v1689 = vunpack.c.l.b16 %v836
        %v1690 = vunpack.c.l.b16 %v837
        %v1691 = vunpack.c.l.b16 %v838
        %v1692 = vunpack.c.l.b16 %v839
        %v1693 = vunpack.c.l.b16 %v840
        %v1694 = vunpack.c.l.b16 %v841
        %v1695 = vunpack.c.l.b16 %v842
        %v1696 = vunpack.c.l.b16 %v843
        %v1697 = vunpack.c.l.b16 %v844
        %v1698 = vunpack.c.l.b16 %v845
        %v1699 = vunpack.c.l.b16 %v846
        %v1700 = vunpack.c.l.b16 %v847
        %v1701 = vunpack.c.l.b16 %v848
        %v1702 = vunpack.c.l.b16 %v849
        %v1703 = vunpack.c.l.b16 %v850
        %v1704 = vunpack.c.l.b16 %v851
        %v1705 = vunpack.c.l.b16 %v852
        %v1706 = vunpack.c.l.b16 %v853
        %v1707 = vunpack.c.l.b16 %v854
        %v1708 = vunpack.c.l.b16 %v855
        %v1709 = vunpack.c.l.b16 %v856
        %v1710 = vunpack.c.l.b16 %v857
        %v1711 = vunpack.c.l.b16 %v858
        %v1712 = vunpack.c.l.b16 %v859
        %v1713 = vunpack.c.l.b16 %v860
        %v1714 = vunpack.c.l.b16 %v861
        %v1715 = vunpack.c.l.b16 %v862
        %v1716 = vunpack.c.l.b16 %v863
        %v1717 = vunpack.c.l.b16 %v864
        %v1718 = vunpack.c.l.b16 %v865
        %v1719 = vunpack.c.l.b16 %v866
        %v1720 = vunpack.c.l.b16 %v867
        %v1721 = vunpack.c.l.b16 %v868
        %v1722 = vunpack.c.l.b16 %v869
        %v1723 = vunpack.c.l.b16 %v870
        %v1724 = vunpack.c.l.b16 %v871
        %v1725 = vunpack.c.l.b16 %v872
        %v1726 = vunpack.c.l.b16 %v873
        %v1727 = vunpack.c.l.b16 %v874
        %v1728 = vunpack.c.l.b16 %v875
        %v1729 = vunpack.c.l.b16 %v876
        %v1730 = vunpack.c.l.b16 %v877
        %v1731 = vunpack.c.l.b16 %v878
        %v1732 = vunpack.c.l.b16 %v879
        %v1733 = vunpack.c.l.b16 %v880
        %v1734 = vunpack.c.l.b16 %v881
        %v1735 = vunpack.c.l.b16 %v882
        %v1736 = vunpack.c.l.b16 %v883
        %v1737 = vunpack.c.l.b16 %v884
        %v1738 = vunpack.c.l.b16 %v885
        %v1739 = vunpack.c.l.b16 %v886
        %v1740 = vunpack.c.l.b16 %v887
        %v1741 = vunpack.c.l.b16 %v888
        %v1742 = vunpack.c.l.b16 %v889
        %v1743 = vunpack.c.l.b16 %v890
        %v1744 = vunpack.c.l.b16 %v891
        %v1745 = vunpack.c.l.b16 %v892
        %v1746 = vunpack.c.l.b16 %v893
        %v1747 = vunpack.c.l.b16 %v894
        %v1748 = vunpack.c.l.b16 %v895
        %v1749 = vunpack.c.l.b16 %v896
        %v1750 = vunpack.c.l.b16 %v897
        %v1751 = vunpack.c.l.b16 %v898
        %v1752 = vunpack.c.l.b16 %v899
        %v1753 = vunpack.c.l.b16 %v900
        %v1754 = vunpack.c.l.b16 %v901
        %v1755 = vunpack.c.l.b16 %v902
        %v1756 = vunpack.c.l.b16 %v903
        %v1757 = vunpack.c.l.b16 %v904
        %v1758 = vunpack.c.l.b16 %v905
        %v1759 = vunpack.c.l.b16 %v906
        %v1760 = vunpack.c.l.b16 %v907
        %v1761 = vunpack.c.l.b16 %v908
        %v1762 = vunpack.c.l.b16 %v909
        %v1763 = vunpack.c.l.b16 %v910
        %v1764 = vunpack.c.l.b16 %v911
        %v1765 = vunpack.c.l.b16 %v912
        %v1766 = vunpack.c.l.b16 %v913
        %v1767 = vunpack.c.l.b16 %v914
        %v1768 = vunpack.c.l.b16 %v915
        %v1769 = vunpack.c.l.b16 %v916
        %v1770 = vunpack.c.l.b16 %v917
        %v1771 = vunpack.c.l.b16 %v918
        %v1772 = vunpack.c.l.b16 %v919
        %v1773 = vunpack.c.l.b16 %v920
        %v1774 = vunpack.c.l.b16 %v921
        %v1775 = vunpack.c.l.b16 %v922
        %v1776 = vunpack.c.l.b16 %v923
        %v1777 = vunpack.c.l.b16 %v924
        %v1778 = vunpack.c.l.b16 %v925
        %v1779 = vunpack.c.l.b16 %v926
        %v1780 = vunpack.c.l.b16 %v927
        %v1781 = vunpack.c.l.b16 %v928
        %v1782 = vunpack.c.l.b16 %v929
        %v1783 = vunpack.c.l.b16 %v930
        %v1784 = vunpack.c.l.b16 %v931
        %v1785 = vunpack.c.l.b16 %v932
        %v1786 = vunpack.c.l.b16 %v933
        %v1787 = vunpack.c.l.b16 %v934
        %v1788 = vunpack.c.l.b16 %v935
        %v1789 = vunpack.c.l.b16 %v936
        %v1790 = vunpack.c.l.b16 %v937
        %v1791 = vunpack.c.l.b16 %v938
        %v1792 = vunpack.c.l.b16 %v939
        %v1793 = vunpack.c.l.b16 %v940
        %v1794 = vunpack.c.l.b16 %v941
        %v1795 = vunpack.c.l.b16 %v942
        %v1796 = vunpack.c.l.b16 %v943
        %v1797 = vunpack.c.l.b16 %v944
        %v1798 = vunpack.c.l.b16 %v945
        %v1799 = vunpack.c.l.b16 %v946
        %v1800 = vunpack.c.l.b16 %v947
        %v1801 = vunpack.c.l.b16 %v948
        %v1802 = vunpack.c.l.b16 %v949
        %v1803 = vunpack.c.l.b16 %v950
        %v1804 = vunpack.c.l.b16 %v951
        %v1805 = vunpack.c.l.b16 %v952
        %v1806 = vunpack.c.l.b16 %v953
        %v1807 = vunpack.c.l.b16 %v954
        %v1808 = vunpack.c.l.b16 %v955
        %v1809 = vunpack.c.l.b16 %v956
        %v1810 = vunpack.c.l.b16 %v957
        %v1811 = vunpack.c.l.b16 %v958
        %v1812 = vunpack.c.l.b16 %v959
        %v1813 = vunpack.c.l.b16 %v960
        %v1814 = vunpack.c.l.b16 %v961
        %v1815 = vunpack.c.l.b16 %v962
        %v1816 = vunpack.c.l.b16 %v963
        %v1817 = vunpack.c.l.b16 %v964
        %v1818 = vunpack.c.l.b16 %v965
        %v1819 = vunpack.c.l.b16 %v966
        %v1820 = vunpack.c.l.b16 %v967
        %v1821 = vunpack.c.l.b16 %v968
        %v1822 = vunpack.c.l.b16 %v969
        %v1823 = vunpack.c.l.b16 %v970
        %v1824 = vunpack.c.l.b16 %v971
        %v1825 = vunpack.c.l.b16 %v972
        %v1826 = vunpack.c.l.b16 %v973
        %v1827 = vunpack.c.l.b16 %v974
        %v1828 = vunpack.c.l.b16 %v975
        %v1829 = vunpack.c.l.b16 %v976
        %v1830 = vunpack.c.l.b16 %v977
        %v1831 = vunpack.c.l.b16 %v978
        %v1832 = vunpack.c.l.b16 %v979
        %v1833 = vunpack.c.l.b16 %v980
        %v1834 = vunpack.c.l.b16 %v981
        %v1835 = vunpack.c.l.b16 %v982
        %v1836 = vunpack.c.l.b16 %v983
        %v1837 = vunpack.c.l.b16 %v984
        %v1838 = vunpack.c.l.b16 %v985
        %v1839 = vunpack.c.l.b16 %v986
        %v1840 = vunpack.c.l.b16 %v987
        %v1841 = vunpack.c.l.b16 %v988
        %v1842 = vunpack.c.l.b16 %v989
        %v1843 = vunpack.c.l.b16 %v990
        %v1844 = vunpack.c.l.b16 %v991
        %v1845 = vunpack.c.l.b16 %v992
        %v1846 = vunpack.c.l.b16 %v993
        %v1847 = vunpack.c.l.b16 %v994
        %v1848 = vunpack.c.l.b16 %v995
        %v1849 = vunpack.c.l.b16 %v996
        %v1850 = vunpack.c.l.b16 %v997
        %v1851 = vunpack.c.l.b16 %v998
        %v1852 = vunpack.c.l.b16 %v999
        %v1853 = vunpack.c.l.b16 %v1000
        %v1854 = vunpack.c.l.b16 %v1001
        %v1855 = vunpack.c.l.b16 %v1002
        %v1856 = vunpack.c.l.b16 %v1003
        %v1857 = vunpack.c.l.b16 %v1004
        %v1858 = vunpack.c.l.b16 %v1005
        %v1859 = vunpack.c.l.b16 %v1006
        %v1860 = vunpack.c.l.b16 %v1007
        %v1861 = vunpack.c.l.b16 %v1008
        %v1862 = vunpack.c.l.b16 %v1009
        %v1863 = vunpack.c.l.b16 %v1010
        %v1864 = vunpack.c.l.b16 %v1011
        %v1865 = vunpack.c.l.b16 %v1012
        %v1866 = vunpack.c.l.b16 %v1013
        %v1867 = vpack.c.b16 %v1484, %v1483
        %v1868 = vpack.c.b16 %v1486, %v1485
        %v1869 = vpack.c.b16 %v1488, %v1487
        %v1870 = vpack.c.b16 %v1490, %v1489
        %v1871 = vpack.c.b16 %v1492, %v1491
        %v1872 = vpack.c.b16 %v1494, %v1493
        %v1873 = vpack.c.b16 %v1496, %v1495
        %v1874 = vpack.c.b16 %v1498, %v1497
        %v1875 = vpack.c.b16 %v1500, %v1499
        %v1876 = vpack.c.b16 %v1502, %v1501
        %v1877 = vpack.c.b16 %v1504, %v1503
        %v1878 = vpack.c.b16 %v1506, %v1505
        %v1879 = vpack.c.b16 %v1508, %v1507
        %v1880 = vpack.c.b16 %v1510, %v1509
        %v1881 = vpack.c.b16 %v1512, %v1511
        %v1882 = vpack.c.b16 %v1514, %v1513
        %v1883 = vpack.c.b16 %v1516, %v1515
        %v1884 = vpack.c.b16 %v1518, %v1517
        %v1885 = vpack.c.b16 %v1520, %v1519
        %v1886 = vpack.c.b16 %v1522, %v1521
        %v1887 = vpack.c.b16 %v1524, %v1523
        %v1888 = vpack.c.b16 %v1526, %v1525
        %v1889 = vpack.c.b16 %v1528, %v1527
        %v1890 = vpack.c.b16 %v1530, %v1529
        %v1891 = vpack.c.b16 %v1532, %v1531
        %v1892 = vpack.c.b16 %v1534, %v1533
        %v1893 = vpack.c.b16 %v1536, %v1535
        %v1894 = vpack.c.b16 %v1538, %v1537
        %v1895 = vpack.c.b16 %v1540, %v1539
        %v1896 = vpack.c.b16 %v1542, %v1541
        %v1897 = vpack.c.b16 %v1544, %v1543
        %v1898 = vpack.c.b16 %v1546, %v1545
        %v1899 = vpack.c.b16 %v1548, %v1547
        %v1900 = vpack.c.b16 %v1550, %v1549
        %v1901 = vpack.c.b16 %v1552, %v1551
        %v1902 = vpack.c.b16 %v1554, %v1553
        %v1903 = vpack.c.b16 %v1556, %v1555
        %v1904 = vpack.c.b16 %v1558, %v1557
        %v1905 = vpack.c.b16 %v1560, %v1559
        %v1906 = vpack.c.b16 %v1562, %v1561
        %v1907 = vpack.c.b16 %v1564, %v1563
        %v1908 = vpack.c.b16 %v1566, %v1565
        %v1909 = vpack.c.b16 %v1568, %v1567
        %v1910 = vpack.c.b16 %v1570, %v1569
        %v1911 = vpack.c.b16 %v1572, %v1571
        %v1912 = vpack.c.b16 %v1574, %v1573
        %v1913 = vpack.c.b16 %v1576, %v1575
        %v1914 = vpack.c.b16 %v1578, %v1577
        %v1915 = vpack.c.b16 %v1580, %v1579
        %v1916 = vpack.c.b16 %v1582, %v1581
        %v1917 = vpack.c.b16 %v1584, %v1583
        %v1918 = vpack.c.b16 %v1586, %v1585
        %v1919 = vpack.c.b16 %v1588, %v1587
        %v1920 = vpack.c.b16 %v1590, %v1589
        %v1921 = vpack.c.b16 %v1592, %v1591
        %v1922 = vpack.c.b16 %v1594, %v1593
        %v1923 = vpack.c.b16 %v1596, %v1595
        %v1924 = vpack.c.b16 %v1598, %v1597
        %v1925 = vpack.c.b16 %v1600, %v1599
        %v1926 = vpack.c.b16 %v1602, %v1601
        %v1927 = vpack.c.b16 %v1604, %v1603
        %v1928 = vpack.c.b16 %v1606, %v1605
        %v1929 = vpack.c.b16 %v1608, %v1607
        %v1930 = vpack.c.b16 %v1610, %v1609
        %v1931 = vpack.c.b16 %v1612, %v1611
        %v1932 = vpack.c.b16 %v1614, %v1613
        %v1933 = vpack.c.b16 %v1616, %v1615
        %v1934 = vpack.c.b16 %v1618, %v1617
        %v1935 = vpack.c.b16 %v1620, %v1619
        %v1936 = vpack.c.b16 %v1622, %v1621
        %v1937 = vpack.c.b16 %v1624, %v1623
        %v1938 = vpack.c.b16 %v1626, %v1625
        %v1939 = vpack.c.b16 %v1628, %v1627
        %v1940 = vpack.c.b16 %v1630, %v1629
        %v1941 = vpack.c.b16 %v1632, %v1631
        %v1942 = vpack.c.b16 %v1634, %v1633
        %v1943 = vpack.c.b16 %v1636, %v1635
        %v1944 = vpack.c.b16 %v1638, %v1637
        %v1945 = vpack.c.b16 %v1640, %v1639
        %v1946 = vpack.c.b16 %v1642, %v1641
        %v1947 = vpack.c.b16 %v1644, %v1643
        %v1948 = vpack.c.b16 %v1646, %v1645
        %v1949 = vpack.c.b16 %v1648, %v1647
        %v1950 = vpack.c.b16 %v1650, %v1649
        %v1951 = vpack.c.b16 %v1652, %v1651
        %v1952 = vpack.c.b16 %v1654, %v1653
        %v1953 = vpack.c.b16 %v1656, %v1655
        %v1954 = vpack.c.b16 %v1658, %v1657
        %v1955 = vpack.c.b16 %v1660, %v1659
        %v1956 = vpack.c.b16 %v1662, %v1661
        %v1957 = vpack.c.b16 %v1664, %v1663
        %v1958 = vpack.c.b16 %v1666, %v1665
        %v1959 = vpack.c.b16 %v1668, %v1667
        %v1960 = vpack.c.b16 %v1670, %v1669
        %v1961 = vpack.c.b16 %v1672, %v1671
        %v1962 = vpack.c.b16 %v1674, %v1673
        %v1963 = vpack.c.b16 %v1676, %v1675
        %v1964 = vpack.c.b16 %v1678, %v1677
        %v1965 = vpack.c.b16 %v1680, %v1679
        %v1966 = vpack.c.b16 %v1682, %v1681
        %v1967 = vpack.c.b16 %v1684, %v1683
        %v1968 = vpack.c.b16 %v1686, %v1685
        %v1969 = vpack.c.b16 %v1688, %v1687
        %v1970 = vpack.c.b16 %v1690, %v1689
        %v1971 = vpack.c.b16 %v1692, %v1691
        %v1972 = vpack.c.b16 %v1694, %v1693
        %v1973 = vpack.c.b16 %v1696, %v1695
        %v1974 = vpack.c.b16 %v1698, %v1697
        %v1975 = vpack.c.b16 %v1700, %v1699
        %v1976 = vpack.c.b16 %v1702, %v1701
        %v1977 = vpack.c.b16 %v1704, %v1703
        %v1978 = vpack.c.b16 %v1706, %v1705
        %v1979 = vpack.c.b16 %v1708, %v1707
        %v1980 = vpack.c.b16 %v1710, %v1709
        %v1981 = vpack.c.b16 %v1712, %v1711
        %v1982 = vpack.c.b16 %v1714, %v1713
        %v1983 = vpack.c.b16 %v1716, %v1715
        %v1984 = vpack.c.b16 %v1718, %v1717
        %v1985 = vpack.c.b16 %v1720, %v1719
        %v1986 = vpack.c.b16 %v1722, %v1721
        %v1987 = vpack.c.b16 %v1724, %v1723
        %v1988 = vpack.c.b16 %v1726, %v1725
        %v1989 = vpack.c.b16 %v1728, %v1727
        %v1990 = vpack.c.b16 %v1730, %v1729
        %v1991 = vpack.c.b16 %v1732, %v1731
        %v1992 = vpack.c.b16 %v1734, %v1733
        %v1993 = vpack.c.b16 %v1736, %v1735
        %v1994 = vpack.c.b16 %v1738, %v1737
        %v1995 = vpack.c.b16 %v1740, %v1739
        %v1996 = vpack.c.b16 %v1742, %v1741
        %v1997 = vpack.c.b16 %v1744, %v1743
        %v1998 = vpack.c.b16 %v1746, %v1745
        %v1999 = vpack.c.b16 %v1748, %v1747
        %v2000 = vpack.c.b16 %v1750, %v1749
        %v2001 = vpack.c.b16 %v1752, %v1751
        %v2002 = vpack.c.b16 %v1754, %v1753
        %v2003 = vpack.c.b16 %v1756, %v1755
        %v2004 = vpack.c.b16 %v1758, %v1757
        %v2005 = vpack.c.b16 %v1760, %v1759
        %v2006 = vpack.c.b16 %v1762, %v1761
        %v2007 = vpack.c.b16 %v1764, %v1763
        %v2008 = vpack.c.b16 %v1766, %v1765
        %v2009 = vpack.c.b16 %v1768, %v1767
        %v2010 = vpack.c.b16 %v1770, %v1769
        %v2011 = vpack.c.b16 %v1772, %v1771
        %v2012 = vpack.c.b16 %v1774, %v1773
        %v2013 = vpack.c.b16 %v1776, %v1775
        %v2014 = vpack.c.b16 %v1778, %v1777
        %v2015 = vpack.c.b16 %v1780, %v1779
        %v2016 = vpack.c.b16 %v1782, %v1781
        %v2017 = vpack.c.b16 %v1784, %v1783
        %v2018 = vpack.c.b16 %v1786, %v1785
        %v2019 = vpack.c.b16 %v1788, %v1787
        %v2020 = vpack.c.b16 %v1790, %v1789
        %v2021 = vpack.c.b16 %v1792, %v1791
        %v2022 = vpack.c.b16 %v1794, %v1793
        %v2023 = vpack.c.b16 %v1796, %v1795
        %v2024 = vpack.c.b16 %v1798, %v1797
        %v2025 = vpack.c.b16 %v1800, %v1799
        %v2026 = vpack.c.b16 %v1802, %v1801
        %v2027 = vpack.c.b16 %v1804, %v1803
        %v2028 = vpack.c.b16 %v1806, %v1805
        %v2029 = vpack.c.b16 %v1808, %v1807
        %v2030 = vpack.c.b16 %v1810, %v1809
        %v2031 = vpack.c.b16 %v1812, %v1811
        %v2032 = vpack.c.b16 %v1814, %v1813
        %v2033 = vpack.c.b16 %v1816, %v1815
        %v2034 = vpack.c.b16 %v1818, %v1817
        %v2035 = vpack.c.b16 %v1820, %v1819
        %v2036 = vpack.c.b16 %v1822, %v1821
        %v2037 = vpack.c.b16 %v1824, %v1823
        %v2038 = vpack.c.b16 %v1826, %v1825
        %v2039 = vpack.c.b16 %v1828, %v1827
        %v2040 = vpack.c.b16 %v1830, %v1829
        %v2041 = vpack.c.b16 %v1832, %v1831
        %v2042 = vpack.c.b16 %v1834, %v1833
        %v2043 = vpack.c.b16 %v1836, %v1835
        %v2044 = vpack.c.b16 %v1838, %v1837
        %v2045 = vpack.c.b16 %v1840, %v1839
        %v2046 = vpack.c.b16 %v1842, %v1841
        %v2047 = vpack.c.b16 %v1844, %v1843
        %v2048 = vpack.c.b16 %v1846, %v1845
        %v2049 = vpack.c.b16 %v1848, %v1847
        %v2050 = vpack.c.b16 %v1850, %v1849
        %v2051 = vpack.c.b16 %v1852, %v1851
        %v2052 = vpack.c.b16 %v1854, %v1853
        %v2053 = vpack.c.b16 %v1856, %v1855
        %v2054 = vpack.c.b16 %v1858, %v1857
        %v2055 = vpack.c.b16 %v1860, %v1859
        %v2056 = vpack.c.b16 %v1862, %v1861
        %v2057 = vpack.c.b16 %v1864, %v1863
        %v2058 = vpack.c.b16 %v1866, %v1865
        %2251 = vmatpush.bf16.msra.mxu0 %v1874
        %2252 = vmatpush.bf16.msra.mxu0 %v1873
        %2253 = vmatpush.bf16.msra.mxu0 %v1872
        %2254 = vmatpush.bf16.msra.mxu0 %v1871
        %2255 = vmatpush.bf16.msra.mxu0 %v1870
        %2256 = vmatpush.bf16.msra.mxu0 %v1869
        %2257 = vmatpush.bf16.msra.mxu0 %v1868
        %2258 = vmatpush.bf16.msra.mxu0 %v1867
        %2259 = vmatmul.bf16.gmra.mxu0 %v1051
        %v2260 = vpop.f32.mrf.mxu0
        %v2261 = vadd.f32 %v1014, %v2260
        %v2262 = vpop.f32.mrf.mxu0
        %2263 = vdwg.mxu0
        %2264 = vmatpush.bf16.msra.mxu0 %v1882
        %2265 = vmatpush.bf16.msra.mxu0 %v1881
        %2266 = vmatpush.bf16.msra.mxu0 %v1880
        %2267 = vmatpush.bf16.msra.mxu0 %v1879
        %2268 = vmatpush.bf16.msra.mxu0 %v1878
        %2269 = vmatpush.bf16.msra.mxu0 %v1877
        %2270 = vmatpush.bf16.msra.mxu0 %v1876
        %2271 = vmatpush.bf16.msra.mxu0 %v1875
        %2272 = vmatmul.bf16.gmra.mxu0 %v1052
        %v2273 = vpop.f32.mrf.mxu0
        %v2274 = vadd.f32 %v2261, %v2273
        %v2275 = vpop.f32.mrf.mxu0
        %2276 = vdwg.mxu0
        %2277 = vmatpush.bf16.msra.mxu0 %v1890
        %2278 = vmatpush.bf16.msra.mxu0 %v1889
        %2279 = vmatpush.bf16.msra.mxu0 %v1888
        %2280 = vmatpush.bf16.msra.mxu0 %v1887
        %2281 = vmatpush.bf16.msra.mxu0 %v1886
        %2282 = vmatpush.bf16.msra.mxu0 %v1885
        %2283 = vmatpush.bf16.msra.mxu0 %v1884
        %2284 = vmatpush.bf16.msra.mxu0 %v1883
        %2285 = vmatmul.bf16.gmra.mxu0 %v1053
        %v2286 = vpop.f32.mrf.mxu0
        %v2287 = vadd.f32 %v2274, %v2286
        %v2288 = vpop.f32.mrf.mxu0
        %2289 = vdwg.mxu0
        %2290 = vmatpush.bf16.msra.mxu0 %v1898
        %2291 = vmatpush.bf16.msra.mxu0 %v1897
        %2292 = vmatpush.bf16.msra.mxu0 %v1896
        %2293 = vmatpush.bf16.msra.mxu0 %v1895
        %2294 = vmatpush.bf16.msra.mxu0 %v1894
        %2295 = vmatpush.bf16.msra.mxu0 %v1893
        %2296 = vmatpush.bf16.msra.mxu0 %v1892
        %2297 = vmatpush.bf16.msra.mxu0 %v1891
        %2298 = vmatmul.bf16.gmra.mxu0 %v1054
        %v2299 = vpop.f32.mrf.mxu0
        %v2300 = vadd.f32 %v2287, %v2299
        %v2301 = vpop.f32.mrf.mxu0
        %2302 = vdwg.mxu0
        %2303 = vmatpush.bf16.msra.mxu0 %v1906
        %2304 = vmatpush.bf16.msra.mxu0 %v1905
        %2305 = vmatpush.bf16.msra.mxu0 %v1904
        %2306 = vmatpush.bf16.msra.mxu0 %v1903
        %2307 = vmatpush.bf16.msra.mxu0 %v1902
        %2308 = vmatpush.bf16.msra.mxu0 %v1901
        %2309 = vmatpush.bf16.msra.mxu0 %v1900
        %2310 = vmatpush.bf16.msra.mxu0 %v1899
        %2311 = vmatmul.bf16.gmra.mxu0 %v1055
        %v2312 = vpop.f32.mrf.mxu0
        %v2313 = vadd.f32 %v2300, %v2312
        %v2314 = vpop.f32.mrf.mxu0
        %2315 = vdwg.mxu0
        %2316 = vmatpush.bf16.msra.mxu0 %v1914
        %2317 = vmatpush.bf16.msra.mxu0 %v1913
        %2318 = vmatpush.bf16.msra.mxu0 %v1912
        %2319 = vmatpush.bf16.msra.mxu0 %v1911
        %2320 = vmatpush.bf16.msra.mxu0 %v1910
        %2321 = vmatpush.bf16.msra.mxu0 %v1909
        %2322 = vmatpush.bf16.msra.mxu0 %v1908
        %2323 = vmatpush.bf16.msra.mxu0 %v1907
        %2324 = vmatmul.bf16.gmra.mxu0 %v1056
        %v2325 = vpop.f32.mrf.mxu0
        %v2326 = vadd.f32 %v2313, %v2325
        %v2327 = vpop.f32.mrf.mxu0
        %2328 = vdwg.mxu0
        %2329 = vmatpush.bf16.msra.mxu0 %v1922
        %2330 = vmatpush.bf16.msra.mxu0 %v1921
        %2331 = vmatpush.bf16.msra.mxu0 %v1920
        %2332 = vmatpush.bf16.msra.mxu0 %v1919
        %2333 = vmatpush.bf16.msra.mxu0 %v1918
        %2334 = vmatpush.bf16.msra.mxu0 %v1917
        %2335 = vmatpush.bf16.msra.mxu0 %v1916
        %2336 = vmatpush.bf16.msra.mxu0 %v1915
        %2337 = vmatmul.bf16.gmra.mxu0 %v1057
        %v2338 = vpop.f32.mrf.mxu0
        %v2339 = vadd.f32 %v2326, %v2338
        %v2340 = vpop.f32.mrf.mxu0
        %2341 = vdwg.mxu0
        %2342 = vmatpush.bf16.msra.mxu0 %v1930
        %2343 = vmatpush.bf16.msra.mxu0 %v1929
        %2344 = vmatpush.bf16.msra.mxu0 %v1928
        %2345 = vmatpush.bf16.msra.mxu0 %v1927
        %2346 = vmatpush.bf16.msra.mxu0 %v1926
        %2347 = vmatpush.bf16.msra.mxu0 %v1925
        %2348 = vmatpush.bf16.msra.mxu0 %v1924
        %2349 = vmatpush.bf16.msra.mxu0 %v1923
        %2350 = vmatmul.bf16.gmra.mxu0 %v1058
        %v2351 = vpop.f32.mrf.mxu0
        %v2352 = vadd.f32 %v2339, %v2351
        %v2353 = vpop.f32.mrf.mxu0
        %2354 = vdwg.mxu0
        %2355 = vmatpush.bf16.msra.mxu0 %v1938
        %2356 = vmatpush.bf16.msra.mxu0 %v1937
        %2357 = vmatpush.bf16.msra.mxu0 %v1936
        %2358 = vmatpush.bf16.msra.mxu0 %v1935
        %2359 = vmatpush.bf16.msra.mxu0 %v1934
        %2360 = vmatpush.bf16.msra.mxu0 %v1933
        %2361 = vmatpush.bf16.msra.mxu0 %v1932
        %2362 = vmatpush.bf16.msra.mxu0 %v1931
        %2363 = vmatmul.bf16.gmra.mxu0 %v1059
        %v2364 = vpop.f32.mrf.mxu0
        %v2365 = vadd.f32 %v2352, %v2364
        %v2366 = vpop.f32.mrf.mxu0
        %2367 = vdwg.mxu0
        %2368 = vmatpush.bf16.msra.mxu0 %v1946
        %2369 = vmatpush.bf16.msra.mxu0 %v1945
        %2370 = vmatpush.bf16.msra.mxu0 %v1944
        %2371 = vmatpush.bf16.msra.mxu0 %v1943
        %2372 = vmatpush.bf16.msra.mxu0 %v1942
        %2373 = vmatpush.bf16.msra.mxu0 %v1941
        %2374 = vmatpush.bf16.msra.mxu0 %v1940
        %2375 = vmatpush.bf16.msra.mxu0 %v1939
        %2376 = vmatmul.bf16.gmra.mxu0 %v1060
        %v2377 = vpop.f32.mrf.mxu0
        %v2378 = vadd.f32 %v2365, %v2377
        %v2379 = vpop.f32.mrf.mxu0
        %2380 = vdwg.mxu0
        %2381 = vmatpush.bf16.msra.mxu0 %v1954
        %2382 = vmatpush.bf16.msra.mxu0 %v1953
        %2383 = vmatpush.bf16.msra.mxu0 %v1952
        %2384 = vmatpush.bf16.msra.mxu0 %v1951
        %2385 = vmatpush.bf16.msra.mxu0 %v1950
        %2386 = vmatpush.bf16.msra.mxu0 %v1949
        %2387 = vmatpush.bf16.msra.mxu0 %v1948
        %2388 = vmatpush.bf16.msra.mxu0 %v1947
        %2389 = vmatmul.bf16.gmra.mxu0 %v1061
        %v2390 = vpop.f32.mrf.mxu0
        %v2391 = vadd.f32 %v2378, %v2390
        %v2392 = vpop.f32.mrf.mxu0
        %2393 = vdwg.mxu0
        %2394 = vmatpush.bf16.msra.mxu0 %v1962
        %2395 = vmatpush.bf16.msra.mxu0 %v1961
        %2396 = vmatpush.bf16.msra.mxu0 %v1960
        %2397 = vmatpush.bf16.msra.mxu0 %v1959
        %2398 = vmatpush.bf16.msra.mxu0 %v1958
        %2399 = vmatpush.bf16.msra.mxu0 %v1957
        %2400 = vmatpush.bf16.msra.mxu0 %v1956
        %2401 = vmatpush.bf16.msra.mxu0 %v1955
        %2402 = vmatmul.bf16.gmra.mxu0 %v1062
        %v2403 = vpop.f32.mrf.mxu0
        %v2404 = vadd.f32 %v2391, %v2403
        %v2405 = vpop.f32.mrf.mxu0
        %2406 = vdwg.mxu0
        %2407 = vmatpush.bf16.msra.mxu0 %v1970
        %2408 = vmatpush.bf16.msra.mxu0 %v1969
        %2409 = vmatpush.bf16.msra.mxu0 %v1968
        %2410 = vmatpush.bf16.msra.mxu0 %v1967
        %2411 = vmatpush.bf16.msra.mxu0 %v1966
        %2412 = vmatpush.bf16.msra.mxu0 %v1965
        %2413 = vmatpush.bf16.msra.mxu0 %v1964
        %2414 = vmatpush.bf16.msra.mxu0 %v1963
        %2415 = vmatmul.bf16.gmra.mxu0 %v1063
        %v2416 = vpop.f32.mrf.mxu0
        %v2417 = vadd.f32 %v2404, %v2416
        %v2418 = vpop.f32.mrf.mxu0
        %2419 = vdwg.mxu0
        %2420 = vmatpush.bf16.msra.mxu0 %v1978
        %2421 = vmatpush.bf16.msra.mxu0 %v1977
        %2422 = vmatpush.bf16.msra.mxu0 %v1976
        %2423 = vmatpush.bf16.msra.mxu0 %v1975
        %2424 = vmatpush.bf16.msra.mxu0 %v1974
        %2425 = vmatpush.bf16.msra.mxu0 %v1973
        %2426 = vmatpush.bf16.msra.mxu0 %v1972
        %2427 = vmatpush.bf16.msra.mxu0 %v1971
        %2428 = vmatmul.bf16.gmra.mxu0 %v1064
        %v2429 = vpop.f32.mrf.mxu0
        %v2430 = vadd.f32 %v2417, %v2429
        %v2431 = vpop.f32.mrf.mxu0
        %2432 = vdwg.mxu0
        %2433 = vmatpush.bf16.msra.mxu0 %v1986
        %2434 = vmatpush.bf16.msra.mxu0 %v1985
        %2435 = vmatpush.bf16.msra.mxu0 %v1984
        %2436 = vmatpush.bf16.msra.mxu0 %v1983
        %2437 = vmatpush.bf16.msra.mxu0 %v1982
        %2438 = vmatpush.bf16.msra.mxu0 %v1981
        %2439 = vmatpush.bf16.msra.mxu0 %v1980
        %2440 = vmatpush.bf16.msra.mxu0 %v1979
        %2441 = vmatmul.bf16.gmra.mxu0 %v1065
        %v2442 = vpop.f32.mrf.mxu0
        %v2443 = vadd.f32 %v2430, %v2442
        %v2444 = vpop.f32.mrf.mxu0
        %2445 = vdwg.mxu0
        %2446 = vmatpush.bf16.msra.mxu0 %v1994
        %2447 = vmatpush.bf16.msra.mxu0 %v1993
        %2448 = vmatpush.bf16.msra.mxu0 %v1992
        %2449 = vmatpush.bf16.msra.mxu0 %v1991
        %2450 = vmatpush.bf16.msra.mxu0 %v1990
        %2451 = vmatpush.bf16.msra.mxu0 %v1989
        %2452 = vmatpush.bf16.msra.mxu0 %v1988
        %2453 = vmatpush.bf16.msra.mxu0 %v1987
        %2454 = vmatmul.bf16.gmra.mxu0 %v1066
        %v2455 = vpop.f32.mrf.mxu0
        %v2456 = vadd.f32 %v2443, %v2455
        %v2457 = vpop.f32.mrf.mxu0
        %2458 = vdwg.mxu0
        %2459 = vmatpush.bf16.msra.mxu0 %v2002
        %2460 = vmatpush.bf16.msra.mxu0 %v2001
        %2461 = vmatpush.bf16.msra.mxu0 %v2000
        %2462 = vmatpush.bf16.msra.mxu0 %v1999
        %2463 = vmatpush.bf16.msra.mxu0 %v1998
        %2464 = vmatpush.bf16.msra.mxu0 %v1997
        %2465 = vmatpush.bf16.msra.mxu0 %v1996
        %2466 = vmatpush.bf16.msra.mxu0 %v1995
        %2467 = vmatmul.bf16.gmra.mxu0 %v1067
        %v2468 = vpop.f32.mrf.mxu0
        %v2469 = vadd.f32 %v2456, %v2468
        %v2470 = vpop.f32.mrf.mxu0
        %2471 = vdwg.mxu0
        %2472 = vmatpush.bf16.msra.mxu0 %v2010
        %2473 = vmatpush.bf16.msra.mxu0 %v2009
        %2474 = vmatpush.bf16.msra.mxu0 %v2008
        %2475 = vmatpush.bf16.msra.mxu0 %v2007
        %2476 = vmatpush.bf16.msra.mxu0 %v2006
        %2477 = vmatpush.bf16.msra.mxu0 %v2005
        %2478 = vmatpush.bf16.msra.mxu0 %v2004
        %2479 = vmatpush.bf16.msra.mxu0 %v2003
        %2480 = vmatmul.bf16.gmra.mxu0 %v1068
        %v2481 = vpop.f32.mrf.mxu0
        %v2482 = vadd.f32 %v2469, %v2481
        %v2483 = vpop.f32.mrf.mxu0
        %2484 = vdwg.mxu0
        %2485 = vmatpush.bf16.msra.mxu0 %v2018
        %2486 = vmatpush.bf16.msra.mxu0 %v2017
        %2487 = vmatpush.bf16.msra.mxu0 %v2016
        %2488 = vmatpush.bf16.msra.mxu0 %v2015
        %2489 = vmatpush.bf16.msra.mxu0 %v2014
        %2490 = vmatpush.bf16.msra.mxu0 %v2013
        %2491 = vmatpush.bf16.msra.mxu0 %v2012
        %2492 = vmatpush.bf16.msra.mxu0 %v2011
        %2493 = vmatmul.bf16.gmra.mxu0 %v1069
        %v2494 = vpop.f32.mrf.mxu0
        %v2495 = vadd.f32 %v2482, %v2494
        %v2496 = vpop.f32.mrf.mxu0
        %2497 = vdwg.mxu0
        %2498 = vmatpush.bf16.msra.mxu0 %v2026
        %2499 = vmatpush.bf16.msra.mxu0 %v2025
        %2500 = vmatpush.bf16.msra.mxu0 %v2024
        %2501 = vmatpush.bf16.msra.mxu0 %v2023
        %2502 = vmatpush.bf16.msra.mxu0 %v2022
        %2503 = vmatpush.bf16.msra.mxu0 %v2021
        %2504 = vmatpush.bf16.msra.mxu0 %v2020
        %2505 = vmatpush.bf16.msra.mxu0 %v2019
        %2506 = vmatmul.bf16.gmra.mxu0 %v1070
        %v2507 = vpop.f32.mrf.mxu0
        %v2508 = vadd.f32 %v2495, %v2507
        %v2509 = vpop.f32.mrf.mxu0
        %2510 = vdwg.mxu0
        %2511 = vmatpush.bf16.msra.mxu0 %v2034
        %2512 = vmatpush.bf16.msra.mxu0 %v2033
        %2513 = vmatpush.bf16.msra.mxu0 %v2032
        %2514 = vmatpush.bf16.msra.mxu0 %v2031
        %2515 = vmatpush.bf16.msra.mxu0 %v2030
        %2516 = vmatpush.bf16.msra.mxu0 %v2029
        %2517 = vmatpush.bf16.msra.mxu0 %v2028
        %2518 = vmatpush.bf16.msra.mxu0 %v2027
        %2519 = vmatmul.bf16.gmra.mxu0 %v1071
        %v2520 = vpop.f32.mrf.mxu0
        %v2521 = vadd.f32 %v2508, %v2520
        %v2522 = vpop.f32.mrf.mxu0
        %2523 = vdwg.mxu0
        %2524 = vmatpush.bf16.msra.mxu0 %v2042
        %2525 = vmatpush.bf16.msra.mxu0 %v2041
        %2526 = vmatpush.bf16.msra.mxu0 %v2040
        %2527 = vmatpush.bf16.msra.mxu0 %v2039
        %2528 = vmatpush.bf16.msra.mxu0 %v2038
        %2529 = vmatpush.bf16.msra.mxu0 %v2037
        %2530 = vmatpush.bf16.msra.mxu0 %v2036
        %2531 = vmatpush.bf16.msra.mxu0 %v2035
        %2532 = vmatmul.bf16.gmra.mxu0 %v1072
        %v2533 = vpop.f32.mrf.mxu0
        %v2534 = vadd.f32 %v2521, %v2533
        %v2535 = vpop.f32.mrf.mxu0
        %2536 = vdwg.mxu0
        %2537 = vmatpush.bf16.msra.mxu0 %v2050
        %2538 = vmatpush.bf16.msra.mxu0 %v2049
        %2539 = vmatpush.bf16.msra.mxu0 %v2048
        %2540 = vmatpush.bf16.msra.mxu0 %v2047
        %2541 = vmatpush.bf16.msra.mxu0 %v2046
        %2542 = vmatpush.bf16.msra.mxu0 %v2045
        %2543 = vmatpush.bf16.msra.mxu0 %v2044
        %2544 = vmatpush.bf16.msra.mxu0 %v2043
        %2545 = vmatmul.bf16.gmra.mxu0 %v1073
        %v2546 = vpop.f32.mrf.mxu0
        %v2547 = vadd.f32 %v2534, %v2546
        %v2548 = vpop.f32.mrf.mxu0
        %2549 = vdwg.mxu0
        %2550 = vmatpush.bf16.msra.mxu0 %v2058
        %2551 = vmatpush.bf16.msra.mxu0 %v2057
        %2552 = vmatpush.bf16.msra.mxu0 %v2056
        %2553 = vmatpush.bf16.msra.mxu0 %v2055
        %2554 = vmatpush.bf16.msra.mxu0 %v2054
        %2555 = vmatpush.bf16.msra.mxu0 %v2053
        %2556 = vmatpush.bf16.msra.mxu0 %v2052
        %2557 = vmatpush.bf16.msra.mxu0 %v2051
        %2558 = vmatmul.bf16.gmra.mxu0 %v1074
        %v2559 = vpop.f32.mrf.mxu0
        %v2560 = vadd.f32 %v2547, %v2559
        %v2561 = vpop.f32.mrf.mxu0
        %2562 = vdwg.mxu0
        %v2563 = vlaneseq
        %v2564 = vand.u32 %v2563, 127
        %vm2565 = vcmp.lt.s32.totalorder %v2564, 5
        %v2566 = vsel %vm2565, 0.0, -1e+30
        %v2567 = vld [vmem:[%s3] sm:$0x1]
        %v2568 = vld [vmem:[%s4] sm:$0x1]
        %2569 = vadd.xlane.f32.xlu0 %v2560
        %v2570 = vpop.xlane.xlu0 %2569
        %v2571 = vrcp.pop 128.0
        %v2572 = vmul.f32 128.0, %v2571
        %v2573 = vsub.f32 1.0, %v2572
        %v2574 = vmul.f32 %v2571, %v2573
        %v2575 = vadd.f32 %v2571, %v2574
        %vm2576 = vweird.f32 %v2571
        %v2577 = vsel %vm2576, %v2571, %v2575
        %v2578 = vmul.f32 %v2570, %v2577
        %v2579 = vsub.f32 %v2560, %v2578
        %v2580 = vmul.f32 %v2579, %v2579
        %2581 = vadd.xlane.f32.xlu0 %v2580
        %v2582 = vpop.xlane.xlu0 %2581
        %v2583 = vmul.f32 %v2582, %v2577
        %v2584 = vadd.f32 %v2583, 1e-06
        %v2585 = vrsqrt.pop %v2584
        %v2586 = vmul.f32 %v2585, %v2584
        %v2587 = vmul.f32 %v2586, %v2585
        %v2588 = vmul.f32 0.5, %v2587
        %v2589 = vsub.f32 1.5, %v2588
        %v2590 = vmul.f32 %v2585, %v2589
        %vm2591 = vweird.f32 %v2584
        %vm2592 = vweird.f32 %v2585
        %vm2593 = vmor %vm2591, %vm2592
        %v2594 = vsel %vm2593, %v2585, %v2590
        %v2595 = vmul.f32 %v2579, %v2594
        %v2597 = vperm.slane %v2567, 0
        %v2599 = vmul.f32 %v2595, %v2597
        %v2601 = vperm.slane %v2568, 0
        %v2603 = vadd.f32 %v2599, %v2601
        %v2604 = vpack.c.bf16 %v2603, %v2603
        %v2605 = vld [vmem:[#allocation2] sm:$0xff]
        %v2606 = vld [vmem:[#allocation2 + $0x8] sm:$0xf]
        %v2607 = vld [vmem:[#allocation2 + $0xc] sm:$0xff]
        %v2608 = vld [vmem:[#allocation2 + $0x14] sm:$0xf]
        %v2609 = vld [vmem:[#allocation2 + $0x18] sm:$0xff]
        %v2610 = vld [vmem:[#allocation2 + $0x20] sm:$0xf]
        %v2611 = vld [vmem:[#allocation2 + $0x24] sm:$0xff]
        %v2612 = vld [vmem:[#allocation2 + $0x2c] sm:$0xf]
        %v2613 = vld [vmem:[#allocation2 + $0x30] sm:$0xff]
        %v2614 = vld [vmem:[#allocation2 + $0x38] sm:$0xf]
        %v2615 = vld [vmem:[#allocation2 + $0x3c] sm:$0xff]
        %v2616 = vld [vmem:[#allocation2 + $0x44] sm:$0xf]
        %v2617 = vld [vmem:[#allocation2 + $0x48] sm:$0xff]
        %v2618 = vld [vmem:[#allocation2 + $0x50] sm:$0xf]
        %v2619 = vld [vmem:[#allocation2 + $0x54] sm:$0xff]
        %v2620 = vld [vmem:[#allocation2 + $0x5c] sm:$0xf]
        %v2621 = vld [vmem:[#allocation2 + $0x60] sm:$0xff]
        %v2622 = vld [vmem:[#allocation2 + $0x68] sm:$0xf]
        %v2623 = vld [vmem:[#allocation2 + $0x6c] sm:$0xff]
        %v2624 = vld [vmem:[#allocation2 + $0x74] sm:$0xf]
        %v2625 = vld [vmem:[#allocation2 + $0x78] sm:$0xff]
        %v2626 = vld [vmem:[#allocation2 + $0x80] sm:$0xf]
        %v2627 = vld [vmem:[#allocation2 + $0x84] sm:$0xff]
        %v2628 = vld [vmem:[#allocation2 + $0x8c] sm:$0xf]
        %v2629 = vld [vmem:[#allocation2 + $0x90] sm:$0xff]
        %v2630 = vld [vmem:[#allocation2 + $0x98] sm:$0xf]
        %v2631 = vld [vmem:[#allocation2 + $0x9c] sm:$0xff]
        %v2632 = vld [vmem:[#allocation2 + $0xa4] sm:$0xf]
        %v2633 = vld [vmem:[#allocation2 + $0xa8] sm:$0xff]
        %v2634 = vld [vmem:[#allocation2 + $0xb0] sm:$0xf]
        %v2635 = vld [vmem:[#allocation2 + $0xb4] sm:$0xff]
        %v2636 = vld [vmem:[#allocation2 + $0xbc] sm:$0xf]
        %v2637 = vld [vmem:[%s6] sm:$0x7]
        %v2639 = vperm.slane %v2637, 0
        %v2640 = vperm.slane %v2637, 1
        %v2641 = vperm.slane %v2637, 2
        %v2677 = vunpack.c.l.b16 %v2605
        %v2678 = vunpack.c.h.b16 %v2605
        %v2679 = vunpack.c.l.b16 %v2606
        %v2680 = vunpack.c.l.b16 %v2607
        %v2681 = vunpack.c.h.b16 %v2607
        %v2682 = vunpack.c.l.b16 %v2608
        %v2683 = vunpack.c.l.b16 %v2609
        %v2684 = vunpack.c.h.b16 %v2609
        %v2685 = vunpack.c.l.b16 %v2610
        %v2686 = vunpack.c.l.b16 %v2611
        %v2687 = vunpack.c.h.b16 %v2611
        %v2688 = vunpack.c.l.b16 %v2612
        %v2689 = vunpack.c.l.b16 %v2613
        %v2690 = vunpack.c.h.b16 %v2613
        %v2691 = vunpack.c.l.b16 %v2614
        %v2692 = vunpack.c.l.b16 %v2615
        %v2693 = vunpack.c.h.b16 %v2615
        %v2694 = vunpack.c.l.b16 %v2616
        %v2695 = vunpack.c.l.b16 %v2617
        %v2696 = vunpack.c.h.b16 %v2617
        %v2697 = vunpack.c.l.b16 %v2618
        %v2698 = vunpack.c.l.b16 %v2619
        %v2699 = vunpack.c.h.b16 %v2619
        %v2700 = vunpack.c.l.b16 %v2620
        %v2701 = vunpack.c.l.b16 %v2621
        %v2702 = vunpack.c.h.b16 %v2621
        %v2703 = vunpack.c.l.b16 %v2622
        %v2704 = vunpack.c.l.b16 %v2623
        %v2705 = vunpack.c.h.b16 %v2623
        %v2706 = vunpack.c.l.b16 %v2624
        %v2707 = vunpack.c.l.b16 %v2625
        %v2708 = vunpack.c.h.b16 %v2625
        %v2709 = vunpack.c.l.b16 %v2626
        %v2710 = vunpack.c.l.b16 %v2627
        %v2711 = vunpack.c.h.b16 %v2627
        %v2712 = vunpack.c.l.b16 %v2628
        %v2713 = vunpack.c.l.b16 %v2629
        %v2714 = vunpack.c.h.b16 %v2629
        %v2715 = vunpack.c.l.b16 %v2630
        %v2716 = vunpack.c.l.b16 %v2631
        %v2717 = vunpack.c.h.b16 %v2631
        %v2718 = vunpack.c.l.b16 %v2632
        %v2719 = vunpack.c.l.b16 %v2633
        %v2720 = vunpack.c.h.b16 %v2633
        %v2721 = vunpack.c.l.b16 %v2634
        %v2722 = vunpack.c.l.b16 %v2635
        %v2723 = vunpack.c.h.b16 %v2635
        %v2724 = vunpack.c.l.b16 %v2636
        %v2725 = vpack.c.b16 %v2680, %v2677
        %v2726 = vpack.c.b16 %v2681, %v2678
        %v2727 = vpack.c.b16 %v2682, %v2679
        %v2728 = vpack.c.b16 %v2686, %v2683
        %v2729 = vpack.c.b16 %v2687, %v2684
        %v2730 = vpack.c.b16 %v2688, %v2685
        %v2731 = vpack.c.b16 %v2692, %v2689
        %v2732 = vpack.c.b16 %v2693, %v2690
        %v2733 = vpack.c.b16 %v2694, %v2691
        %v2734 = vpack.c.b16 %v2698, %v2695
        %v2735 = vpack.c.b16 %v2699, %v2696
        %v2736 = vpack.c.b16 %v2700, %v2697
        %v2737 = vpack.c.b16 %v2704, %v2701
        %v2738 = vpack.c.b16 %v2705, %v2702
        %v2739 = vpack.c.b16 %v2706, %v2703
        %v2740 = vpack.c.b16 %v2710, %v2707
        %v2741 = vpack.c.b16 %v2711, %v2708
        %v2742 = vpack.c.b16 %v2712, %v2709
        %v2743 = vpack.c.b16 %v2716, %v2713
        %v2744 = vpack.c.b16 %v2717, %v2714
        %v2745 = vpack.c.b16 %v2718, %v2715
        %v2746 = vpack.c.b16 %v2722, %v2719
        %v2747 = vpack.c.b16 %v2723, %v2720
        %v2748 = vpack.c.b16 %v2724, %v2721
        %2773 = vmatpush.bf16.msra.mxu0 %v2746
        %2774 = vmatpush.bf16.msra.mxu0 %v2743
        %2775 = vmatpush.bf16.msra.mxu0 %v2740
        %2776 = vmatpush.bf16.msra.mxu0 %v2737
        %2777 = vmatpush.bf16.msra.mxu0 %v2734
        %2778 = vmatpush.bf16.msra.mxu0 %v2731
        %2779 = vmatpush.bf16.msra.mxu0 %v2728
        %2780 = vmatpush.bf16.msra.mxu0 %v2725
        %2781 = vmatmul.bf16.gmra.mxu0 %v2604
        %v2782 = vpop.f32.mrf.mxu0
        %v2783 = vadd.f32 %v2639, %v2782
        %v2784 = vpop.f32.mrf.mxu0
        %2785 = vdwg.mxu0
        %2786 = vmatpush.bf16.msra.mxu0 %v2747
        %2787 = vmatpush.bf16.msra.mxu0 %v2744
        %2788 = vmatpush.bf16.msra.mxu0 %v2741
        %2789 = vmatpush.bf16.msra.mxu0 %v2738
        %2790 = vmatpush.bf16.msra.mxu0 %v2735
        %2791 = vmatpush.bf16.msra.mxu0 %v2732
        %2792 = vmatpush.bf16.msra.mxu0 %v2729
        %2793 = vmatpush.bf16.msra.mxu0 %v2726
        %2794 = vmatmul.bf16.gmra.mxu0 %v2604
        %v2795 = vpop.f32.mrf.mxu0
        %v2796 = vadd.f32 %v2640, %v2795
        %v2797 = vpop.f32.mrf.mxu0
        %2798 = vdwg.mxu0
        %2799 = vmatpush.bf16.msra.mxu0 %v2748
        %2800 = vmatpush.bf16.msra.mxu0 %v2745
        %2801 = vmatpush.bf16.msra.mxu0 %v2742
        %2802 = vmatpush.bf16.msra.mxu0 %v2739
        %2803 = vmatpush.bf16.msra.mxu0 %v2736
        %2804 = vmatpush.bf16.msra.mxu0 %v2733
        %2805 = vmatpush.bf16.msra.mxu0 %v2730
        %2806 = vmatpush.bf16.msra.mxu0 %v2727
        %2807 = vmatmul.bf16.gmra.mxu0 %v2604
        %v2808 = vpop.f32.mrf.mxu0
        %v2809 = vadd.f32 %v2641, %v2808
        %v2810 = vpop.f32.mrf.mxu0
        %2811 = vdwg.mxu0
        %v2812 = vld [vmem:[%s7] sm:$0xf]
        %v2813 = vld [vmem:[%s7 + $0x4] sm:$0xf]
        %v2814 = vld [vmem:[%s7 + $0x8] sm:$0xf]
        %v2815 = vld [vmem:[%s7 + $0xc] sm:$0xf]
        %v2816 = vld [vmem:[%s7 + $0x10] sm:$0xf]
        %v2817 = vld [vmem:[%s7 + $0x14] sm:$0xf]
        %v2818 = vld [vmem:[%s7 + $0x18] sm:$0xf]
        %v2819 = vld [vmem:[%s7 + $0x1c] sm:$0xf]
        %v2820 = vld [vmem:[%s7 + $0x20] sm:$0xf]
        %v2821 = vld [vmem:[%s7 + $0x24] sm:$0xf]
        %v2822 = vld [vmem:[%s7 + $0x28] sm:$0xf]
        %v2823 = vld [vmem:[%s7 + $0x2c] sm:$0xf]
        %v2824 = vld [vmem:[%s7 + $0x30] sm:$0xf]
        %v2825 = vld [vmem:[%s7 + $0x34] sm:$0xf]
        %v2826 = vld [vmem:[%s7 + $0x38] sm:$0xf]
        %v2827 = vld [vmem:[%s7 + $0x3c] sm:$0xf]
        %v2828 = vmul.f32 %v2783, 0.17677669
        %v2829 = vpack.c.bf16 %v2828, %v2828
        %v2830 = vpack.c.bf16 %v2796, %v2796
        %v2831 = vpack.c.bf16 %v2809, %v2809
        %vm2832 = vcmask 261120
        %v2834 = vsel %vm2832, %v2829, 0
        %v2837 = vsel %vm2832, %v2830, 0
        %2839 = vmatpush.bf16.xpose.msra.mxu0 0
        %2840 = vmatpush.bf16.xpose.msra.mxu0 0
        %2841 = vmatpush.bf16.xpose.msra.mxu0 0
        %2842 = vmatpush.bf16.xpose.msra.mxu0 0
        %2843 = vmatpush.bf16.xpose.msra.mxu0 0
        %2844 = vmatpush.bf16.xpose.msra.mxu0 0
        %2845 = vmatpush.bf16.xpose.msra.mxu0 0
        %2846 = vmatpush.bf16.xpose.msra.mxu0 %v2837
        %2847 = vmatmul.bf16.gmra.mxu0 %v2834
        %v2848 = vpop.f32.mrf.mxu0
        %v2849 = vadd.f32 %v2566, %v2848
        %v2850 = vpop.f32.mrf.mxu0
        %2851 = vdwg.mxu0
        %vm2852 = vcmask 64512
        %v2853 = vsel %vm2852, %v2849, -inf
        %2854 = vmax.xlane.f32.xlu0 %v2853
        %v2855 = vpop.xlane.xlu0 %2854
        %v2856 = vsub.f32 %v2849, %v2855
        %v2857 = vmul.f32 %v2856, 1.442695
        %v2858 = vpow.pop %v2857
        %v2859 = vsel %vm2852, %v2858, 0.0
        %2860 = vadd.xlane.f32.xlu0 %v2859
        %v2861 = vpop.xlane.xlu0 %2860
        %v2862 = vrcp.pop %v2861
        %v2863 = vmul.f32 %v2858, %v2862
        %v2864 = vpack.c.bf16 %v2863, %v2863
        %v2866 = vsel %vm2852, %v2864, 0
        %vm2868 = vcmask 1043456
        %v2870 = vsel %vm2868, %v2831, 0
        %2872 = vmatpush.bf16.msra.mxu0 0
        %2873 = vmatpush.bf16.msra.mxu0 0
        %2874 = vmatpush.bf16.msra.mxu0 0
        %2875 = vmatpush.bf16.msra.mxu0 0
        %2876 = vmatpush.bf16.msra.mxu0 0
        %2877 = vmatpush.bf16.msra.mxu0 0
        %2878 = vmatpush.bf16.msra.mxu0 0
        %2879 = vmatpush.bf16.msra.mxu0 %v2870
        %2880 = vmatmul.bf16.gmra.mxu0 %v2866
        %v2881 = vpop.f32.mrf.mxu0
        %v2882 = vadd.f32 0.0, %v2881
        %v2883 = vpop.f32.mrf.mxu0
        %2884 = vdwg.mxu0
        %v2885 = vpack.c.bf16 %v2882, %v2882
        %2887 = vrot.lane.b32.xlu0 %v2829, 96
        %v2888 = vpop.permute.xlu0 %2887
        %2890 = vrot.lane.b32.xlu0 %v2830, 96
        %v2891 = vpop.permute.xlu0 %2890
        %v2893 = vsel %vm2832, %v2888, 0
        %v2896 = vsel %vm2832, %v2891, 0
        %2898 = vmatpush.bf16.xpose.msra.mxu0 0
        %2899 = vmatpush.bf16.xpose.msra.mxu0 0
        %2900 = vmatpush.bf16.xpose.msra.mxu0 0
        %2901 = vmatpush.bf16.xpose.msra.mxu0 0
        %2902 = vmatpush.bf16.xpose.msra.mxu0 0
        %2903 = vmatpush.bf16.xpose.msra.mxu0 0
        %2904 = vmatpush.bf16.xpose.msra.mxu0 0
        %2905 = vmatpush.bf16.xpose.msra.mxu0 %v2896
        %2906 = vmatmul.bf16.gmra.mxu0 %v2893
        %v2907 = vpop.f32.mrf.mxu0
        %v2908 = vadd.f32 %v2566, %v2907
        %v2909 = vpop.f32.mrf.mxu0
        %2910 = vdwg.mxu0
        %v2911 = vsel %vm2852, %v2908, -inf
        %2912 = vmax.xlane.f32.xlu0 %v2911
        %v2913 = vpop.xlane.xlu0 %2912
        %v2914 = vsub.f32 %v2908, %v2913
        %v2915 = vmul.f32 %v2914, 1.442695
        %v2916 = vpow.pop %v2915
        %v2917 = vsel %vm2852, %v2916, 0.0
        %2918 = vadd.xlane.f32.xlu0 %v2917
        %v2919 = vpop.xlane.xlu0 %2918
        %v2920 = vrcp.pop %v2919
        %v2921 = vmul.f32 %v2916, %v2920
        %v2922 = vpack.c.bf16 %v2921, %v2921
        %2924 = vrot.lane.b32.xlu0 %v2831, 96
        %v2925 = vpop.permute.xlu0 %2924
        %v2927 = vsel %vm2852, %v2922, 0
        %v2930 = vsel %vm2868, %v2925, 0
        %2932 = vmatpush.bf16.msra.mxu0 0
        %2933 = vmatpush.bf16.msra.mxu0 0
        %2934 = vmatpush.bf16.msra.mxu0 0
        %2935 = vmatpush.bf16.msra.mxu0 0
        %2936 = vmatpush.bf16.msra.mxu0 0
        %2937 = vmatpush.bf16.msra.mxu0 0
        %2938 = vmatpush.bf16.msra.mxu0 0
        %2939 = vmatpush.bf16.msra.mxu0 %v2930
        %2940 = vmatmul.bf16.gmra.mxu0 %v2927
        %v2941 = vpop.f32.mrf.mxu0
        %v2942 = vadd.f32 0.0, %v2941
        %v2943 = vpop.f32.mrf.mxu0
        %2944 = vdwg.mxu0
        %v2945 = vpack.c.bf16 %v2942, %v2942
        %v2950 = vunpack.c.l.b16 %v2816
        %v2951 = vunpack.c.l.b16 %v2817
        %v2952 = vunpack.c.l.b16 %v2818
        %v2953 = vunpack.c.l.b16 %v2819
        %v2954 = vpack.c.b16 %v2951, %v2950
        %v2955 = vpack.c.b16 %v2953, %v2952
        %v2959 = vsel %vm2832, %v2945, 0
        %2961 = vmatpush.bf16.msra.mxu0 0
        %2962 = vmatpush.bf16.msra.mxu0 0
        %2963 = vmatpush.bf16.msra.mxu0 0
        %2964 = vmatpush.bf16.msra.mxu0 0
        %2965 = vmatpush.bf16.msra.mxu0 0
        %2966 = vmatpush.bf16.msra.mxu0 0
        %2967 = vmatpush.bf16.msra.mxu0 %v2955
        %2968 = vmatpush.bf16.msra.mxu0 %v2954
        %2969 = vmatmul.bf16.gmra.mxu0 %v2959
        %v2970 = vpop.f32.mrf.mxu0
        %v2971 = vadd.f32 0.0, %v2970
        %v2972 = vpop.f32.mrf.mxu0
        %2973 = vdwg.mxu0
        %v2978 = vunpack.c.l.b16 %v2812
        %v2979 = vunpack.c.l.b16 %v2813
        %v2980 = vunpack.c.l.b16 %v2814
        %v2981 = vunpack.c.l.b16 %v2815
        %v2982 = vpack.c.b16 %v2979, %v2978
        %v2983 = vpack.c.b16 %v2981, %v2980
        %v2987 = vsel %vm2832, %v2885, 0
        %2989 = vmatpush.bf16.msra.mxu0 0
        %2990 = vmatpush.bf16.msra.mxu0 0
        %2991 = vmatpush.bf16.msra.mxu0 0
        %2992 = vmatpush.bf16.msra.mxu0 0
        %2993 = vmatpush.bf16.msra.mxu0 0
        %2994 = vmatpush.bf16.msra.mxu0 0
        %2995 = vmatpush.bf16.msra.mxu0 %v2983
        %2996 = vmatpush.bf16.msra.mxu0 %v2982
        %2997 = vmatmul.bf16.gmra.mxu0 %v2987
        %v2998 = vpop.f32.mrf.mxu0
        %v2999 = vadd.f32 %v2971, %v2998
        %v3000 = vpop.f32.mrf.mxu0
        %3001 = vdwg.mxu0
        %3002 = vrot.lane.b32.xlu0 %v2829, 64
        %v3003 = vpop.permute.xlu0 %3002
        %3004 = vrot.lane.b32.xlu0 %v2830, 64
        %v3005 = vpop.permute.xlu0 %3004
        %v3007 = vsel %vm2832, %v3003, 0
        %v3010 = vsel %vm2832, %v3005, 0
        %3012 = vmatpush.bf16.xpose.msra.mxu0 0
        %3013 = vmatpush.bf16.xpose.msra.mxu0 0
        %3014 = vmatpush.bf16.xpose.msra.mxu0 0
        %3015 = vmatpush.bf16.xpose.msra.mxu0 0
        %3016 = vmatpush.bf16.xpose.msra.mxu0 0
        %3017 = vmatpush.bf16.xpose.msra.mxu0 0
        %3018 = vmatpush.bf16.xpose.msra.mxu0 0
        %3019 = vmatpush.bf16.xpose.msra.mxu0 %v3010
        %3020 = vmatmul.bf16.gmra.mxu0 %v3007
        %v3021 = vpop.f32.mrf.mxu0
        %v3022 = vadd.f32 %v2566, %v3021
        %v3023 = vpop.f32.mrf.mxu0
        %3024 = vdwg.mxu0
        %v3025 = vsel %vm2852, %v3022, -inf
        %3026 = vmax.xlane.f32.xlu0 %v3025
        %v3027 = vpop.xlane.xlu0 %3026
        %v3028 = vsub.f32 %v3022, %v3027
        %v3029 = vmul.f32 %v3028, 1.442695
        %v3030 = vpow.pop %v3029
        %v3031 = vsel %vm2852, %v3030, 0.0
        %3032 = vadd.xlane.f32.xlu0 %v3031
        %v3033 = vpop.xlane.xlu0 %3032
        %v3034 = vrcp.pop %v3033
        %v3035 = vmul.f32 %v3030, %v3034
        %v3036 = vpack.c.bf16 %v3035, %v3035
        %3037 = vrot.lane.b32.xlu0 %v2831, 64
        %v3038 = vpop.permute.xlu0 %3037
        %v3040 = vsel %vm2852, %v3036, 0
        %v3043 = vsel %vm2868, %v3038, 0
        %3045 = vmatpush.bf16.msra.mxu0 0
        %3046 = vmatpush.bf16.msra.mxu0 0
        %3047 = vmatpush.bf16.msra.mxu0 0
        %3048 = vmatpush.bf16.msra.mxu0 0
        %3049 = vmatpush.bf16.msra.mxu0 0
        %3050 = vmatpush.bf16.msra.mxu0 0
        %3051 = vmatpush.bf16.msra.mxu0 0
        %3052 = vmatpush.bf16.msra.mxu0 %v3043
        %3053 = vmatmul.bf16.gmra.mxu0 %v3040
        %v3054 = vpop.f32.mrf.mxu0
        %v3055 = vadd.f32 0.0, %v3054
        %v3056 = vpop.f32.mrf.mxu0
        %3057 = vdwg.mxu0
        %v3058 = vpack.c.bf16 %v3055, %v3055
        %v3063 = vunpack.c.l.b16 %v2820
        %v3064 = vunpack.c.l.b16 %v2821
        %v3065 = vunpack.c.l.b16 %v2822
        %v3066 = vunpack.c.l.b16 %v2823
        %v3067 = vpack.c.b16 %v3064, %v3063
        %v3068 = vpack.c.b16 %v3066, %v3065
        %v3072 = vsel %vm2832, %v3058, 0
        %3074 = vmatpush.bf16.msra.mxu0 0
        %3075 = vmatpush.bf16.msra.mxu0 0
        %3076 = vmatpush.bf16.msra.mxu0 0
        %3077 = vmatpush.bf16.msra.mxu0 0
        %3078 = vmatpush.bf16.msra.mxu0 0
        %3079 = vmatpush.bf16.msra.mxu0 0
        %3080 = vmatpush.bf16.msra.mxu0 %v3068
        %3081 = vmatpush.bf16.msra.mxu0 %v3067
        %3082 = vmatmul.bf16.gmra.mxu0 %v3072
        %v3083 = vpop.f32.mrf.mxu0
        %v3084 = vadd.f32 0.0, %v3083
        %v3085 = vpop.f32.mrf.mxu0
        %3086 = vdwg.mxu0
        %v3087 = vadd.f32 %v2999, %v3084
        %3088 = vrot.lane.b32.xlu0 %v2829, 32
        %v3089 = vpop.permute.xlu0 %3088
        %3090 = vrot.lane.b32.xlu0 %v2830, 32
        %v3091 = vpop.permute.xlu0 %3090
        %v3093 = vsel %vm2832, %v3089, 0
        %v3096 = vsel %vm2832, %v3091, 0
        %3098 = vmatpush.bf16.xpose.msra.mxu0 0
        %3099 = vmatpush.bf16.xpose.msra.mxu0 0
        %3100 = vmatpush.bf16.xpose.msra.mxu0 0
        %3101 = vmatpush.bf16.xpose.msra.mxu0 0
        %3102 = vmatpush.bf16.xpose.msra.mxu0 0
        %3103 = vmatpush.bf16.xpose.msra.mxu0 0
        %3104 = vmatpush.bf16.xpose.msra.mxu0 0
        %3105 = vmatpush.bf16.xpose.msra.mxu0 %v3096
        %3106 = vmatmul.bf16.gmra.mxu0 %v3093
        %v3107 = vpop.f32.mrf.mxu0
        %v3108 = vadd.f32 %v2566, %v3107
        %v3109 = vpop.f32.mrf.mxu0
        %3110 = vdwg.mxu0
        %v3111 = vsel %vm2852, %v3108, -inf
        %3112 = vmax.xlane.f32.xlu0 %v3111
        %v3113 = vpop.xlane.xlu0 %3112
        %v3114 = vsub.f32 %v3108, %v3113
        %v3115 = vmul.f32 %v3114, 1.442695
        %v3116 = vpow.pop %v3115
        %v3117 = vsel %vm2852, %v3116, 0.0
        %3118 = vadd.xlane.f32.xlu0 %v3117
        %v3119 = vpop.xlane.xlu0 %3118
        %v3120 = vrcp.pop %v3119
        %v3121 = vmul.f32 %v3116, %v3120
        %v3122 = vpack.c.bf16 %v3121, %v3121
        %3123 = vrot.lane.b32.xlu0 %v2831, 32
        %v3124 = vpop.permute.xlu0 %3123
        %v3126 = vsel %vm2852, %v3122, 0
        %v3129 = vsel %vm2868, %v3124, 0
        %3131 = vmatpush.bf16.msra.mxu0 0
        %3132 = vmatpush.bf16.msra.mxu0 0
        %3133 = vmatpush.bf16.msra.mxu0 0
        %3134 = vmatpush.bf16.msra.mxu0 0
        %3135 = vmatpush.bf16.msra.mxu0 0
        %3136 = vmatpush.bf16.msra.mxu0 0
        %3137 = vmatpush.bf16.msra.mxu0 0
        %3138 = vmatpush.bf16.msra.mxu0 %v3129
        %3139 = vmatmul.bf16.gmra.mxu0 %v3126
        %v3140 = vpop.f32.mrf.mxu0
        %v3141 = vadd.f32 0.0, %v3140
        %v3142 = vpop.f32.mrf.mxu0
        %3143 = vdwg.mxu0
        %v3144 = vpack.c.bf16 %v3141, %v3141
        %v3149 = vunpack.c.l.b16 %v2824
        %v3150 = vunpack.c.l.b16 %v2825
        %v3151 = vunpack.c.l.b16 %v2826
        %v3152 = vunpack.c.l.b16 %v2827
        %v3153 = vpack.c.b16 %v3150, %v3149
        %v3154 = vpack.c.b16 %v3152, %v3151
        %v3158 = vsel %vm2832, %v3144, 0
        %3160 = vmatpush.bf16.msra.mxu0 0
        %3161 = vmatpush.bf16.msra.mxu0 0
        %3162 = vmatpush.bf16.msra.mxu0 0
        %3163 = vmatpush.bf16.msra.mxu0 0
        %3164 = vmatpush.bf16.msra.mxu0 0
        %3165 = vmatpush.bf16.msra.mxu0 0
        %3166 = vmatpush.bf16.msra.mxu0 %v3154
        %3167 = vmatpush.bf16.msra.mxu0 %v3153
        %3168 = vmatmul.bf16.gmra.mxu0 %v3158
        %v3169 = vpop.f32.mrf.mxu0
        %v3170 = vadd.f32 0.0, %v3169
        %v3171 = vpop.f32.mrf.mxu0
        %3172 = vdwg.mxu0
        %v3173 = vadd.f32 %v3087, %v3170
        %v3174 = vadd.f32 %v2560, %v3173
        %v3175 = vld [vmem:[%s8] sm:$0x1]
        %v3177 = vperm.slane %v3175, 0
        %v3179 = vadd.f32 %v3174, %v3177
        %v3180 = vld [vmem:[%s9] sm:$0x1]
        %v3181 = vld [vmem:[%s10] sm:$0x1]
        %3182 = vadd.xlane.f32.xlu0 %v3179
        %v3183 = vpop.xlane.xlu0 %3182
        %v3184 = vmul.f32 %v3183, %v2577
        %v3185 = vsub.f32 %v3179, %v3184
        %v3186 = vmul.f32 %v3185, %v3185
        %3187 = vadd.xlane.f32.xlu0 %v3186
        %v3188 = vpop.xlane.xlu0 %3187
        %v3189 = vmul.f32 %v3188, %v2577
        %v3190 = vadd.f32 %v3189, 1e-06
        %v3191 = vrsqrt.pop %v3190
        %v3192 = vmul.f32 %v3191, %v3190
        %v3193 = vmul.f32 %v3192, %v3191
        %v3194 = vmul.f32 0.5, %v3193
        %v3195 = vsub.f32 1.5, %v3194
        %v3196 = vmul.f32 %v3191, %v3195
        %vm3197 = vweird.f32 %v3190
        %vm3198 = vweird.f32 %v3191
        %vm3199 = vmor %vm3197, %vm3198
        %v3200 = vsel %vm3199, %v3191, %v3196
        %v3201 = vmul.f32 %v3185, %v3200
        %v3203 = vperm.slane %v3180, 0
        %v3205 = vmul.f32 %v3201, %v3203
        %v3207 = vperm.slane %v3181, 0
        %v3209 = vadd.f32 %v3205, %v3207
        %v3210 = vpack.c.bf16 %v3209, %v3209
        %v3211 = vld [vmem:[%s11] sm:$0xff]
        %v3212 = vld [vmem:[%s11 + $0x8] sm:$0xff]
        %v3213 = vld [vmem:[%s11 + $0x10] sm:$0xff]
        %v3214 = vld [vmem:[%s11 + $0x18] sm:$0xff]
        %v3215 = vld [vmem:[%s11 + $0x20] sm:$0xff]
        %v3216 = vld [vmem:[%s11 + $0x28] sm:$0xff]
        %v3217 = vld [vmem:[%s11 + $0x30] sm:$0xff]
        %v3218 = vld [vmem:[%s11 + $0x38] sm:$0xff]
        %v3219 = vld [vmem:[%s11 + $0x40] sm:$0xff]
        %v3220 = vld [vmem:[%s11 + $0x48] sm:$0xff]
        %v3221 = vld [vmem:[%s11 + $0x50] sm:$0xff]
        %v3222 = vld [vmem:[%s11 + $0x58] sm:$0xff]
        %v3223 = vld [vmem:[%s11 + $0x60] sm:$0xff]
        %v3224 = vld [vmem:[%s11 + $0x68] sm:$0xff]
        %v3225 = vld [vmem:[%s11 + $0x70] sm:$0xff]
        %v3226 = vld [vmem:[%s11 + $0x78] sm:$0xff]
        %v3227 = vld [vmem:[%s11 + $0x80] sm:$0xff]
        %v3228 = vld [vmem:[%s11 + $0x88] sm:$0xff]
        %v3229 = vld [vmem:[%s11 + $0x90] sm:$0xff]
        %v3230 = vld [vmem:[%s11 + $0x98] sm:$0xff]
        %v3231 = vld [vmem:[%s11 + $0xa0] sm:$0xff]
        %v3232 = vld [vmem:[%s11 + $0xa8] sm:$0xff]
        %v3233 = vld [vmem:[%s11 + $0xb0] sm:$0xff]
        %v3234 = vld [vmem:[%s11 + $0xb8] sm:$0xff]
        %v3235 = vld [vmem:[%s11 + $0xc0] sm:$0xff]
        %v3236 = vld [vmem:[%s11 + $0xc8] sm:$0xff]
        %v3237 = vld [vmem:[%s11 + $0xd0] sm:$0xff]
        %v3238 = vld [vmem:[%s11 + $0xd8] sm:$0xff]
        %v3239 = vld [vmem:[%s11 + $0xe0] sm:$0xff]
        %v3240 = vld [vmem:[%s11 + $0xe8] sm:$0xff]
        %v3241 = vld [vmem:[%s11 + $0xf0] sm:$0xff]
        %v3242 = vld [vmem:[%s11 + $0xf8] sm:$0xff]
        %v3243 = vld [vmem:[%s12] sm:$0xf]
        %v3245 = vperm.slane %v3243, 0
        %v3246 = vperm.slane %v3243, 1
        %v3247 = vperm.slane %v3243, 2
        %v3248 = vperm.slane %v3243, 3
        %v3285 = vunpack.c.l.b16 %v3211
        %v3286 = vunpack.c.h.b16 %v3211
        %v3287 = vunpack.c.l.b16 %v3212
        %v3288 = vunpack.c.h.b16 %v3212
        %v3289 = vunpack.c.l.b16 %v3213
        %v3290 = vunpack.c.h.b16 %v3213
        %v3291 = vunpack.c.l.b16 %v3214
        %v3292 = vunpack.c.h.b16 %v3214
        %v3293 = vunpack.c.l.b16 %v3215
        %v3294 = vunpack.c.h.b16 %v3215
        %v3295 = vunpack.c.l.b16 %v3216
        %v3296 = vunpack.c.h.b16 %v3216
        %v3297 = vunpack.c.l.b16 %v3217
        %v3298 = vunpack.c.h.b16 %v3217
        %v3299 = vunpack.c.l.b16 %v3218
        %v3300 = vunpack.c.h.b16 %v3218
        %v3301 = vunpack.c.l.b16 %v3219
        %v3302 = vunpack.c.h.b16 %v3219
        %v3303 = vunpack.c.l.b16 %v3220
        %v3304 = vunpack.c.h.b16 %v3220
        %v3305 = vunpack.c.l.b16 %v3221
        %v3306 = vunpack.c.h.b16 %v3221
        %v3307 = vunpack.c.l.b16 %v3222
        %v3308 = vunpack.c.h.b16 %v3222
        %v3309 = vunpack.c.l.b16 %v3223
        %v3310 = vunpack.c.h.b16 %v3223
        %v3311 = vunpack.c.l.b16 %v3224
        %v3312 = vunpack.c.h.b16 %v3224
        %v3313 = vunpack.c.l.b16 %v3225
        %v3314 = vunpack.c.h.b16 %v3225
        %v3315 = vunpack.c.l.b16 %v3226
        %v3316 = vunpack.c.h.b16 %v3226
        %v3317 = vunpack.c.l.b16 %v3227
        %v3318 = vunpack.c.h.b16 %v3227
        %v3319 = vunpack.c.l.b16 %v3228
        %v3320 = vunpack.c.h.b16 %v3228
        %v3321 = vunpack.c.l.b16 %v3229
        %v3322 = vunpack.c.h.b16 %v3229
        %v3323 = vunpack.c.l.b16 %v3230
        %v3324 = vunpack.c.h.b16 %v3230
        %v3325 = vunpack.c.l.b16 %v3231
        %v3326 = vunpack.c.h.b16 %v3231
        %v3327 = vunpack.c.l.b16 %v3232
        %v3328 = vunpack.c.h.b16 %v3232
        %v3329 = vunpack.c.l.b16 %v3233
        %v3330 = vunpack.c.h.b16 %v3233
        %v3331 = vunpack.c.l.b16 %v3234
        %v3332 = vunpack.c.h.b16 %v3234
        %v3333 = vunpack.c.l.b16 %v3235
        %v3334 = vunpack.c.h.b16 %v3235
        %v3335 = vunpack.c.l.b16 %v3236
        %v3336 = vunpack.c.h.b16 %v3236
        %v3337 = vunpack.c.l.b16 %v3237
        %v3338 = vunpack.c.h.b16 %v3237
        %v3339 = vunpack.c.l.b16 %v3238
        %v3340 = vunpack.c.h.b16 %v3238
        %v3341 = vunpack.c.l.b16 %v3239
        %v3342 = vunpack.c.h.b16 %v3239
        %v3343 = vunpack.c.l.b16 %v3240
        %v3344 = vunpack.c.h.b16 %v3240
        %v3345 = vunpack.c.l.b16 %v3241
        %v3346 = vunpack.c.h.b16 %v3241
        %v3347 = vunpack.c.l.b16 %v3242
        %v3348 = vunpack.c.h.b16 %v3242
        %v3349 = vpack.c.b16 %v3289, %v3285
        %v3350 = vpack.c.b16 %v3290, %v3286
        %v3351 = vpack.c.b16 %v3291, %v3287
        %v3352 = vpack.c.b16 %v3292, %v3288
        %v3353 = vpack.c.b16 %v3297, %v3293
        %v3354 = vpack.c.b16 %v3298, %v3294
        %v3355 = vpack.c.b16 %v3299, %v3295
        %v3356 = vpack.c.b16 %v3300, %v3296
        %v3357 = vpack.c.b16 %v3305, %v3301
        %v3358 = vpack.c.b16 %v3306, %v3302
        %v3359 = vpack.c.b16 %v3307, %v3303
        %v3360 = vpack.c.b16 %v3308, %v3304
        %v3361 = vpack.c.b16 %v3313, %v3309
        %v3362 = vpack.c.b16 %v3314, %v3310
        %v3363 = vpack.c.b16 %v3315, %v3311
        %v3364 = vpack.c.b16 %v3316, %v3312
        %v3365 = vpack.c.b16 %v3321, %v3317
        %v3366 = vpack.c.b16 %v3322, %v3318
        %v3367 = vpack.c.b16 %v3323, %v3319
        %v3368 = vpack.c.b16 %v3324, %v3320
        %v3369 = vpack.c.b16 %v3329, %v3325
        %v3370 = vpack.c.b16 %v3330, %v3326
        %v3371 = vpack.c.b16 %v3331, %v3327
        %v3372 = vpack.c.b16 %v3332, %v3328
        %v3373 = vpack.c.b16 %v3337, %v3333
        %v3374 = vpack.c.b16 %v3338, %v3334
        %v3375 = vpack.c.b16 %v3339, %v3335
        %v3376 = vpack.c.b16 %v3340, %v3336
        %v3377 = vpack.c.b16 %v3345, %v3341
        %v3378 = vpack.c.b16 %v3346, %v3342
        %v3379 = vpack.c.b16 %v3347, %v3343
        %v3380 = vpack.c.b16 %v3348, %v3344
        %3413 = vmatpush.bf16.msra.mxu0 %v3377
        %3414 = vmatpush.bf16.msra.mxu0 %v3373
        %3415 = vmatpush.bf16.msra.mxu0 %v3369
        %3416 = vmatpush.bf16.msra.mxu0 %v3365
        %3417 = vmatpush.bf16.msra.mxu0 %v3361
        %3418 = vmatpush.bf16.msra.mxu0 %v3357
        %3419 = vmatpush.bf16.msra.mxu0 %v3353
        %3420 = vmatpush.bf16.msra.mxu0 %v3349
        %3421 = vmatmul.bf16.gmra.mxu0 %v3210
        %v3422 = vpop.f32.mrf.mxu0
        %v3423 = vadd.f32 %v3245, %v3422
        %v3424 = vpop.f32.mrf.mxu0
        %3425 = vdwg.mxu0
        %3426 = vmatpush.bf16.msra.mxu0 %v3378
        %3427 = vmatpush.bf16.msra.mxu0 %v3374
        %3428 = vmatpush.bf16.msra.mxu0 %v3370
        %3429 = vmatpush.bf16.msra.mxu0 %v3366
        %3430 = vmatpush.bf16.msra.mxu0 %v3362
        %3431 = vmatpush.bf16.msra.mxu0 %v3358
        %3432 = vmatpush.bf16.msra.mxu0 %v3354
        %3433 = vmatpush.bf16.msra.mxu0 %v3350
        %3434 = vmatmul.bf16.gmra.mxu0 %v3210
        %v3435 = vpop.f32.mrf.mxu0
        %v3436 = vadd.f32 %v3246, %v3435
        %v3437 = vpop.f32.mrf.mxu0
        %3438 = vdwg.mxu0
        %3439 = vmatpush.bf16.msra.mxu0 %v3379
        %3440 = vmatpush.bf16.msra.mxu0 %v3375
        %3441 = vmatpush.bf16.msra.mxu0 %v3371
        %3442 = vmatpush.bf16.msra.mxu0 %v3367
        %3443 = vmatpush.bf16.msra.mxu0 %v3363
        %3444 = vmatpush.bf16.msra.mxu0 %v3359
        %3445 = vmatpush.bf16.msra.mxu0 %v3355
        %3446 = vmatpush.bf16.msra.mxu0 %v3351
        %3447 = vmatmul.bf16.gmra.mxu0 %v3210
        %v3448 = vpop.f32.mrf.mxu0
        %v3449 = vadd.f32 %v3247, %v3448
        %v3450 = vpop.f32.mrf.mxu0
        %3451 = vdwg.mxu0
        %3452 = vmatpush.bf16.msra.mxu0 %v3380
        %3453 = vmatpush.bf16.msra.mxu0 %v3376
        %3454 = vmatpush.bf16.msra.mxu0 %v3372
        %3455 = vmatpush.bf16.msra.mxu0 %v3368
        %3456 = vmatpush.bf16.msra.mxu0 %v3364
        %3457 = vmatpush.bf16.msra.mxu0 %v3360
        %3458 = vmatpush.bf16.msra.mxu0 %v3356
        %3459 = vmatpush.bf16.msra.mxu0 %v3352
        %3460 = vmatmul.bf16.gmra.mxu0 %v3210
        %v3461 = vpop.f32.mrf.mxu0
        %v3462 = vadd.f32 %v3248, %v3461
        %v3463 = vpop.f32.mrf.mxu0
        %3464 = vdwg.mxu0
        %v3465 = vmul.f32 %v3423, 0.5
        %v3466 = vmul.f32 %v3436, 0.5
        %v3467 = vmul.f32 %v3449, 0.5
        %v3468 = vmul.f32 %v3462, 0.5
        %v3469 = vmul.f32 %v3423, 0.70710677
        %v3470 = vmul.f32 %v3436, 0.70710677
        %v3471 = vmul.f32 %v3449, 0.70710677
        %v3472 = vmul.f32 %v3462, 0.70710677
        %v3473 = vmul.f32 %v3469, %v3469
        %v3474 = vmin.f32 16.0, %v3473
        %v3475 = vmul.f32 %v3474, 2.1237322e-06
        %v3476 = vadd.f32 %v3475, 0.00028619796
        %v3477 = vmul.f32 %v3474, %v3476
        %v3478 = vadd.f32 %v3477, 0.0036580483
        %v3479 = vmul.f32 %v3474, %v3478
        %v3480 = vadd.f32 %v3479, 0.05243302
        %v3481 = vmul.f32 %v3474, %v3480
        %v3482 = vadd.f32 %v3481, 0.18741608
        %v3483 = vmul.f32 %v3474, %v3482
        %v3484 = vadd.f32 %v3483, 1.1283791
        %v3485 = vmul.f32 %v3469, %v3484
        %v3486 = vmul.f32 %v3474, 3.8918573e-05
        %v3487 = vadd.f32 %v3486, 0.001143296
        %v3488 = vmul.f32 %v3474, %v3487
        %v3489 = vadd.f32 %v3488, 0.014752088
        %v3490 = vmul.f32 %v3474, %v3489
        %v3491 = vadd.f32 %v3490, 0.112945676
        %v3492 = vmul.f32 %v3474, %v3491
        %v3493 = vadd.f32 %v3492, 0.4994258
        %v3494 = vmul.f32 %v3474, %v3493
        %v3495 = vadd.f32 %v3494, 1.0
        %v3496 = vrcp.pop %v3495
        %v3497 = vmul.f32 %v3495, %v3496
        %v3498 = vsub.f32 1.0, %v3497
        %v3499 = vmul.f32 %v3496, %v3498
        %v3500 = vadd.f32 %v3496, %v3499
        %vm3501 = vweird.f32 %v3495
        %vm3502 = vweird.f32 %v3496
        %vm3503 = vmor %vm3501, %vm3502
        %v3504 = vsel %vm3503, %v3496, %v3500
        %v3505 = vand.u32 2147483647, %v3495
        %vm3506 = vcmp.eq.f32.partialorder %v3505, 8.507059e+37
        %v3507 = vand.u32 %v3495, 2147483648
        %v3508 = vor.u32 1.1754944e-38, %v3507
        %v3509 = vsel %vm3506, %v3508, %v3504
        %v3510 = vmul.f32 %v3485, %v3509
        %v3511 = vmin.f32 %v3510, 1.0
        %v3512 = vmax.f32 %v3511, -1.0
        %v3513 = vmul.f32 %v3470, %v3470
        %v3514 = vmin.f32 16.0, %v3513
        %v3515 = vmul.f32 %v3514, 2.1237322e-06
        %v3516 = vadd.f32 %v3515, 0.00028619796
        %v3517 = vmul.f32 %v3514, %v3516
        %v3518 = vadd.f32 %v3517, 0.0036580483
        %v3519 = vmul.f32 %v3514, %v3518
        %v3520 = vadd.f32 %v3519, 0.05243302
        %v3521 = vmul.f32 %v3514, %v3520
        %v3522 = vadd.f32 %v3521, 0.18741608
        %v3523 = vmul.f32 %v3514, %v3522
        %v3524 = vadd.f32 %v3523, 1.1283791
        %v3525 = vmul.f32 %v3470, %v3524
        %v3526 = vmul.f32 %v3514, 3.8918573e-05
        %v3527 = vadd.f32 %v3526, 0.001143296
        %v3528 = vmul.f32 %v3514, %v3527
        %v3529 = vadd.f32 %v3528, 0.014752088
        %v3530 = vmul.f32 %v3514, %v3529
        %v3531 = vadd.f32 %v3530, 0.112945676
        %v3532 = vmul.f32 %v3514, %v3531
        %v3533 = vadd.f32 %v3532, 0.4994258
        %v3534 = vmul.f32 %v3514, %v3533
        %v3535 = vadd.f32 %v3534, 1.0
        %v3536 = vrcp.pop %v3535
        %v3537 = vmul.f32 %v3535, %v3536
        %v3538 = vsub.f32 1.0, %v3537
        %v3539 = vmul.f32 %v3536, %v3538
        %v3540 = vadd.f32 %v3536, %v3539
        %vm3541 = vweird.f32 %v3535
        %vm3542 = vweird.f32 %v3536
        %vm3543 = vmor %vm3541, %vm3542
        %v3544 = vsel %vm3543, %v3536, %v3540
        %v3545 = vand.u32 2147483647, %v3535
        %vm3546 = vcmp.eq.f32.partialorder %v3545, 8.507059e+37
        %v3547 = vand.u32 %v3535, 2147483648
        %v3548 = vor.u32 1.1754944e-38, %v3547
        %v3549 = vsel %vm3546, %v3548, %v3544
        %v3550 = vmul.f32 %v3525, %v3549
        %v3551 = vmin.f32 %v3550, 1.0
        %v3552 = vmax.f32 %v3551, -1.0
        %v3553 = vmul.f32 %v3471, %v3471
        %v3554 = vmin.f32 16.0, %v3553
        %v3555 = vmul.f32 %v3554, 2.1237322e-06
        %v3556 = vadd.f32 %v3555, 0.00028619796
        %v3557 = vmul.f32 %v3554, %v3556
        %v3558 = vadd.f32 %v3557, 0.0036580483
        %v3559 = vmul.f32 %v3554, %v3558
        %v3560 = vadd.f32 %v3559, 0.05243302
        %v3561 = vmul.f32 %v3554, %v3560
        %v3562 = vadd.f32 %v3561, 0.18741608
        %v3563 = vmul.f32 %v3554, %v3562
        %v3564 = vadd.f32 %v3563, 1.1283791
        %v3565 = vmul.f32 %v3471, %v3564
        %v3566 = vmul.f32 %v3554, 3.8918573e-05
        %v3567 = vadd.f32 %v3566, 0.001143296
        %v3568 = vmul.f32 %v3554, %v3567
        %v3569 = vadd.f32 %v3568, 0.014752088
        %v3570 = vmul.f32 %v3554, %v3569
        %v3571 = vadd.f32 %v3570, 0.112945676
        %v3572 = vmul.f32 %v3554, %v3571
        %v3573 = vadd.f32 %v3572, 0.4994258
        %v3574 = vmul.f32 %v3554, %v3573
        %v3575 = vadd.f32 %v3574, 1.0
        %v3576 = vrcp.pop %v3575
        %v3577 = vmul.f32 %v3575, %v3576
        %v3578 = vsub.f32 1.0, %v3577
        %v3579 = vmul.f32 %v3576, %v3578
        %v3580 = vadd.f32 %v3576, %v3579
        %vm3581 = vweird.f32 %v3575
        %vm3582 = vweird.f32 %v3576
        %vm3583 = vmor %vm3581, %vm3582
        %v3584 = vsel %vm3583, %v3576, %v3580
        %v3585 = vand.u32 2147483647, %v3575
        %vm3586 = vcmp.eq.f32.partialorder %v3585, 8.507059e+37
        %v3587 = vand.u32 %v3575, 2147483648
        %v3588 = vor.u32 1.1754944e-38, %v3587
        %v3589 = vsel %vm3586, %v3588, %v3584
        %v3590 = vmul.f32 %v3565, %v3589
        %v3591 = vmin.f32 %v3590, 1.0
        %v3592 = vmax.f32 %v3591, -1.0
        %v3593 = vmul.f32 %v3472, %v3472
        %v3594 = vmin.f32 16.0, %v3593
        %v3595 = vmul.f32 %v3594, 2.1237322e-06
        %v3596 = vadd.f32 %v3595, 0.00028619796
        %v3597 = vmul.f32 %v3594, %v3596
        %v3598 = vadd.f32 %v3597, 0.0036580483
        %v3599 = vmul.f32 %v3594, %v3598
        %v3600 = vadd.f32 %v3599, 0.05243302
        %v3601 = vmul.f32 %v3594, %v3600
        %v3602 = vadd.f32 %v3601, 0.18741608
        %v3603 = vmul.f32 %v3594, %v3602
        %v3604 = vadd.f32 %v3603, 1.1283791
        %v3605 = vmul.f32 %v3472, %v3604
        %v3606 = vmul.f32 %v3594, 3.8918573e-05
        %v3607 = vadd.f32 %v3606, 0.001143296
        %v3608 = vmul.f32 %v3594, %v3607
        %v3609 = vadd.f32 %v3608, 0.014752088
        %v3610 = vmul.f32 %v3594, %v3609
        %v3611 = vadd.f32 %v3610, 0.112945676
        %v3612 = vmul.f32 %v3594, %v3611
        %v3613 = vadd.f32 %v3612, 0.4994258
        %v3614 = vmul.f32 %v3594, %v3613
        %v3615 = vadd.f32 %v3614, 1.0
        %v3616 = vrcp.pop %v3615
        %v3617 = vmul.f32 %v3615, %v3616
        %v3618 = vsub.f32 1.0, %v3617
        %v3619 = vmul.f32 %v3616, %v3618
        %v3620 = vadd.f32 %v3616, %v3619
        %vm3621 = vweird.f32 %v3615
        %vm3622 = vweird.f32 %v3616
        %vm3623 = vmor %vm3621, %vm3622
        %v3624 = vsel %vm3623, %v3616, %v3620
        %v3625 = vand.u32 2147483647, %v3615
        %vm3626 = vcmp.eq.f32.partialorder %v3625, 8.507059e+37
        %v3627 = vand.u32 %v3615, 2147483648
        %v3628 = vor.u32 1.1754944e-38, %v3627
        %v3629 = vsel %vm3626, %v3628, %v3624
        %v3630 = vmul.f32 %v3605, %v3629
        %v3631 = vmin.f32 %v3630, 1.0
        %v3632 = vmax.f32 %v3631, -1.0
        %v3633 = vadd.f32 %v3512, 1.0
        %v3634 = vadd.f32 %v3552, 1.0
        %v3635 = vadd.f32 %v3592, 1.0
        %v3636 = vadd.f32 %v3632, 1.0
        %v3637 = vmul.f32 %v3465, %v3633
        %v3638 = vmul.f32 %v3466, %v3634
        %v3639 = vmul.f32 %v3467, %v3635
        %v3640 = vmul.f32 %v3468, %v3636
        %v3641 = vpack.c.bf16 %v3637, %v3637
        %v3642 = vpack.c.bf16 %v3638, %v3638
        %v3643 = vpack.c.bf16 %v3639, %v3639
        %v3644 = vpack.c.bf16 %v3640, %v3640
        %v3645 = vld [vmem:[%s13] sm:$0xf]
        %v3646 = vld [vmem:[%s13 + $0x4] sm:$0xf]
        %v3647 = vld [vmem:[%s13 + $0x8] sm:$0xf]
        %v3648 = vld [vmem:[%s13 + $0xc] sm:$0xf]
        %v3649 = vld [vmem:[%s13 + $0x10] sm:$0xf]
        %v3650 = vld [vmem:[%s13 + $0x14] sm:$0xf]
        %v3651 = vld [vmem:[%s13 + $0x18] sm:$0xf]
        %v3652 = vld [vmem:[%s13 + $0x1c] sm:$0xf]
        %v3653 = vld [vmem:[%s13 + $0x20] sm:$0xf]
        %v3654 = vld [vmem:[%s13 + $0x24] sm:$0xf]
        %v3655 = vld [vmem:[%s13 + $0x28] sm:$0xf]
        %v3656 = vld [vmem:[%s13 + $0x2c] sm:$0xf]
        %v3657 = vld [vmem:[%s13 + $0x30] sm:$0xf]
        %v3658 = vld [vmem:[%s13 + $0x34] sm:$0xf]
        %v3659 = vld [vmem:[%s13 + $0x38] sm:$0xf]
        %v3660 = vld [vmem:[%s13 + $0x3c] sm:$0xf]
        %v3661 = vld [vmem:[%s13 + $0x40] sm:$0xf]
        %v3662 = vld [vmem:[%s13 + $0x44] sm:$0xf]
        %v3663 = vld [vmem:[%s13 + $0x48] sm:$0xf]
        %v3664 = vld [vmem:[%s13 + $0x4c] sm:$0xf]
        %v3665 = vld [vmem:[%s13 + $0x50] sm:$0xf]
        %v3666 = vld [vmem:[%s13 + $0x54] sm:$0xf]
        %v3667 = vld [vmem:[%s13 + $0x58] sm:$0xf]
        %v3668 = vld [vmem:[%s13 + $0x5c] sm:$0xf]
        %v3669 = vld [vmem:[%s13 + $0x60] sm:$0xf]
        %v3670 = vld [vmem:[%s13 + $0x64] sm:$0xf]
        %v3671 = vld [vmem:[%s13 + $0x68] sm:$0xf]
        %v3672 = vld [vmem:[%s13 + $0x6c] sm:$0xf]
        %v3673 = vld [vmem:[%s13 + $0x70] sm:$0xf]
        %v3674 = vld [vmem:[%s13 + $0x74] sm:$0xf]
        %v3675 = vld [vmem:[%s13 + $0x78] sm:$0xf]
        %v3676 = vld [vmem:[%s13 + $0x7c] sm:$0xf]
        %v3677 = vld [vmem:[%s13 + $0x80] sm:$0xf]
        %v3678 = vld [vmem:[%s13 + $0x84] sm:$0xf]
        %v3679 = vld [vmem:[%s13 + $0x88] sm:$0xf]
        %v3680 = vld [vmem:[%s13 + $0x8c] sm:$0xf]
        %v3681 = vld [vmem:[%s13 + $0x90] sm:$0xf]
        %v3682 = vld [vmem:[%s13 + $0x94] sm:$0xf]
        %v3683 = vld [vmem:[%s13 + $0x98] sm:$0xf]
        %v3684 = vld [vmem:[%s13 + $0x9c] sm:$0xf]
        %v3685 = vld [vmem:[%s13 + $0xa0] sm:$0xf]
        %v3686 = vld [vmem:[%s13 + $0xa4] sm:$0xf]
        %v3687 = vld [vmem:[%s13 + $0xa8] sm:$0xf]
        %v3688 = vld [vmem:[%s13 + $0xac] sm:$0xf]
        %v3689 = vld [vmem:[%s13 + $0xb0] sm:$0xf]
        %v3690 = vld [vmem:[%s13 + $0xb4] sm:$0xf]
        %v3691 = vld [vmem:[%s13 + $0xb8] sm:$0xf]
        %v3692 = vld [vmem:[%s13 + $0xbc] sm:$0xf]
        %v3693 = vld [vmem:[%s13 + $0xc0] sm:$0xf]
        %v3694 = vld [vmem:[%s13 + $0xc4] sm:$0xf]
        %v3695 = vld [vmem:[%s13 + $0xc8] sm:$0xf]
        %v3696 = vld [vmem:[%s13 + $0xcc] sm:$0xf]
        %v3697 = vld [vmem:[%s13 + $0xd0] sm:$0xf]
        %v3698 = vld [vmem:[%s13 + $0xd4] sm:$0xf]
        %v3699 = vld [vmem:[%s13 + $0xd8] sm:$0xf]
        %v3700 = vld [vmem:[%s13 + $0xdc] sm:$0xf]
        %v3701 = vld [vmem:[%s13 + $0xe0] sm:$0xf]
        %v3702 = vld [vmem:[%s13 + $0xe4] sm:$0xf]
        %v3703 = vld [vmem:[%s13 + $0xe8] sm:$0xf]
        %v3704 = vld [vmem:[%s13 + $0xec] sm:$0xf]
        %v3705 = vld [vmem:[%s13 + $0xf0] sm:$0xf]
        %v3706 = vld [vmem:[%s13 + $0xf4] sm:$0xf]
        %v3707 = vld [vmem:[%s13 + $0xf8] sm:$0xf]
        %v3708 = vld [vmem:[%s13 + $0xfc] sm:$0xf]
        %v3709 = vld [vmem:[%s14] sm:$0x1]
        %v3711 = vperm.slane %v3709, 0
        %v3777 = vunpack.c.l.b16 %v3645
        %v3778 = vunpack.c.l.b16 %v3646
        %v3779 = vunpack.c.l.b16 %v3647
        %v3780 = vunpack.c.l.b16 %v3648
        %v3781 = vunpack.c.l.b16 %v3649
        %v3782 = vunpack.c.l.b16 %v3650
        %v3783 = vunpack.c.l.b16 %v3651
        %v3784 = vunpack.c.l.b16 %v3652
        %v3785 = vunpack.c.l.b16 %v3653
        %v3786 = vunpack.c.l.b16 %v3654
        %v3787 = vunpack.c.l.b16 %v3655
        %v3788 = vunpack.c.l.b16 %v3656
        %v3789 = vunpack.c.l.b16 %v3657
        %v3790 = vunpack.c.l.b16 %v3658
        %v3791 = vunpack.c.l.b16 %v3659
        %v3792 = vunpack.c.l.b16 %v3660
        %v3793 = vunpack.c.l.b16 %v3661
        %v3794 = vunpack.c.l.b16 %v3662
        %v3795 = vunpack.c.l.b16 %v3663
        %v3796 = vunpack.c.l.b16 %v3664
        %v3797 = vunpack.c.l.b16 %v3665
        %v3798 = vunpack.c.l.b16 %v3666
        %v3799 = vunpack.c.l.b16 %v3667
        %v3800 = vunpack.c.l.b16 %v3668
        %v3801 = vunpack.c.l.b16 %v3669
        %v3802 = vunpack.c.l.b16 %v3670
        %v3803 = vunpack.c.l.b16 %v3671
        %v3804 = vunpack.c.l.b16 %v3672
        %v3805 = vunpack.c.l.b16 %v3673
        %v3806 = vunpack.c.l.b16 %v3674
        %v3807 = vunpack.c.l.b16 %v3675
        %v3808 = vunpack.c.l.b16 %v3676
        %v3809 = vunpack.c.l.b16 %v3677
        %v3810 = vunpack.c.l.b16 %v3678
        %v3811 = vunpack.c.l.b16 %v3679
        %v3812 = vunpack.c.l.b16 %v3680
        %v3813 = vunpack.c.l.b16 %v3681
        %v3814 = vunpack.c.l.b16 %v3682
        %v3815 = vunpack.c.l.b16 %v3683
        %v3816 = vunpack.c.l.b16 %v3684
        %v3817 = vunpack.c.l.b16 %v3685
        %v3818 = vunpack.c.l.b16 %v3686
        %v3819 = vunpack.c.l.b16 %v3687
        %v3820 = vunpack.c.l.b16 %v3688
        %v3821 = vunpack.c.l.b16 %v3689
        %v3822 = vunpack.c.l.b16 %v3690
        %v3823 = vunpack.c.l.b16 %v3691
        %v3824 = vunpack.c.l.b16 %v3692
        %v3825 = vunpack.c.l.b16 %v3693
        %v3826 = vunpack.c.l.b16 %v3694
        %v3827 = vunpack.c.l.b16 %v3695
        %v3828 = vunpack.c.l.b16 %v3696
        %v3829 = vunpack.c.l.b16 %v3697
        %v3830 = vunpack.c.l.b16 %v3698
        %v3831 = vunpack.c.l.b16 %v3699
        %v3832 = vunpack.c.l.b16 %v3700
        %v3833 = vunpack.c.l.b16 %v3701
        %v3834 = vunpack.c.l.b16 %v3702
        %v3835 = vunpack.c.l.b16 %v3703
        %v3836 = vunpack.c.l.b16 %v3704
        %v3837 = vunpack.c.l.b16 %v3705
        %v3838 = vunpack.c.l.b16 %v3706
        %v3839 = vunpack.c.l.b16 %v3707
        %v3840 = vunpack.c.l.b16 %v3708
        %v3841 = vpack.c.b16 %v3778, %v3777
        %v3842 = vpack.c.b16 %v3780, %v3779
        %v3843 = vpack.c.b16 %v3782, %v3781
        %v3844 = vpack.c.b16 %v3784, %v3783
        %v3845 = vpack.c.b16 %v3786, %v3785
        %v3846 = vpack.c.b16 %v3788, %v3787
        %v3847 = vpack.c.b16 %v3790, %v3789
        %v3848 = vpack.c.b16 %v3792, %v3791
        %v3849 = vpack.c.b16 %v3794, %v3793
        %v3850 = vpack.c.b16 %v3796, %v3795
        %v3851 = vpack.c.b16 %v3798, %v3797
        %v3852 = vpack.c.b16 %v3800, %v3799
        %v3853 = vpack.c.b16 %v3802, %v3801
        %v3854 = vpack.c.b16 %v3804, %v3803
        %v3855 = vpack.c.b16 %v3806, %v3805
        %v3856 = vpack.c.b16 %v3808, %v3807
        %v3857 = vpack.c.b16 %v3810, %v3809
        %v3858 = vpack.c.b16 %v3812, %v3811
        %v3859 = vpack.c.b16 %v3814, %v3813
        %v3860 = vpack.c.b16 %v3816, %v3815
        %v3861 = vpack.c.b16 %v3818, %v3817
        %v3862 = vpack.c.b16 %v3820, %v3819
        %v3863 = vpack.c.b16 %v3822, %v3821
        %v3864 = vpack.c.b16 %v3824, %v3823
        %v3865 = vpack.c.b16 %v3826, %v3825
        %v3866 = vpack.c.b16 %v3828, %v3827
        %v3867 = vpack.c.b16 %v3830, %v3829
        %v3868 = vpack.c.b16 %v3832, %v3831
        %v3869 = vpack.c.b16 %v3834, %v3833
        %v3870 = vpack.c.b16 %v3836, %v3835
        %v3871 = vpack.c.b16 %v3838, %v3837
        %v3872 = vpack.c.b16 %v3840, %v3839
        %3905 = vmatpush.bf16.msra.mxu0 %v3848
        %3906 = vmatpush.bf16.msra.mxu0 %v3847
        %3907 = vmatpush.bf16.msra.mxu0 %v3846
        %3908 = vmatpush.bf16.msra.mxu0 %v3845
        %3909 = vmatpush.bf16.msra.mxu0 %v3844
        %3910 = vmatpush.bf16.msra.mxu0 %v3843
        %3911 = vmatpush.bf16.msra.mxu0 %v3842
        %3912 = vmatpush.bf16.msra.mxu0 %v3841
        %3913 = vmatmul.bf16.gmra.mxu0 %v3641
        %v3914 = vpop.f32.mrf.mxu0
        %v3915 = vadd.f32 %v3711, %v3914
        %v3916 = vpop.f32.mrf.mxu0
        %3917 = vdwg.mxu0
        %3918 = vmatpush.bf16.msra.mxu0 %v3856
        %3919 = vmatpush.bf16.msra.mxu0 %v3855
        %3920 = vmatpush.bf16.msra.mxu0 %v3854
        %3921 = vmatpush.bf16.msra.mxu0 %v3853
        %3922 = vmatpush.bf16.msra.mxu0 %v3852
        %3923 = vmatpush.bf16.msra.mxu0 %v3851
        %3924 = vmatpush.bf16.msra.mxu0 %v3850
        %3925 = vmatpush.bf16.msra.mxu0 %v3849
        %3926 = vmatmul.bf16.gmra.mxu0 %v3642
        %v3927 = vpop.f32.mrf.mxu0
        %v3928 = vadd.f32 %v3915, %v3927
        %v3929 = vpop.f32.mrf.mxu0
        %3930 = vdwg.mxu0
        %3931 = vmatpush.bf16.msra.mxu0 %v3864
        %3932 = vmatpush.bf16.msra.mxu0 %v3863
        %3933 = vmatpush.bf16.msra.mxu0 %v3862
        %3934 = vmatpush.bf16.msra.mxu0 %v3861
        %3935 = vmatpush.bf16.msra.mxu0 %v3860
        %3936 = vmatpush.bf16.msra.mxu0 %v3859
        %3937 = vmatpush.bf16.msra.mxu0 %v3858
        %3938 = vmatpush.bf16.msra.mxu0 %v3857
        %3939 = vmatmul.bf16.gmra.mxu0 %v3643
        %v3940 = vpop.f32.mrf.mxu0
        %v3941 = vadd.f32 %v3928, %v3940
        %v3942 = vpop.f32.mrf.mxu0
        %3943 = vdwg.mxu0
        %3944 = vmatpush.bf16.msra.mxu0 %v3872
        %3945 = vmatpush.bf16.msra.mxu0 %v3871
        %3946 = vmatpush.bf16.msra.mxu0 %v3870
        %3947 = vmatpush.bf16.msra.mxu0 %v3869
        %3948 = vmatpush.bf16.msra.mxu0 %v3868
        %3949 = vmatpush.bf16.msra.mxu0 %v3867
        %3950 = vmatpush.bf16.msra.mxu0 %v3866
        %3951 = vmatpush.bf16.msra.mxu0 %v3865
        %3952 = vmatmul.bf16.gmra.mxu0 %v3644
        %v3953 = vpop.f32.mrf.mxu0
        %v3954 = vadd.f32 %v3941, %v3953
        %v3955 = vpop.f32.mrf.mxu0
        %3956 = vdwg.mxu0
        %v3957 = vadd.f32 %v3179, %v3954
        %s3958 = scalar_lea.vmem %s3, 1
        %v3959 = vld [vmem:[%s3958] sm:$0x1]
        %s3960 = scalar_lea.vmem %s4, 1
        %v3961 = vld [vmem:[%s3960] sm:$0x1]
        %3962 = vadd.xlane.f32.xlu0 %v3957
        %v3963 = vpop.xlane.xlu0 %3962
        %v3964 = vmul.f32 %v3963, %v2577
        %v3965 = vsub.f32 %v3957, %v3964
        %v3966 = vmul.f32 %v3965, %v3965
        %3967 = vadd.xlane.f32.xlu0 %v3966
        %v3968 = vpop.xlane.xlu0 %3967
        %v3969 = vmul.f32 %v3968, %v2577
        %v3970 = vadd.f32 %v3969, 1e-06
        %v3971 = vrsqrt.pop %v3970
        %v3972 = vmul.f32 %v3971, %v3970
        %v3973 = vmul.f32 %v3972, %v3971
        %v3974 = vmul.f32 0.5, %v3973
        %v3975 = vsub.f32 1.5, %v3974
        %v3976 = vmul.f32 %v3971, %v3975
        %vm3977 = vweird.f32 %v3970
        %vm3978 = vweird.f32 %v3971
        %vm3979 = vmor %vm3977, %vm3978
        %v3980 = vsel %vm3979, %v3971, %v3976
        %v3981 = vmul.f32 %v3965, %v3980
        %v3983 = vperm.slane %v3959, 0
        %v3985 = vmul.f32 %v3981, %v3983
        %v3987 = vperm.slane %v3961, 0
        %v3989 = vadd.f32 %v3985, %v3987
        %v3990 = vpack.c.bf16 %v3989, %v3989
        %s3991 = scalar_lea.vmem [#allocation2], 192
        %v3992 = vld [vmem:[%s3991] sm:$0xff]
        %v3993 = vld [vmem:[%s3991 + $0x8] sm:$0xf]
        %v3994 = vld [vmem:[%s3991 + $0xc] sm:$0xff]
        %v3995 = vld [vmem:[%s3991 + $0x14] sm:$0xf]
        %v3996 = vld [vmem:[%s3991 + $0x18] sm:$0xff]
        %v3997 = vld [vmem:[%s3991 + $0x20] sm:$0xf]
        %v3998 = vld [vmem:[%s3991 + $0x24] sm:$0xff]
        %v3999 = vld [vmem:[%s3991 + $0x2c] sm:$0xf]
        %v4000 = vld [vmem:[%s3991 + $0x30] sm:$0xff]
        %v4001 = vld [vmem:[%s3991 + $0x38] sm:$0xf]
        %v4002 = vld [vmem:[%s3991 + $0x3c] sm:$0xff]
        %v4003 = vld [vmem:[%s3991 + $0x44] sm:$0xf]
        %v4004 = vld [vmem:[%s3991 + $0x48] sm:$0xff]
        %v4005 = vld [vmem:[%s3991 + $0x50] sm:$0xf]
        %v4006 = vld [vmem:[%s3991 + $0x54] sm:$0xff]
        %v4007 = vld [vmem:[%s3991 + $0x5c] sm:$0xf]
        %v4008 = vld [vmem:[%s3991 + $0x60] sm:$0xff]
        %v4009 = vld [vmem:[%s3991 + $0x68] sm:$0xf]
        %v4010 = vld [vmem:[%s3991 + $0x6c] sm:$0xff]
        %v4011 = vld [vmem:[%s3991 + $0x74] sm:$0xf]
        %v4012 = vld [vmem:[%s3991 + $0x78] sm:$0xff]
        %v4013 = vld [vmem:[%s3991 + $0x80] sm:$0xf]
        %v4014 = vld [vmem:[%s3991 + $0x84] sm:$0xff]
        %v4015 = vld [vmem:[%s3991 + $0x8c] sm:$0xf]
        %v4016 = vld [vmem:[%s3991 + $0x90] sm:$0xff]
        %v4017 = vld [vmem:[%s3991 + $0x98] sm:$0xf]
        %v4018 = vld [vmem:[%s3991 + $0x9c] sm:$0xff]
        %v4019 = vld [vmem:[%s3991 + $0xa4] sm:$0xf]
        %v4020 = vld [vmem:[%s3991 + $0xa8] sm:$0xff]
        %v4021 = vld [vmem:[%s3991 + $0xb0] sm:$0xf]
        %v4022 = vld [vmem:[%s3991 + $0xb4] sm:$0xff]
        %v4023 = vld [vmem:[%s3991 + $0xbc] sm:$0xf]
        %s4024 = scalar_lea.vmem %s6, 3
        %v4025 = vld [vmem:[%s4024] sm:$0x7]
        %v4027 = vperm.slane %v4025, 0
        %v4028 = vperm.slane %v4025, 1
        %v4029 = vperm.slane %v4025, 2
        %v4065 = vunpack.c.l.b16 %v3992
        %v4066 = vunpack.c.h.b16 %v3992
        %v4067 = vunpack.c.l.b16 %v3993
        %v4068 = vunpack.c.l.b16 %v3994
        %v4069 = vunpack.c.h.b16 %v3994
        %v4070 = vunpack.c.l.b16 %v3995
        %v4071 = vunpack.c.l.b16 %v3996
        %v4072 = vunpack.c.h.b16 %v3996
        %v4073 = vunpack.c.l.b16 %v3997
        %v4074 = vunpack.c.l.b16 %v3998
        %v4075 = vunpack.c.h.b16 %v3998
        %v4076 = vunpack.c.l.b16 %v3999
        %v4077 = vunpack.c.l.b16 %v4000
        %v4078 = vunpack.c.h.b16 %v4000
        %v4079 = vunpack.c.l.b16 %v4001
        %v4080 = vunpack.c.l.b16 %v4002
        %v4081 = vunpack.c.h.b16 %v4002
        %v4082 = vunpack.c.l.b16 %v4003
        %v4083 = vunpack.c.l.b16 %v4004
        %v4084 = vunpack.c.h.b16 %v4004
        %v4085 = vunpack.c.l.b16 %v4005
        %v4086 = vunpack.c.l.b16 %v4006
        %v4087 = vunpack.c.h.b16 %v4006
        %v4088 = vunpack.c.l.b16 %v4007
        %v4089 = vunpack.c.l.b16 %v4008
        %v4090 = vunpack.c.h.b16 %v4008
        %v4091 = vunpack.c.l.b16 %v4009
        %v4092 = vunpack.c.l.b16 %v4010
        %v4093 = vunpack.c.h.b16 %v4010
        %v4094 = vunpack.c.l.b16 %v4011
        %v4095 = vunpack.c.l.b16 %v4012
        %v4096 = vunpack.c.h.b16 %v4012
        %v4097 = vunpack.c.l.b16 %v4013
        %v4098 = vunpack.c.l.b16 %v4014
        %v4099 = vunpack.c.h.b16 %v4014
        %v4100 = vunpack.c.l.b16 %v4015
        %v4101 = vunpack.c.l.b16 %v4016
        %v4102 = vunpack.c.h.b16 %v4016
        %v4103 = vunpack.c.l.b16 %v4017
        %v4104 = vunpack.c.l.b16 %v4018
        %v4105 = vunpack.c.h.b16 %v4018
        %v4106 = vunpack.c.l.b16 %v4019
        %v4107 = vunpack.c.l.b16 %v4020
        %v4108 = vunpack.c.h.b16 %v4020
        %v4109 = vunpack.c.l.b16 %v4021
        %v4110 = vunpack.c.l.b16 %v4022
        %v4111 = vunpack.c.h.b16 %v4022
        %v4112 = vunpack.c.l.b16 %v4023
        %v4113 = vpack.c.b16 %v4068, %v4065
        %v4114 = vpack.c.b16 %v4069, %v4066
        %v4115 = vpack.c.b16 %v4070, %v4067
        %v4116 = vpack.c.b16 %v4074, %v4071
        %v4117 = vpack.c.b16 %v4075, %v4072
        %v4118 = vpack.c.b16 %v4076, %v4073
        %v4119 = vpack.c.b16 %v4080, %v4077
        %v4120 = vpack.c.b16 %v4081, %v4078
        %v4121 = vpack.c.b16 %v4082, %v4079
        %v4122 = vpack.c.b16 %v4086, %v4083
        %v4123 = vpack.c.b16 %v4087, %v4084
        %v4124 = vpack.c.b16 %v4088, %v4085
        %v4125 = vpack.c.b16 %v4092, %v4089
        %v4126 = vpack.c.b16 %v4093, %v4090
        %v4127 = vpack.c.b16 %v4094, %v4091
        %v4128 = vpack.c.b16 %v4098, %v4095
        %v4129 = vpack.c.b16 %v4099, %v4096
        %v4130 = vpack.c.b16 %v4100, %v4097
        %v4131 = vpack.c.b16 %v4104, %v4101
        %v4132 = vpack.c.b16 %v4105, %v4102
        %v4133 = vpack.c.b16 %v4106, %v4103
        %v4134 = vpack.c.b16 %v4110, %v4107
        %v4135 = vpack.c.b16 %v4111, %v4108
        %v4136 = vpack.c.b16 %v4112, %v4109
        %4161 = vmatpush.bf16.msra.mxu0 %v4134
        %4162 = vmatpush.bf16.msra.mxu0 %v4131
        %4163 = vmatpush.bf16.msra.mxu0 %v4128
        %4164 = vmatpush.bf16.msra.mxu0 %v4125
        %4165 = vmatpush.bf16.msra.mxu0 %v4122
        %4166 = vmatpush.bf16.msra.mxu0 %v4119
        %4167 = vmatpush.bf16.msra.mxu0 %v4116
        %4168 = vmatpush.bf16.msra.mxu0 %v4113
        %4169 = vmatmul.bf16.gmra.mxu0 %v3990
        %v4170 = vpop.f32.mrf.mxu0
        %v4171 = vadd.f32 %v4027, %v4170
        %v4172 = vpop.f32.mrf.mxu0
        %4173 = vdwg.mxu0
        %4174 = vmatpush.bf16.msra.mxu0 %v4135
        %4175 = vmatpush.bf16.msra.mxu0 %v4132
        %4176 = vmatpush.bf16.msra.mxu0 %v4129
        %4177 = vmatpush.bf16.msra.mxu0 %v4126
        %4178 = vmatpush.bf16.msra.mxu0 %v4123
        %4179 = vmatpush.bf16.msra.mxu0 %v4120
        %4180 = vmatpush.bf16.msra.mxu0 %v4117
        %4181 = vmatpush.bf16.msra.mxu0 %v4114
        %4182 = vmatmul.bf16.gmra.mxu0 %v3990
        %v4183 = vpop.f32.mrf.mxu0
        %v4184 = vadd.f32 %v4028, %v4183
        %v4185 = vpop.f32.mrf.mxu0
        %4186 = vdwg.mxu0
        %4187 = vmatpush.bf16.msra.mxu0 %v4136
        %4188 = vmatpush.bf16.msra.mxu0 %v4133
        %4189 = vmatpush.bf16.msra.mxu0 %v4130
        %4190 = vmatpush.bf16.msra.mxu0 %v4127
        %4191 = vmatpush.bf16.msra.mxu0 %v4124
        %4192 = vmatpush.bf16.msra.mxu0 %v4121
        %4193 = vmatpush.bf16.msra.mxu0 %v4118
        %4194 = vmatpush.bf16.msra.mxu0 %v4115
        %4195 = vmatmul.bf16.gmra.mxu0 %v3990
        %v4196 = vpop.f32.mrf.mxu0
        %v4197 = vadd.f32 %v4029, %v4196
        %v4198 = vpop.f32.mrf.mxu0
        %4199 = vdwg.mxu0
        %s4200 = scalar_lea.vmem %s7, 64
        %v4201 = vld [vmem:[%s4200] sm:$0xf]
        %v4202 = vld [vmem:[%s4200 + $0x4] sm:$0xf]
        %v4203 = vld [vmem:[%s4200 + $0x8] sm:$0xf]
        %v4204 = vld [vmem:[%s4200 + $0xc] sm:$0xf]
        %v4205 = vld [vmem:[%s4200 + $0x10] sm:$0xf]
        %v4206 = vld [vmem:[%s4200 + $0x14] sm:$0xf]
        %v4207 = vld [vmem:[%s4200 + $0x18] sm:$0xf]
        %v4208 = vld [vmem:[%s4200 + $0x1c] sm:$0xf]
        %v4209 = vld [vmem:[%s4200 + $0x20] sm:$0xf]
        %v4210 = vld [vmem:[%s4200 + $0x24] sm:$0xf]
        %v4211 = vld [vmem:[%s4200 + $0x28] sm:$0xf]
        %v4212 = vld [vmem:[%s4200 + $0x2c] sm:$0xf]
        %v4213 = vld [vmem:[%s4200 + $0x30] sm:$0xf]
        %v4214 = vld [vmem:[%s4200 + $0x34] sm:$0xf]
        %v4215 = vld [vmem:[%s4200 + $0x38] sm:$0xf]
        %v4216 = vld [vmem:[%s4200 + $0x3c] sm:$0xf]
        %v4217 = vmul.f32 %v4171, 0.17677669
        %v4218 = vpack.c.bf16 %v4217, %v4217
        %v4219 = vpack.c.bf16 %v4184, %v4184
        %v4220 = vpack.c.bf16 %v4197, %v4197
        %v4222 = vsel %vm2832, %v4218, 0
        %v4225 = vsel %vm2832, %v4219, 0
        %4227 = vmatpush.bf16.xpose.msra.mxu0 0
        %4228 = vmatpush.bf16.xpose.msra.mxu0 0
        %4229 = vmatpush.bf16.xpose.msra.mxu0 0
        %4230 = vmatpush.bf16.xpose.msra.mxu0 0
        %4231 = vmatpush.bf16.xpose.msra.mxu0 0
        %4232 = vmatpush.bf16.xpose.msra.mxu0 0
        %4233 = vmatpush.bf16.xpose.msra.mxu0 0
        %4234 = vmatpush.bf16.xpose.msra.mxu0 %v4225
        %4235 = vmatmul.bf16.gmra.mxu0 %v4222
        %v4236 = vpop.f32.mrf.mxu0
        %v4237 = vadd.f32 %v2566, %v4236
        %v4238 = vpop.f32.mrf.mxu0
        %4239 = vdwg.mxu0
        %v4240 = vsel %vm2852, %v4237, -inf
        %4241 = vmax.xlane.f32.xlu0 %v4240
        %v4242 = vpop.xlane.xlu0 %4241
        %v4243 = vsub.f32 %v4237, %v4242
        %v4244 = vmul.f32 %v4243, 1.442695
        %v4245 = vpow.pop %v4244
        %v4246 = vsel %vm2852, %v4245, 0.0
        %4247 = vadd.xlane.f32.xlu0 %v4246
        %v4248 = vpop.xlane.xlu0 %4247
        %v4249 = vrcp.pop %v4248
        %v4250 = vmul.f32 %v4245, %v4249
        %v4251 = vpack.c.bf16 %v4250, %v4250
        %v4253 = vsel %vm2852, %v4251, 0
        %v4256 = vsel %vm2868, %v4220, 0
        %4258 = vmatpush.bf16.msra.mxu0 0
        %4259 = vmatpush.bf16.msra.mxu0 0
        %4260 = vmatpush.bf16.msra.mxu0 0
        %4261 = vmatpush.bf16.msra.mxu0 0
        %4262 = vmatpush.bf16.msra.mxu0 0
        %4263 = vmatpush.bf16.msra.mxu0 0
        %4264 = vmatpush.bf16.msra.mxu0 0
        %4265 = vmatpush.bf16.msra.mxu0 %v4256
        %4266 = vmatmul.bf16.gmra.mxu0 %v4253
        %v4267 = vpop.f32.mrf.mxu0
        %v4268 = vadd.f32 0.0, %v4267
        %v4269 = vpop.f32.mrf.mxu0
        %4270 = vdwg.mxu0
        %v4271 = vpack.c.bf16 %v4268, %v4268
        %4273 = vrot.lane.b32.xlu0 %v4218, 96
        %v4274 = vpop.permute.xlu0 %4273
        %4276 = vrot.lane.b32.xlu0 %v4219, 96
        %v4277 = vpop.permute.xlu0 %4276
        %v4279 = vsel %vm2832, %v4274, 0
        %v4282 = vsel %vm2832, %v4277, 0
        %4284 = vmatpush.bf16.xpose.msra.mxu0 0
        %4285 = vmatpush.bf16.xpose.msra.mxu0 0
        %4286 = vmatpush.bf16.xpose.msra.mxu0 0
        %4287 = vmatpush.bf16.xpose.msra.mxu0 0
        %4288 = vmatpush.bf16.xpose.msra.mxu0 0
        %4289 = vmatpush.bf16.xpose.msra.mxu0 0
        %4290 = vmatpush.bf16.xpose.msra.mxu0 0
        %4291 = vmatpush.bf16.xpose.msra.mxu0 %v4282
        %4292 = vmatmul.bf16.gmra.mxu0 %v4279
        %v4293 = vpop.f32.mrf.mxu0
        %v4294 = vadd.f32 %v2566, %v4293
        %v4295 = vpop.f32.mrf.mxu0
        %4296 = vdwg.mxu0
        %v4297 = vsel %vm2852, %v4294, -inf
        %4298 = vmax.xlane.f32.xlu0 %v4297
        %v4299 = vpop.xlane.xlu0 %4298
        %v4300 = vsub.f32 %v4294, %v4299
        %v4301 = vmul.f32 %v4300, 1.442695
        %v4302 = vpow.pop %v4301
        %v4303 = vsel %vm2852, %v4302, 0.0
        %4304 = vadd.xlane.f32.xlu0 %v4303
        %v4305 = vpop.xlane.xlu0 %4304
        %v4306 = vrcp.pop %v4305
        %v4307 = vmul.f32 %v4302, %v4306
        %v4308 = vpack.c.bf16 %v4307, %v4307
        %4310 = vrot.lane.b32.xlu0 %v4220, 96
        %v4311 = vpop.permute.xlu0 %4310
        %v4313 = vsel %vm2852, %v4308, 0
        %v4316 = vsel %vm2868, %v4311, 0
        %4318 = vmatpush.bf16.msra.mxu0 0
        %4319 = vmatpush.bf16.msra.mxu0 0
        %4320 = vmatpush.bf16.msra.mxu0 0
        %4321 = vmatpush.bf16.msra.mxu0 0
        %4322 = vmatpush.bf16.msra.mxu0 0
        %4323 = vmatpush.bf16.msra.mxu0 0
        %4324 = vmatpush.bf16.msra.mxu0 0
        %4325 = vmatpush.bf16.msra.mxu0 %v4316
        %4326 = vmatmul.bf16.gmra.mxu0 %v4313
        %v4327 = vpop.f32.mrf.mxu0
        %v4328 = vadd.f32 0.0, %v4327
        %v4329 = vpop.f32.mrf.mxu0
        %4330 = vdwg.mxu0
        %v4331 = vpack.c.bf16 %v4328, %v4328
        %v4336 = vunpack.c.l.b16 %v4205
        %v4337 = vunpack.c.l.b16 %v4206
        %v4338 = vunpack.c.l.b16 %v4207
        %v4339 = vunpack.c.l.b16 %v4208
        %v4340 = vpack.c.b16 %v4337, %v4336
        %v4341 = vpack.c.b16 %v4339, %v4338
        %v4345 = vsel %vm2832, %v4331, 0
        %4347 = vmatpush.bf16.msra.mxu0 0
        %4348 = vmatpush.bf16.msra.mxu0 0
        %4349 = vmatpush.bf16.msra.mxu0 0
        %4350 = vmatpush.bf16.msra.mxu0 0
        %4351 = vmatpush.bf16.msra.mxu0 0
        %4352 = vmatpush.bf16.msra.mxu0 0
        %4353 = vmatpush.bf16.msra.mxu0 %v4341
        %4354 = vmatpush.bf16.msra.mxu0 %v4340
        %4355 = vmatmul.bf16.gmra.mxu0 %v4345
        %v4356 = vpop.f32.mrf.mxu0
        %v4357 = vadd.f32 0.0, %v4356
        %v4358 = vpop.f32.mrf.mxu0
        %4359 = vdwg.mxu0
        %v4364 = vunpack.c.l.b16 %v4201
        %v4365 = vunpack.c.l.b16 %v4202
        %v4366 = vunpack.c.l.b16 %v4203
        %v4367 = vunpack.c.l.b16 %v4204
        %v4368 = vpack.c.b16 %v4365, %v4364
        %v4369 = vpack.c.b16 %v4367, %v4366
        %v4373 = vsel %vm2832, %v4271, 0
        %4375 = vmatpush.bf16.msra.mxu0 0
        %4376 = vmatpush.bf16.msra.mxu0 0
        %4377 = vmatpush.bf16.msra.mxu0 0
        %4378 = vmatpush.bf16.msra.mxu0 0
        %4379 = vmatpush.bf16.msra.mxu0 0
        %4380 = vmatpush.bf16.msra.mxu0 0
        %4381 = vmatpush.bf16.msra.mxu0 %v4369
        %4382 = vmatpush.bf16.msra.mxu0 %v4368
        %4383 = vmatmul.bf16.gmra.mxu0 %v4373
        %v4384 = vpop.f32.mrf.mxu0
        %v4385 = vadd.f32 %v4357, %v4384
        %v4386 = vpop.f32.mrf.mxu0
        %4387 = vdwg.mxu0
        %4388 = vrot.lane.b32.xlu0 %v4218, 64
        %v4389 = vpop.permute.xlu0 %4388
        %4390 = vrot.lane.b32.xlu0 %v4219, 64
        %v4391 = vpop.permute.xlu0 %4390
        %v4393 = vsel %vm2832, %v4389, 0
        %v4396 = vsel %vm2832, %v4391, 0
        %4398 = vmatpush.bf16.xpose.msra.mxu0 0
        %4399 = vmatpush.bf16.xpose.msra.mxu0 0
        %4400 = vmatpush.bf16.xpose.msra.mxu0 0
        %4401 = vmatpush.bf16.xpose.msra.mxu0 0
        %4402 = vmatpush.bf16.xpose.msra.mxu0 0
        %4403 = vmatpush.bf16.xpose.msra.mxu0 0
        %4404 = vmatpush.bf16.xpose.msra.mxu0 0
        %4405 = vmatpush.bf16.xpose.msra.mxu0 %v4396
        %4406 = vmatmul.bf16.gmra.mxu0 %v4393
        %v4407 = vpop.f32.mrf.mxu0
        %v4408 = vadd.f32 %v2566, %v4407
        %v4409 = vpop.f32.mrf.mxu0
        %4410 = vdwg.mxu0
        %v4411 = vsel %vm2852, %v4408, -inf
        %4412 = vmax.xlane.f32.xlu0 %v4411
        %v4413 = vpop.xlane.xlu0 %4412
        %v4414 = vsub.f32 %v4408, %v4413
        %v4415 = vmul.f32 %v4414, 1.442695
        %v4416 = vpow.pop %v4415
        %v4417 = vsel %vm2852, %v4416, 0.0
        %4418 = vadd.xlane.f32.xlu0 %v4417
        %v4419 = vpop.xlane.xlu0 %4418
        %v4420 = vrcp.pop %v4419
        %v4421 = vmul.f32 %v4416, %v4420
        %v4422 = vpack.c.bf16 %v4421, %v4421
        %4423 = vrot.lane.b32.xlu0 %v4220, 64
        %v4424 = vpop.permute.xlu0 %4423
        %v4426 = vsel %vm2852, %v4422, 0
        %v4429 = vsel %vm2868, %v4424, 0
        %4431 = vmatpush.bf16.msra.mxu0 0
        %4432 = vmatpush.bf16.msra.mxu0 0
        %4433 = vmatpush.bf16.msra.mxu0 0
        %4434 = vmatpush.bf16.msra.mxu0 0
        %4435 = vmatpush.bf16.msra.mxu0 0
        %4436 = vmatpush.bf16.msra.mxu0 0
        %4437 = vmatpush.bf16.msra.mxu0 0
        %4438 = vmatpush.bf16.msra.mxu0 %v4429
        %4439 = vmatmul.bf16.gmra.mxu0 %v4426
        %v4440 = vpop.f32.mrf.mxu0
        %v4441 = vadd.f32 0.0, %v4440
        %v4442 = vpop.f32.mrf.mxu0
        %4443 = vdwg.mxu0
        %v4444 = vpack.c.bf16 %v4441, %v4441
        %v4449 = vunpack.c.l.b16 %v4209
        %v4450 = vunpack.c.l.b16 %v4210
        %v4451 = vunpack.c.l.b16 %v4211
        %v4452 = vunpack.c.l.b16 %v4212
        %v4453 = vpack.c.b16 %v4450, %v4449
        %v4454 = vpack.c.b16 %v4452, %v4451
        %v4458 = vsel %vm2832, %v4444, 0
        %4460 = vmatpush.bf16.msra.mxu0 0
        %4461 = vmatpush.bf16.msra.mxu0 0
        %4462 = vmatpush.bf16.msra.mxu0 0
        %4463 = vmatpush.bf16.msra.mxu0 0
        %4464 = vmatpush.bf16.msra.mxu0 0
        %4465 = vmatpush.bf16.msra.mxu0 0
        %4466 = vmatpush.bf16.msra.mxu0 %v4454
        %4467 = vmatpush.bf16.msra.mxu0 %v4453
        %4468 = vmatmul.bf16.gmra.mxu0 %v4458
        %v4469 = vpop.f32.mrf.mxu0
        %v4470 = vadd.f32 0.0, %v4469
        %v4471 = vpop.f32.mrf.mxu0
        %4472 = vdwg.mxu0
        %v4473 = vadd.f32 %v4385, %v4470
        %4474 = vrot.lane.b32.xlu0 %v4218, 32
        %v4475 = vpop.permute.xlu0 %4474
        %4476 = vrot.lane.b32.xlu0 %v4219, 32
        %v4477 = vpop.permute.xlu0 %4476
        %v4479 = vsel %vm2832, %v4475, 0
        %v4482 = vsel %vm2832, %v4477, 0
        %4484 = vmatpush.bf16.xpose.msra.mxu0 0
        %4485 = vmatpush.bf16.xpose.msra.mxu0 0
        %4486 = vmatpush.bf16.xpose.msra.mxu0 0
        %4487 = vmatpush.bf16.xpose.msra.mxu0 0
        %4488 = vmatpush.bf16.xpose.msra.mxu0 0
        %4489 = vmatpush.bf16.xpose.msra.mxu0 0
        %4490 = vmatpush.bf16.xpose.msra.mxu0 0
        %4491 = vmatpush.bf16.xpose.msra.mxu0 %v4482
        %4492 = vmatmul.bf16.gmra.mxu0 %v4479
        %v4493 = vpop.f32.mrf.mxu0
        %v4494 = vadd.f32 %v2566, %v4493
        %v4495 = vpop.f32.mrf.mxu0
        %4496 = vdwg.mxu0
        %v4497 = vsel %vm2852, %v4494, -inf
        %4498 = vmax.xlane.f32.xlu0 %v4497
        %v4499 = vpop.xlane.xlu0 %4498
        %v4500 = vsub.f32 %v4494, %v4499
        %v4501 = vmul.f32 %v4500, 1.442695
        %v4502 = vpow.pop %v4501
        %v4503 = vsel %vm2852, %v4502, 0.0
        %4504 = vadd.xlane.f32.xlu0 %v4503
        %v4505 = vpop.xlane.xlu0 %4504
        %v4506 = vrcp.pop %v4505
        %v4507 = vmul.f32 %v4502, %v4506
        %v4508 = vpack.c.bf16 %v4507, %v4507
        %4509 = vrot.lane.b32.xlu0 %v4220, 32
        %v4510 = vpop.permute.xlu0 %4509
        %v4512 = vsel %vm2852, %v4508, 0
        %v4515 = vsel %vm2868, %v4510, 0
        %4517 = vmatpush.bf16.msra.mxu0 0
        %4518 = vmatpush.bf16.msra.mxu0 0
        %4519 = vmatpush.bf16.msra.mxu0 0
        %4520 = vmatpush.bf16.msra.mxu0 0
        %4521 = vmatpush.bf16.msra.mxu0 0
        %4522 = vmatpush.bf16.msra.mxu0 0
        %4523 = vmatpush.bf16.msra.mxu0 0
        %4524 = vmatpush.bf16.msra.mxu0 %v4515
        %4525 = vmatmul.bf16.gmra.mxu0 %v4512
        %v4526 = vpop.f32.mrf.mxu0
        %v4527 = vadd.f32 0.0, %v4526
        %v4528 = vpop.f32.mrf.mxu0
        %4529 = vdwg.mxu0
        %v4530 = vpack.c.bf16 %v4527, %v4527
        %v4535 = vunpack.c.l.b16 %v4213
        %v4536 = vunpack.c.l.b16 %v4214
        %v4537 = vunpack.c.l.b16 %v4215
        %v4538 = vunpack.c.l.b16 %v4216
        %v4539 = vpack.c.b16 %v4536, %v4535
        %v4540 = vpack.c.b16 %v4538, %v4537
        %v4544 = vsel %vm2832, %v4530, 0
        %4546 = vmatpush.bf16.msra.mxu0 0
        %4547 = vmatpush.bf16.msra.mxu0 0
        %4548 = vmatpush.bf16.msra.mxu0 0
        %4549 = vmatpush.bf16.msra.mxu0 0
        %4550 = vmatpush.bf16.msra.mxu0 0
        %4551 = vmatpush.bf16.msra.mxu0 0
        %4552 = vmatpush.bf16.msra.mxu0 %v4540
        %4553 = vmatpush.bf16.msra.mxu0 %v4539
        %4554 = vmatmul.bf16.gmra.mxu0 %v4544
        %v4555 = vpop.f32.mrf.mxu0
        %v4556 = vadd.f32 0.0, %v4555
        %v4557 = vpop.f32.mrf.mxu0
        %4558 = vdwg.mxu0
        %v4559 = vadd.f32 %v4473, %v4556
        %v4560 = vadd.f32 %v3957, %v4559
        %s4561 = scalar_lea.vmem %s8, 1
        %v4562 = vld [vmem:[%s4561] sm:$0x1]
        %v4564 = vperm.slane %v4562, 0
        %v4566 = vadd.f32 %v4560, %v4564
        %s4567 = scalar_lea.vmem %s9, 1
        %v4568 = vld [vmem:[%s4567] sm:$0x1]
        %s4569 = scalar_lea.vmem %s10, 1
        %v4570 = vld [vmem:[%s4569] sm:$0x1]
        %4571 = vadd.xlane.f32.xlu0 %v4566
        %v4572 = vpop.xlane.xlu0 %4571
        %v4573 = vmul.f32 %v4572, %v2577
        %v4574 = vsub.f32 %v4566, %v4573
        %v4575 = vmul.f32 %v4574, %v4574
        %4576 = vadd.xlane.f32.xlu0 %v4575
        %v4577 = vpop.xlane.xlu0 %4576
        %v4578 = vmul.f32 %v4577, %v2577
        %v4579 = vadd.f32 %v4578, 1e-06
        %v4580 = vrsqrt.pop %v4579
        %v4581 = vmul.f32 %v4580, %v4579
        %v4582 = vmul.f32 %v4581, %v4580
        %v4583 = vmul.f32 0.5, %v4582
        %v4584 = vsub.f32 1.5, %v4583
        %v4585 = vmul.f32 %v4580, %v4584
        %vm4586 = vweird.f32 %v4579
        %vm4587 = vweird.f32 %v4580
        %vm4588 = vmor %vm4586, %vm4587
        %v4589 = vsel %vm4588, %v4580, %v4585
        %v4590 = vmul.f32 %v4574, %v4589
        %v4592 = vperm.slane %v4568, 0
        %v4594 = vmul.f32 %v4590, %v4592
        %v4596 = vperm.slane %v4570, 0
        %v4598 = vadd.f32 %v4594, %v4596
        %v4599 = vpack.c.bf16 %v4598, %v4598
        %s4600 = scalar_lea.vmem %s11, 256
        %v4601 = vld [vmem:[%s4600] sm:$0xff]
        %v4602 = vld [vmem:[%s4600 + $0x8] sm:$0xff]
        %v4603 = vld [vmem:[%s4600 + $0x10] sm:$0xff]
        %v4604 = vld [vmem:[%s4600 + $0x18] sm:$0xff]
        %v4605 = vld [vmem:[%s4600 + $0x20] sm:$0xff]
        %v4606 = vld [vmem:[%s4600 + $0x28] sm:$0xff]
        %v4607 = vld [vmem:[%s4600 + $0x30] sm:$0xff]
        %v4608 = vld [vmem:[%s4600 + $0x38] sm:$0xff]
        %v4609 = vld [vmem:[%s4600 + $0x40] sm:$0xff]
        %v4610 = vld [vmem:[%s4600 + $0x48] sm:$0xff]
        %v4611 = vld [vmem:[%s4600 + $0x50] sm:$0xff]
        %v4612 = vld [vmem:[%s4600 + $0x58] sm:$0xff]
        %v4613 = vld [vmem:[%s4600 + $0x60] sm:$0xff]
        %v4614 = vld [vmem:[%s4600 + $0x68] sm:$0xff]
        %v4615 = vld [vmem:[%s4600 + $0x70] sm:$0xff]
        %v4616 = vld [vmem:[%s4600 + $0x78] sm:$0xff]
        %v4617 = vld [vmem:[%s4600 + $0x80] sm:$0xff]
        %v4618 = vld [vmem:[%s4600 + $0x88] sm:$0xff]
        %v4619 = vld [vmem:[%s4600 + $0x90] sm:$0xff]
        %v4620 = vld [vmem:[%s4600 + $0x98] sm:$0xff]
        %v4621 = vld [vmem:[%s4600 + $0xa0] sm:$0xff]
        %v4622 = vld [vmem:[%s4600 + $0xa8] sm:$0xff]
        %v4623 = vld [vmem:[%s4600 + $0xb0] sm:$0xff]
        %v4624 = vld [vmem:[%s4600 + $0xb8] sm:$0xff]
        %v4625 = vld [vmem:[%s4600 + $0xc0] sm:$0xff]
        %v4626 = vld [vmem:[%s4600 + $0xc8] sm:$0xff]
        %v4627 = vld [vmem:[%s4600 + $0xd0] sm:$0xff]
        %v4628 = vld [vmem:[%s4600 + $0xd8] sm:$0xff]
        %v4629 = vld [vmem:[%s4600 + $0xe0] sm:$0xff]
        %v4630 = vld [vmem:[%s4600 + $0xe8] sm:$0xff]
        %v4631 = vld [vmem:[%s4600 + $0xf0] sm:$0xff]
        %v4632 = vld [vmem:[%s4600 + $0xf8] sm:$0xff]
        %s4633 = scalar_lea.vmem %s12, 4
        %v4634 = vld [vmem:[%s4633] sm:$0xf]
        %v4636 = vperm.slane %v4634, 0
        %v4637 = vperm.slane %v4634, 1
        %v4638 = vperm.slane %v4634, 2
        %v4639 = vperm.slane %v4634, 3
        %v4676 = vunpack.c.l.b16 %v4601
        %v4677 = vunpack.c.h.b16 %v4601
        %v4678 = vunpack.c.l.b16 %v4602
        %v4679 = vunpack.c.h.b16 %v4602
        %v4680 = vunpack.c.l.b16 %v4603
        %v4681 = vunpack.c.h.b16 %v4603
        %v4682 = vunpack.c.l.b16 %v4604
        %v4683 = vunpack.c.h.b16 %v4604
        %v4684 = vunpack.c.l.b16 %v4605
        %v4685 = vunpack.c.h.b16 %v4605
        %v4686 = vunpack.c.l.b16 %v4606
        %v4687 = vunpack.c.h.b16 %v4606
        %v4688 = vunpack.c.l.b16 %v4607
        %v4689 = vunpack.c.h.b16 %v4607
        %v4690 = vunpack.c.l.b16 %v4608
        %v4691 = vunpack.c.h.b16 %v4608
        %v4692 = vunpack.c.l.b16 %v4609
        %v4693 = vunpack.c.h.b16 %v4609
        %v4694 = vunpack.c.l.b16 %v4610
        %v4695 = vunpack.c.h.b16 %v4610
        %v4696 = vunpack.c.l.b16 %v4611
        %v4697 = vunpack.c.h.b16 %v4611
        %v4698 = vunpack.c.l.b16 %v4612
        %v4699 = vunpack.c.h.b16 %v4612
        %v4700 = vunpack.c.l.b16 %v4613
        %v4701 = vunpack.c.h.b16 %v4613
        %v4702 = vunpack.c.l.b16 %v4614
        %v4703 = vunpack.c.h.b16 %v4614
        %v4704 = vunpack.c.l.b16 %v4615
        %v4705 = vunpack.c.h.b16 %v4615
        %v4706 = vunpack.c.l.b16 %v4616
        %v4707 = vunpack.c.h.b16 %v4616
        %v4708 = vunpack.c.l.b16 %v4617
        %v4709 = vunpack.c.h.b16 %v4617
        %v4710 = vunpack.c.l.b16 %v4618
        %v4711 = vunpack.c.h.b16 %v4618
        %v4712 = vunpack.c.l.b16 %v4619
        %v4713 = vunpack.c.h.b16 %v4619
        %v4714 = vunpack.c.l.b16 %v4620
        %v4715 = vunpack.c.h.b16 %v4620
        %v4716 = vunpack.c.l.b16 %v4621
        %v4717 = vunpack.c.h.b16 %v4621
        %v4718 = vunpack.c.l.b16 %v4622
        %v4719 = vunpack.c.h.b16 %v4622
        %v4720 = vunpack.c.l.b16 %v4623
        %v4721 = vunpack.c.h.b16 %v4623
        %v4722 = vunpack.c.l.b16 %v4624
        %v4723 = vunpack.c.h.b16 %v4624
        %v4724 = vunpack.c.l.b16 %v4625
        %v4725 = vunpack.c.h.b16 %v4625
        %v4726 = vunpack.c.l.b16 %v4626
        %v4727 = vunpack.c.h.b16 %v4626
        %v4728 = vunpack.c.l.b16 %v4627
        %v4729 = vunpack.c.h.b16 %v4627
        %v4730 = vunpack.c.l.b16 %v4628
        %v4731 = vunpack.c.h.b16 %v4628
        %v4732 = vunpack.c.l.b16 %v4629
        %v4733 = vunpack.c.h.b16 %v4629
        %v4734 = vunpack.c.l.b16 %v4630
        %v4735 = vunpack.c.h.b16 %v4630
        %v4736 = vunpack.c.l.b16 %v4631
        %v4737 = vunpack.c.h.b16 %v4631
        %v4738 = vunpack.c.l.b16 %v4632
        %v4739 = vunpack.c.h.b16 %v4632
        %v4740 = vpack.c.b16 %v4680, %v4676
        %v4741 = vpack.c.b16 %v4681, %v4677
        %v4742 = vpack.c.b16 %v4682, %v4678
        %v4743 = vpack.c.b16 %v4683, %v4679
        %v4744 = vpack.c.b16 %v4688, %v4684
        %v4745 = vpack.c.b16 %v4689, %v4685
        %v4746 = vpack.c.b16 %v4690, %v4686
        %v4747 = vpack.c.b16 %v4691, %v4687
        %v4748 = vpack.c.b16 %v4696, %v4692
        %v4749 = vpack.c.b16 %v4697, %v4693
        %v4750 = vpack.c.b16 %v4698, %v4694
        %v4751 = vpack.c.b16 %v4699, %v4695
        %v4752 = vpack.c.b16 %v4704, %v4700
        %v4753 = vpack.c.b16 %v4705, %v4701
        %v4754 = vpack.c.b16 %v4706, %v4702
        %v4755 = vpack.c.b16 %v4707, %v4703
        %v4756 = vpack.c.b16 %v4712, %v4708
        %v4757 = vpack.c.b16 %v4713, %v4709
        %v4758 = vpack.c.b16 %v4714, %v4710
        %v4759 = vpack.c.b16 %v4715, %v4711
        %v4760 = vpack.c.b16 %v4720, %v4716
        %v4761 = vpack.c.b16 %v4721, %v4717
        %v4762 = vpack.c.b16 %v4722, %v4718
        %v4763 = vpack.c.b16 %v4723, %v4719
        %v4764 = vpack.c.b16 %v4728, %v4724
        %v4765 = vpack.c.b16 %v4729, %v4725
        %v4766 = vpack.c.b16 %v4730, %v4726
        %v4767 = vpack.c.b16 %v4731, %v4727
        %v4768 = vpack.c.b16 %v4736, %v4732
        %v4769 = vpack.c.b16 %v4737, %v4733
        %v4770 = vpack.c.b16 %v4738, %v4734
        %v4771 = vpack.c.b16 %v4739, %v4735
        %4804 = vmatpush.bf16.msra.mxu0 %v4768
        %4805 = vmatpush.bf16.msra.mxu0 %v4764
        %4806 = vmatpush.bf16.msra.mxu0 %v4760
        %4807 = vmatpush.bf16.msra.mxu0 %v4756
        %4808 = vmatpush.bf16.msra.mxu0 %v4752
        %4809 = vmatpush.bf16.msra.mxu0 %v4748
        %4810 = vmatpush.bf16.msra.mxu0 %v4744
        %4811 = vmatpush.bf16.msra.mxu0 %v4740
        %4812 = vmatmul.bf16.gmra.mxu0 %v4599
        %v4813 = vpop.f32.mrf.mxu0
        %v4814 = vadd.f32 %v4636, %v4813
        %v4815 = vpop.f32.mrf.mxu0
        %4816 = vdwg.mxu0
        %4817 = vmatpush.bf16.msra.mxu0 %v4769
        %4818 = vmatpush.bf16.msra.mxu0 %v4765
        %4819 = vmatpush.bf16.msra.mxu0 %v4761
        %4820 = vmatpush.bf16.msra.mxu0 %v4757
        %4821 = vmatpush.bf16.msra.mxu0 %v4753
        %4822 = vmatpush.bf16.msra.mxu0 %v4749
        %4823 = vmatpush.bf16.msra.mxu0 %v4745
        %4824 = vmatpush.bf16.msra.mxu0 %v4741
        %4825 = vmatmul.bf16.gmra.mxu0 %v4599
        %v4826 = vpop.f32.mrf.mxu0
        %v4827 = vadd.f32 %v4637, %v4826
        %v4828 = vpop.f32.mrf.mxu0
        %4829 = vdwg.mxu0
        %4830 = vmatpush.bf16.msra.mxu0 %v4770
        %4831 = vmatpush.bf16.msra.mxu0 %v4766
        %4832 = vmatpush.bf16.msra.mxu0 %v4762
        %4833 = vmatpush.bf16.msra.mxu0 %v4758
        %4834 = vmatpush.bf16.msra.mxu0 %v4754
        %4835 = vmatpush.bf16.msra.mxu0 %v4750
        %4836 = vmatpush.bf16.msra.mxu0 %v4746
        %4837 = vmatpush.bf16.msra.mxu0 %v4742
        %4838 = vmatmul.bf16.gmra.mxu0 %v4599
        %v4839 = vpop.f32.mrf.mxu0
        %v4840 = vadd.f32 %v4638, %v4839
        %v4841 = vpop.f32.mrf.mxu0
        %4842 = vdwg.mxu0
        %4843 = vmatpush.bf16.msra.mxu0 %v4771
        %4844 = vmatpush.bf16.msra.mxu0 %v4767
        %4845 = vmatpush.bf16.msra.mxu0 %v4763
        %4846 = vmatpush.bf16.msra.mxu0 %v4759
        %4847 = vmatpush.bf16.msra.mxu0 %v4755
        %4848 = vmatpush.bf16.msra.mxu0 %v4751
        %4849 = vmatpush.bf16.msra.mxu0 %v4747
        %4850 = vmatpush.bf16.msra.mxu0 %v4743
        %4851 = vmatmul.bf16.gmra.mxu0 %v4599
        %v4852 = vpop.f32.mrf.mxu0
        %v4853 = vadd.f32 %v4639, %v4852
        %v4854 = vpop.f32.mrf.mxu0
        %4855 = vdwg.mxu0
        %v4856 = vmul.f32 %v4814, 0.5
        %v4857 = vmul.f32 %v4827, 0.5
        %v4858 = vmul.f32 %v4840, 0.5
        %v4859 = vmul.f32 %v4853, 0.5
        %v4860 = vmul.f32 %v4814, 0.70710677
        %v4861 = vmul.f32 %v4827, 0.70710677
        %v4862 = vmul.f32 %v4840, 0.70710677
        %v4863 = vmul.f32 %v4853, 0.70710677
        %v4864 = vmul.f32 %v4860, %v4860
        %v4865 = vmin.f32 16.0, %v4864
        %v4866 = vmul.f32 %v4865, 2.1237322e-06
        %v4867 = vadd.f32 %v4866, 0.00028619796
        %v4868 = vmul.f32 %v4865, %v4867
        %v4869 = vadd.f32 %v4868, 0.0036580483
        %v4870 = vmul.f32 %v4865, %v4869
        %v4871 = vadd.f32 %v4870, 0.05243302
        %v4872 = vmul.f32 %v4865, %v4871
        %v4873 = vadd.f32 %v4872, 0.18741608
        %v4874 = vmul.f32 %v4865, %v4873
        %v4875 = vadd.f32 %v4874, 1.1283791
        %v4876 = vmul.f32 %v4860, %v4875
        %v4877 = vmul.f32 %v4865, 3.8918573e-05
        %v4878 = vadd.f32 %v4877, 0.001143296
        %v4879 = vmul.f32 %v4865, %v4878
        %v4880 = vadd.f32 %v4879, 0.014752088
        %v4881 = vmul.f32 %v4865, %v4880
        %v4882 = vadd.f32 %v4881, 0.112945676
        %v4883 = vmul.f32 %v4865, %v4882
        %v4884 = vadd.f32 %v4883, 0.4994258
        %v4885 = vmul.f32 %v4865, %v4884
        %v4886 = vadd.f32 %v4885, 1.0
        %v4887 = vrcp.pop %v4886
        %v4888 = vmul.f32 %v4886, %v4887
        %v4889 = vsub.f32 1.0, %v4888
        %v4890 = vmul.f32 %v4887, %v4889
        %v4891 = vadd.f32 %v4887, %v4890
        %vm4892 = vweird.f32 %v4886
        %vm4893 = vweird.f32 %v4887
        %vm4894 = vmor %vm4892, %vm4893
        %v4895 = vsel %vm4894, %v4887, %v4891
        %v4896 = vand.u32 2147483647, %v4886
        %vm4897 = vcmp.eq.f32.partialorder %v4896, 8.507059e+37
        %v4898 = vand.u32 %v4886, 2147483648
        %v4899 = vor.u32 1.1754944e-38, %v4898
        %v4900 = vsel %vm4897, %v4899, %v4895
        %v4901 = vmul.f32 %v4876, %v4900
        %v4902 = vmin.f32 %v4901, 1.0
        %v4903 = vmax.f32 %v4902, -1.0
        %v4904 = vmul.f32 %v4861, %v4861
        %v4905 = vmin.f32 16.0, %v4904
        %v4906 = vmul.f32 %v4905, 2.1237322e-06
        %v4907 = vadd.f32 %v4906, 0.00028619796
        %v4908 = vmul.f32 %v4905, %v4907
        %v4909 = vadd.f32 %v4908, 0.0036580483
        %v4910 = vmul.f32 %v4905, %v4909
        %v4911 = vadd.f32 %v4910, 0.05243302
        %v4912 = vmul.f32 %v4905, %v4911
        %v4913 = vadd.f32 %v4912, 0.18741608
        %v4914 = vmul.f32 %v4905, %v4913
        %v4915 = vadd.f32 %v4914, 1.1283791
        %v4916 = vmul.f32 %v4861, %v4915
        %v4917 = vmul.f32 %v4905, 3.8918573e-05
        %v4918 = vadd.f32 %v4917, 0.001143296
        %v4919 = vmul.f32 %v4905, %v4918
        %v4920 = vadd.f32 %v4919, 0.014752088
        %v4921 = vmul.f32 %v4905, %v4920
        %v4922 = vadd.f32 %v4921, 0.112945676
        %v4923 = vmul.f32 %v4905, %v4922
        %v4924 = vadd.f32 %v4923, 0.4994258
        %v4925 = vmul.f32 %v4905, %v4924
        %v4926 = vadd.f32 %v4925, 1.0
        %v4927 = vrcp.pop %v4926
        %v4928 = vmul.f32 %v4926, %v4927
        %v4929 = vsub.f32 1.0, %v4928
        %v4930 = vmul.f32 %v4927, %v4929
        %v4931 = vadd.f32 %v4927, %v4930
        %vm4932 = vweird.f32 %v4926
        %vm4933 = vweird.f32 %v4927
        %vm4934 = vmor %vm4932, %vm4933
        %v4935 = vsel %vm4934, %v4927, %v4931
        %v4936 = vand.u32 2147483647, %v4926
        %vm4937 = vcmp.eq.f32.partialorder %v4936, 8.507059e+37
        %v4938 = vand.u32 %v4926, 2147483648
        %v4939 = vor.u32 1.1754944e-38, %v4938
        %v4940 = vsel %vm4937, %v4939, %v4935
        %v4941 = vmul.f32 %v4916, %v4940
        %v4942 = vmin.f32 %v4941, 1.0
        %v4943 = vmax.f32 %v4942, -1.0
        %v4944 = vmul.f32 %v4862, %v4862
        %v4945 = vmin.f32 16.0, %v4944
        %v4946 = vmul.f32 %v4945, 2.1237322e-06
        %v4947 = vadd.f32 %v4946, 0.00028619796
        %v4948 = vmul.f32 %v4945, %v4947
        %v4949 = vadd.f32 %v4948, 0.0036580483
        %v4950 = vmul.f32 %v4945, %v4949
        %v4951 = vadd.f32 %v4950, 0.05243302
        %v4952 = vmul.f32 %v4945, %v4951
        %v4953 = vadd.f32 %v4952, 0.18741608
        %v4954 = vmul.f32 %v4945, %v4953
        %v4955 = vadd.f32 %v4954, 1.1283791
        %v4956 = vmul.f32 %v4862, %v4955
        %v4957 = vmul.f32 %v4945, 3.8918573e-05
        %v4958 = vadd.f32 %v4957, 0.001143296
        %v4959 = vmul.f32 %v4945, %v4958
        %v4960 = vadd.f32 %v4959, 0.014752088
        %v4961 = vmul.f32 %v4945, %v4960
        %v4962 = vadd.f32 %v4961, 0.112945676
        %v4963 = vmul.f32 %v4945, %v4962
        %v4964 = vadd.f32 %v4963, 0.4994258
        %v4965 = vmul.f32 %v4945, %v4964
        %v4966 = vadd.f32 %v4965, 1.0
        %v4967 = vrcp.pop %v4966
        %v4968 = vmul.f32 %v4966, %v4967
        %v4969 = vsub.f32 1.0, %v4968
        %v4970 = vmul.f32 %v4967, %v4969
        %v4971 = vadd.f32 %v4967, %v4970
        %vm4972 = vweird.f32 %v4966
        %vm4973 = vweird.f32 %v4967
        %vm4974 = vmor %vm4972, %vm4973
        %v4975 = vsel %vm4974, %v4967, %v4971
        %v4976 = vand.u32 2147483647, %v4966
        %vm4977 = vcmp.eq.f32.partialorder %v4976, 8.507059e+37
        %v4978 = vand.u32 %v4966, 2147483648
        %v4979 = vor.u32 1.1754944e-38, %v4978
        %v4980 = vsel %vm4977, %v4979, %v4975
        %v4981 = vmul.f32 %v4956, %v4980
        %v4982 = vmin.f32 %v4981, 1.0
        %v4983 = vmax.f32 %v4982, -1.0
        %v4984 = vmul.f32 %v4863, %v4863
        %v4985 = vmin.f32 16.0, %v4984
        %v4986 = vmul.f32 %v4985, 2.1237322e-06
        %v4987 = vadd.f32 %v4986, 0.00028619796
        %v4988 = vmul.f32 %v4985, %v4987
        %v4989 = vadd.f32 %v4988, 0.0036580483
        %v4990 = vmul.f32 %v4985, %v4989
        %v4991 = vadd.f32 %v4990, 0.05243302
        %v4992 = vmul.f32 %v4985, %v4991
        %v4993 = vadd.f32 %v4992, 0.18741608
        %v4994 = vmul.f32 %v4985, %v4993
        %v4995 = vadd.f32 %v4994, 1.1283791
        %v4996 = vmul.f32 %v4863, %v4995
        %v4997 = vmul.f32 %v4985, 3.8918573e-05
        %v4998 = vadd.f32 %v4997, 0.001143296
        %v4999 = vmul.f32 %v4985, %v4998
        %v5000 = vadd.f32 %v4999, 0.014752088
        %v5001 = vmul.f32 %v4985, %v5000
        %v5002 = vadd.f32 %v5001, 0.112945676
        %v5003 = vmul.f32 %v4985, %v5002
        %v5004 = vadd.f32 %v5003, 0.4994258
        %v5005 = vmul.f32 %v4985, %v5004
        %v5006 = vadd.f32 %v5005, 1.0
        %v5007 = vrcp.pop %v5006
        %v5008 = vmul.f32 %v5006, %v5007
        %v5009 = vsub.f32 1.0, %v5008
        %v5010 = vmul.f32 %v5007, %v5009
        %v5011 = vadd.f32 %v5007, %v5010
        %vm5012 = vweird.f32 %v5006
        %vm5013 = vweird.f32 %v5007
        %vm5014 = vmor %vm5012, %vm5013
        %v5015 = vsel %vm5014, %v5007, %v5011
        %v5016 = vand.u32 2147483647, %v5006
        %vm5017 = vcmp.eq.f32.partialorder %v5016, 8.507059e+37
        %v5018 = vand.u32 %v5006, 2147483648
        %v5019 = vor.u32 1.1754944e-38, %v5018
        %v5020 = vsel %vm5017, %v5019, %v5015
        %v5021 = vmul.f32 %v4996, %v5020
        %v5022 = vmin.f32 %v5021, 1.0
        %v5023 = vmax.f32 %v5022, -1.0
        %v5024 = vadd.f32 %v4903, 1.0
        %v5025 = vadd.f32 %v4943, 1.0
        %v5026 = vadd.f32 %v4983, 1.0
        %v5027 = vadd.f32 %v5023, 1.0
        %v5028 = vmul.f32 %v4856, %v5024
        %v5029 = vmul.f32 %v4857, %v5025
        %v5030 = vmul.f32 %v4858, %v5026
        %v5031 = vmul.f32 %v4859, %v5027
        %v5032 = vpack.c.bf16 %v5028, %v5028
        %v5033 = vpack.c.bf16 %v5029, %v5029
        %v5034 = vpack.c.bf16 %v5030, %v5030
        %v5035 = vpack.c.bf16 %v5031, %v5031
        %s5036 = scalar_lea.vmem %s13, 256
        %v5037 = vld [vmem:[%s5036] sm:$0xf]
        %v5038 = vld [vmem:[%s5036 + $0x4] sm:$0xf]
        %v5039 = vld [vmem:[%s5036 + $0x8] sm:$0xf]
        %v5040 = vld [vmem:[%s5036 + $0xc] sm:$0xf]
        %v5041 = vld [vmem:[%s5036 + $0x10] sm:$0xf]
        %v5042 = vld [vmem:[%s5036 + $0x14] sm:$0xf]
        %v5043 = vld [vmem:[%s5036 + $0x18] sm:$0xf]
        %v5044 = vld [vmem:[%s5036 + $0x1c] sm:$0xf]
        %v5045 = vld [vmem:[%s5036 + $0x20] sm:$0xf]
        %v5046 = vld [vmem:[%s5036 + $0x24] sm:$0xf]
        %v5047 = vld [vmem:[%s5036 + $0x28] sm:$0xf]
        %v5048 = vld [vmem:[%s5036 + $0x2c] sm:$0xf]
        %v5049 = vld [vmem:[%s5036 + $0x30] sm:$0xf]
        %v5050 = vld [vmem:[%s5036 + $0x34] sm:$0xf]
        %v5051 = vld [vmem:[%s5036 + $0x38] sm:$0xf]
        %v5052 = vld [vmem:[%s5036 + $0x3c] sm:$0xf]
        %v5053 = vld [vmem:[%s5036 + $0x40] sm:$0xf]
        %v5054 = vld [vmem:[%s5036 + $0x44] sm:$0xf]
        %v5055 = vld [vmem:[%s5036 + $0x48] sm:$0xf]
        %v5056 = vld [vmem:[%s5036 + $0x4c] sm:$0xf]
        %v5057 = vld [vmem:[%s5036 + $0x50] sm:$0xf]
        %v5058 = vld [vmem:[%s5036 + $0x54] sm:$0xf]
        %v5059 = vld [vmem:[%s5036 + $0x58] sm:$0xf]
        %v5060 = vld [vmem:[%s5036 + $0x5c] sm:$0xf]
        %v5061 = vld [vmem:[%s5036 + $0x60] sm:$0xf]
        %v5062 = vld [vmem:[%s5036 + $0x64] sm:$0xf]
        %v5063 = vld [vmem:[%s5036 + $0x68] sm:$0xf]
        %v5064 = vld [vmem:[%s5036 + $0x6c] sm:$0xf]
        %v5065 = vld [vmem:[%s5036 + $0x70] sm:$0xf]
        %v5066 = vld [vmem:[%s5036 + $0x74] sm:$0xf]
        %v5067 = vld [vmem:[%s5036 + $0x78] sm:$0xf]
        %v5068 = vld [vmem:[%s5036 + $0x7c] sm:$0xf]
        %v5069 = vld [vmem:[%s5036 + $0x80] sm:$0xf]
        %v5070 = vld [vmem:[%s5036 + $0x84] sm:$0xf]
        %v5071 = vld [vmem:[%s5036 + $0x88] sm:$0xf]
        %v5072 = vld [vmem:[%s5036 + $0x8c] sm:$0xf]
        %v5073 = vld [vmem:[%s5036 + $0x90] sm:$0xf]
        %v5074 = vld [vmem:[%s5036 + $0x94] sm:$0xf]
        %v5075 = vld [vmem:[%s5036 + $0x98] sm:$0xf]
        %v5076 = vld [vmem:[%s5036 + $0x9c] sm:$0xf]
        %v5077 = vld [vmem:[%s5036 + $0xa0] sm:$0xf]
        %v5078 = vld [vmem:[%s5036 + $0xa4] sm:$0xf]
        %v5079 = vld [vmem:[%s5036 + $0xa8] sm:$0xf]
        %v5080 = vld [vmem:[%s5036 + $0xac] sm:$0xf]
        %v5081 = vld [vmem:[%s5036 + $0xb0] sm:$0xf]
        %v5082 = vld [vmem:[%s5036 + $0xb4] sm:$0xf]
        %v5083 = vld [vmem:[%s5036 + $0xb8] sm:$0xf]
        %v5084 = vld [vmem:[%s5036 + $0xbc] sm:$0xf]
        %v5085 = vld [vmem:[%s5036 + $0xc0] sm:$0xf]
        %v5086 = vld [vmem:[%s5036 + $0xc4] sm:$0xf]
        %v5087 = vld [vmem:[%s5036 + $0xc8] sm:$0xf]
        %v5088 = vld [vmem:[%s5036 + $0xcc] sm:$0xf]
        %v5089 = vld [vmem:[%s5036 + $0xd0] sm:$0xf]
        %v5090 = vld [vmem:[%s5036 + $0xd4] sm:$0xf]
        %v5091 = vld [vmem:[%s5036 + $0xd8] sm:$0xf]
        %v5092 = vld [vmem:[%s5036 + $0xdc] sm:$0xf]
        %v5093 = vld [vmem:[%s5036 + $0xe0] sm:$0xf]
        %v5094 = vld [vmem:[%s5036 + $0xe4] sm:$0xf]
        %v5095 = vld [vmem:[%s5036 + $0xe8] sm:$0xf]
        %v5096 = vld [vmem:[%s5036 + $0xec] sm:$0xf]
        %v5097 = vld [vmem:[%s5036 + $0xf0] sm:$0xf]
        %v5098 = vld [vmem:[%s5036 + $0xf4] sm:$0xf]
        %v5099 = vld [vmem:[%s5036 + $0xf8] sm:$0xf]
        %v5100 = vld [vmem:[%s5036 + $0xfc] sm:$0xf]
        %s5101 = scalar_lea.vmem %s14, 1
        %v5102 = vld [vmem:[%s5101] sm:$0x1]
        %v5104 = vperm.slane %v5102, 0
        %v5170 = vunpack.c.l.b16 %v5037
        %v5171 = vunpack.c.l.b16 %v5038
        %v5172 = vunpack.c.l.b16 %v5039
        %v5173 = vunpack.c.l.b16 %v5040
        %v5174 = vunpack.c.l.b16 %v5041
        %v5175 = vunpack.c.l.b16 %v5042
        %v5176 = vunpack.c.l.b16 %v5043
        %v5177 = vunpack.c.l.b16 %v5044
        %v5178 = vunpack.c.l.b16 %v5045
        %v5179 = vunpack.c.l.b16 %v5046
        %v5180 = vunpack.c.l.b16 %v5047
        %v5181 = vunpack.c.l.b16 %v5048
        %v5182 = vunpack.c.l.b16 %v5049
        %v5183 = vunpack.c.l.b16 %v5050
        %v5184 = vunpack.c.l.b16 %v5051
        %v5185 = vunpack.c.l.b16 %v5052
        %v5186 = vunpack.c.l.b16 %v5053
        %v5187 = vunpack.c.l.b16 %v5054
        %v5188 = vunpack.c.l.b16 %v5055
        %v5189 = vunpack.c.l.b16 %v5056
        %v5190 = vunpack.c.l.b16 %v5057
        %v5191 = vunpack.c.l.b16 %v5058
        %v5192 = vunpack.c.l.b16 %v5059
        %v5193 = vunpack.c.l.b16 %v5060
        %v5194 = vunpack.c.l.b16 %v5061
        %v5195 = vunpack.c.l.b16 %v5062
        %v5196 = vunpack.c.l.b16 %v5063
        %v5197 = vunpack.c.l.b16 %v5064
        %v5198 = vunpack.c.l.b16 %v5065
        %v5199 = vunpack.c.l.b16 %v5066
        %v5200 = vunpack.c.l.b16 %v5067
        %v5201 = vunpack.c.l.b16 %v5068
        %v5202 = vunpack.c.l.b16 %v5069
        %v5203 = vunpack.c.l.b16 %v5070
        %v5204 = vunpack.c.l.b16 %v5071
        %v5205 = vunpack.c.l.b16 %v5072
        %v5206 = vunpack.c.l.b16 %v5073
        %v5207 = vunpack.c.l.b16 %v5074
        %v5208 = vunpack.c.l.b16 %v5075
        %v5209 = vunpack.c.l.b16 %v5076
        %v5210 = vunpack.c.l.b16 %v5077
        %v5211 = vunpack.c.l.b16 %v5078
        %v5212 = vunpack.c.l.b16 %v5079
        %v5213 = vunpack.c.l.b16 %v5080
        %v5214 = vunpack.c.l.b16 %v5081
        %v5215 = vunpack.c.l.b16 %v5082
        %v5216 = vunpack.c.l.b16 %v5083
        %v5217 = vunpack.c.l.b16 %v5084
        %v5218 = vunpack.c.l.b16 %v5085
        %v5219 = vunpack.c.l.b16 %v5086
        %v5220 = vunpack.c.l.b16 %v5087
        %v5221 = vunpack.c.l.b16 %v5088
        %v5222 = vunpack.c.l.b16 %v5089
        %v5223 = vunpack.c.l.b16 %v5090
        %v5224 = vunpack.c.l.b16 %v5091
        %v5225 = vunpack.c.l.b16 %v5092
        %v5226 = vunpack.c.l.b16 %v5093
        %v5227 = vunpack.c.l.b16 %v5094
        %v5228 = vunpack.c.l.b16 %v5095
        %v5229 = vunpack.c.l.b16 %v5096
        %v5230 = vunpack.c.l.b16 %v5097
        %v5231 = vunpack.c.l.b16 %v5098
        %v5232 = vunpack.c.l.b16 %v5099
        %v5233 = vunpack.c.l.b16 %v5100
        %v5234 = vpack.c.b16 %v5171, %v5170
        %v5235 = vpack.c.b16 %v5173, %v5172
        %v5236 = vpack.c.b16 %v5175, %v5174
        %v5237 = vpack.c.b16 %v5177, %v5176
        %v5238 = vpack.c.b16 %v5179, %v5178
        %v5239 = vpack.c.b16 %v5181, %v5180
        %v5240 = vpack.c.b16 %v5183, %v5182
        %v5241 = vpack.c.b16 %v5185, %v5184
        %v5242 = vpack.c.b16 %v5187, %v5186
        %v5243 = vpack.c.b16 %v5189, %v5188
        %v5244 = vpack.c.b16 %v5191, %v5190
        %v5245 = vpack.c.b16 %v5193, %v5192
        %v5246 = vpack.c.b16 %v5195, %v5194
        %v5247 = vpack.c.b16 %v5197, %v5196
        %v5248 = vpack.c.b16 %v5199, %v5198
        %v5249 = vpack.c.b16 %v5201, %v5200
        %v5250 = vpack.c.b16 %v5203, %v5202
        %v5251 = vpack.c.b16 %v5205, %v5204
        %v5252 = vpack.c.b16 %v5207, %v5206
        %v5253 = vpack.c.b16 %v5209, %v5208
        %v5254 = vpack.c.b16 %v5211, %v5210
        %v5255 = vpack.c.b16 %v5213, %v5212
        %v5256 = vpack.c.b16 %v5215, %v5214
        %v5257 = vpack.c.b16 %v5217, %v5216
        %v5258 = vpack.c.b16 %v5219, %v5218
        %v5259 = vpack.c.b16 %v5221, %v5220
        %v5260 = vpack.c.b16 %v5223, %v5222
        %v5261 = vpack.c.b16 %v5225, %v5224
        %v5262 = vpack.c.b16 %v5227, %v5226
        %v5263 = vpack.c.b16 %v5229, %v5228
        %v5264 = vpack.c.b16 %v5231, %v5230
        %v5265 = vpack.c.b16 %v5233, %v5232
        %5298 = vmatpush.bf16.msra.mxu0 %v5241
        %5299 = vmatpush.bf16.msra.mxu0 %v5240
        %5300 = vmatpush.bf16.msra.mxu0 %v5239
        %5301 = vmatpush.bf16.msra.mxu0 %v5238
        %5302 = vmatpush.bf16.msra.mxu0 %v5237
        %5303 = vmatpush.bf16.msra.mxu0 %v5236
        %5304 = vmatpush.bf16.msra.mxu0 %v5235
        %5305 = vmatpush.bf16.msra.mxu0 %v5234
        %5306 = vmatmul.bf16.gmra.mxu0 %v5032
        %v5307 = vpop.f32.mrf.mxu0
        %v5308 = vadd.f32 %v5104, %v5307
        %v5309 = vpop.f32.mrf.mxu0
        %5310 = vdwg.mxu0
        %5311 = vmatpush.bf16.msra.mxu0 %v5249
        %5312 = vmatpush.bf16.msra.mxu0 %v5248
        %5313 = vmatpush.bf16.msra.mxu0 %v5247
        %5314 = vmatpush.bf16.msra.mxu0 %v5246
        %5315 = vmatpush.bf16.msra.mxu0 %v5245
        %5316 = vmatpush.bf16.msra.mxu0 %v5244
        %5317 = vmatpush.bf16.msra.mxu0 %v5243
        %5318 = vmatpush.bf16.msra.mxu0 %v5242
        %5319 = vmatmul.bf16.gmra.mxu0 %v5033
        %v5320 = vpop.f32.mrf.mxu0
        %v5321 = vadd.f32 %v5308, %v5320
        %v5322 = vpop.f32.mrf.mxu0
        %5323 = vdwg.mxu0
        %5324 = vmatpush.bf16.msra.mxu0 %v5257
        %5325 = vmatpush.bf16.msra.mxu0 %v5256
        %5326 = vmatpush.bf16.msra.mxu0 %v5255
        %5327 = vmatpush.bf16.msra.mxu0 %v5254
        %5328 = vmatpush.bf16.msra.mxu0 %v5253
        %5329 = vmatpush.bf16.msra.mxu0 %v5252
        %5330 = vmatpush.bf16.msra.mxu0 %v5251
        %5331 = vmatpush.bf16.msra.mxu0 %v5250
        %5332 = vmatmul.bf16.gmra.mxu0 %v5034
        %v5333 = vpop.f32.mrf.mxu0
        %v5334 = vadd.f32 %v5321, %v5333
        %v5335 = vpop.f32.mrf.mxu0
        %5336 = vdwg.mxu0
        %5337 = vmatpush.bf16.msra.mxu0 %v5265
        %5338 = vmatpush.bf16.msra.mxu0 %v5264
        %5339 = vmatpush.bf16.msra.mxu0 %v5263
        %5340 = vmatpush.bf16.msra.mxu0 %v5262
        %5341 = vmatpush.bf16.msra.mxu0 %v5261
        %5342 = vmatpush.bf16.msra.mxu0 %v5260
        %5343 = vmatpush.bf16.msra.mxu0 %v5259
        %5344 = vmatpush.bf16.msra.mxu0 %v5258
        %5345 = vmatmul.bf16.gmra.mxu0 %v5035
        %v5346 = vpop.f32.mrf.mxu0
        %v5347 = vadd.f32 %v5334, %v5346
        %v5348 = vpop.f32.mrf.mxu0
        %5349 = vdwg.mxu0
        %v5350 = vadd.f32 %v4566, %v5347
        %v5351 = vld [vmem:[%s15] sm:$0x1]
        %v5352 = vld [vmem:[%s16] sm:$0x1]
        %5353 = vadd.xlane.f32.xlu0 %v5350
        %v5354 = vpop.xlane.xlu0 %5353
        %v5355 = vmul.f32 %v5354, %v2577
        %v5356 = vsub.f32 %v5350, %v5355
        %v5357 = vmul.f32 %v5356, %v5356
        %5358 = vadd.xlane.f32.xlu0 %v5357
        %v5359 = vpop.xlane.xlu0 %5358
        %v5360 = vmul.f32 %v5359, %v2577
        %v5361 = vadd.f32 %v5360, 1e-06
        %v5362 = vrsqrt.pop %v5361
        %v5363 = vmul.f32 %v5362, %v5361
        %v5364 = vmul.f32 %v5363, %v5362
        %v5365 = vmul.f32 0.5, %v5364
        %v5366 = vsub.f32 1.5, %v5365
        %v5367 = vmul.f32 %v5362, %v5366
        %vm5368 = vweird.f32 %v5361
        %vm5369 = vweird.f32 %v5362
        %vm5370 = vmor %vm5368, %vm5369
        %v5371 = vsel %vm5370, %v5362, %v5367
        %v5372 = vmul.f32 %v5356, %v5371
        %v5374 = vperm.slane %v5351, 0
        %v5376 = vmul.f32 %v5372, %v5374
        %v5378 = vperm.slane %v5352, 0
        %v5380 = vadd.f32 %v5376, %v5378
        %v5381 = vpack.c.bf16 %v5380, %v5380
        %v5382 = vld [vmem:[%s17] sm:$0xf]
        %v5383 = vld [vmem:[%s17 + $0x4] sm:$0xf]
        %v5384 = vld [vmem:[%s17 + $0x8] sm:$0xf]
        %v5385 = vld [vmem:[%s17 + $0xc] sm:$0xf]
        %v5386 = vld [vmem:[%s17 + $0x10] sm:$0xf]
        %v5387 = vld [vmem:[%s17 + $0x14] sm:$0xf]
        %v5388 = vld [vmem:[%s17 + $0x18] sm:$0xf]
        %v5389 = vld [vmem:[%s17 + $0x1c] sm:$0xf]
        %v5390 = vld [vmem:[%s17 + $0x20] sm:$0xf]
        %v5391 = vld [vmem:[%s17 + $0x24] sm:$0xf]
        %v5392 = vld [vmem:[%s17 + $0x28] sm:$0xf]
        %v5393 = vld [vmem:[%s17 + $0x2c] sm:$0xf]
        %v5394 = vld [vmem:[%s17 + $0x30] sm:$0xf]
        %v5395 = vld [vmem:[%s17 + $0x34] sm:$0xf]
        %v5396 = vld [vmem:[%s17 + $0x38] sm:$0xf]
        %v5397 = vld [vmem:[%s17 + $0x3c] sm:$0xf]
        %v5398 = vld [vmem:[%s18] sm:$0x1]
        %v5415 = vunpack.c.l.b16 %v5382
        %v5416 = vunpack.c.l.b16 %v5383
        %v5417 = vunpack.c.l.b16 %v5384
        %v5418 = vunpack.c.l.b16 %v5385
        %v5419 = vunpack.c.l.b16 %v5386
        %v5420 = vunpack.c.l.b16 %v5387
        %v5421 = vunpack.c.l.b16 %v5388
        %v5422 = vunpack.c.l.b16 %v5389
        %v5423 = vunpack.c.l.b16 %v5390
        %v5424 = vunpack.c.l.b16 %v5391
        %v5425 = vunpack.c.l.b16 %v5392
        %v5426 = vunpack.c.l.b16 %v5393
        %v5427 = vunpack.c.l.b16 %v5394
        %v5428 = vunpack.c.l.b16 %v5395
        %v5429 = vunpack.c.l.b16 %v5396
        %v5430 = vunpack.c.l.b16 %v5397
        %v5431 = vpack.c.b16 %v5416, %v5415
        %v5432 = vpack.c.b16 %v5418, %v5417
        %v5433 = vpack.c.b16 %v5420, %v5419
        %v5434 = vpack.c.b16 %v5422, %v5421
        %v5435 = vpack.c.b16 %v5424, %v5423
        %v5436 = vpack.c.b16 %v5426, %v5425
        %v5437 = vpack.c.b16 %v5428, %v5427
        %v5438 = vpack.c.b16 %v5430, %v5429
        %5447 = vmatpush.bf16.msra.mxu0 %v5438
        %5448 = vmatpush.bf16.msra.mxu0 %v5437
        %5449 = vmatpush.bf16.msra.mxu0 %v5436
        %5450 = vmatpush.bf16.msra.mxu0 %v5435
        %5451 = vmatpush.bf16.msra.mxu0 %v5434
        %5452 = vmatpush.bf16.msra.mxu0 %v5433
        %5453 = vmatpush.bf16.msra.mxu0 %v5432
        %5454 = vmatpush.bf16.msra.mxu0 %v5431
        %5455 = vmatmul.bf16.gmra.mxu0 %v5381
        %v5456 = vpop.f32.mrf.mxu0
        %v5457 = vadd.f32 %v5398, %v5456
        %v5458 = vpop.f32.mrf.mxu0
        %5459 = vdwg.mxu0
        %vm5460 = vcmask 24576
        %5461 = vst.msk [vmem:[%s611] sm:$0x1] %vm5460, %v5457
        %s5462 = sand.u32 %s446, 1
        %s5463 = scalar_lea.sflag [#allocation4], %s5462
        %s5464 = sand.u32 %s446, 1
        %s5465 = scalar_lea.vmem [#allocation5], %s5464
        // Predicated region
        $region101: #{vit_base16_forward.1} parent=95 // pred_check
          %p5466 = pneg %p456
        $region102: #{vit_base16_forward.1} parent=95 // pred_check_branch
          %5468 = sbr.rel (%p5466) target = $region104
        $region103: #{vit_base16_forward.1} parent=95 // pred_region
          %5470 = vsyncadd %s5463, 0
          %s5471 = scalar_lea.hbm %s19, %s34
          %s5473 = sshll.u32 %s5465, 4
          %s5474 = int_to_ptr.vmem [resolvable:$true] %s5473
          %s5475 = sshll.u32 %s5471, 4
          %s5476 = int_to_ptr.hbm [resolvable:$true] %s5475
          %5478 = dma.vmem_to_hbm [thread:$0]  %s5474, 16, %s5476, %s5463
        $region104: #{vit_base16_forward.1} parent=95 // pred_fallthru
          _
      $region96: #{vit_base16_forward.1} parent=5 // pred_fallthru
        _
      %p5479 = scmp.le.s32.totalorder 2, %s29
      // Predicated region
      $region105: #{vit_base16_forward.1} parent=5 // pred_check
        %p5480 = pneg %p5479
      $region106: #{vit_base16_forward.1} parent=5 // pred_check_branch
        %5482 = sbr.rel (%p5480) target = $region108
      $region107: #{vit_base16_forward.1} parent=5 // pred_region
        %s5483 = ssub.s32 %s29, 2
        // Predicated region
        $region109: #{vit_base16_forward.1} parent=107 // pred_check
          %p5484 = pneg %p462
        $region110: #{vit_base16_forward.1} parent=107 // pred_check_branch
          %5486 = sbr.rel (%p5484) target = $region112
        $region111: #{vit_base16_forward.1} parent=107 // pred_region
          %s5487 = sand.u32 %s447, 1
          %s5488 = scalar_lea.sflag [#allocation4], %s5487
          %s5489 = sand.u32 %s447, 1
          %s5490 = scalar_lea.vmem [#allocation5], %s5489
          %5492 = dma.done %s5488, 16
        $region112: #{vit_base16_forward.1} parent=107 // pred_fallthru
          _
      $region108: #{vit_base16_forward.1} parent=5 // pred_fallthru
        _
    $region6: #{vit_base16_forward.1} parent=1 // loop_footer
      %s33 = sadd.s32 1, %s29
    $region7: #{vit_base16_forward.1} parent=1 // loop_footer_branch
      %28 = sbr.rel target = $region3
    $region8: #{vit_base16_forward.1} parent=1 // loop_exit
      _
    %5493 = vsyncpa [#allocation3], 1
    %s5494 = scalar_lea.sflag [#allocation3], 1
    %5495 = vsyncpa %s5494, 1
    %5496 = vsyncpa [#allocation4], 1
    %s5497 = scalar_lea.sflag [#allocation4], 1
    %5498 = vsyncpa %s5497, 1

</llo_original>
